<compile_context>
chip_gen: v7x
topology: tpu7x:2x2x1
jax: 0.10.0
libtpu: 0.0.40
codegen_flags: <defaults>
</compile_context>

<pallas_src>
import functools
import math

import jax
import jax.numpy as jnp
from jax import lax
from jax.experimental import pallas as pl
from jax.experimental.pallas import tpu as pltpu

F32 = jnp.float32
BF16 = jnp.bfloat16
LN_EPS = 1e-5   # torch.nn.LayerNorm default
BN_EPS = 1e-5   # torch.nn.BatchNorm1d default
KV_TILE = 256   # online-softmax KV tile: bounds scores to [H, T, KV_TILE] in VMEM


@functools.lru_cache(maxsize=None)
def _vmem_limit_bytes():
    # Generation-aware VMEM budget: ~80% of physical capacity (v7x 64 MiB -> ~51 MiB,
    # v5e/v6e 128 MiB -> ~102 MiB), leaving headroom for Mosaic internal scratch,
    # semaphores and the pipeline's output buffers.
    try:
        cap = int(pltpu.get_tpu_info().vmem_capacity_bytes)
    except Exception:
        cap = 128 * 1024 * 1024
    return int(cap * 0.8)


# ----------------------------- in-kernel helpers -----------------------------

def _sigmoid(x):
    # Exact logistic (keeps parity with the PyTorch reference); exp is EUP work anyway.
    return 1.0 / (1.0 + jnp.exp(-x))


def _layer_norm(x, gamma, beta):
    mean = jnp.mean(x, axis=-1, keepdims=True)
    var = jnp.mean(jnp.square(x - mean), axis=-1, keepdims=True)
    return (x - mean) * lax.rsqrt(var + LN_EPS) * gamma + beta


def _mm(x, w_bf16):
    # bf16 MXU matmul with f32 accumulation.
    return jnp.dot(x.astype(BF16), w_bf16, preferred_element_type=F32)


# --------------------------- fused conformer block ----------------------------

def _block_kernel(num_heads, kernel_size,
                  x_ref, mask_ref,
                  # ff1
                  ff1_g, ff1_be, ff1_w1, ff1_b1, ff1_w2, ff1_b2,
                  # conv module
                  cv_g, cv_be, cv_wp1, cv_bp1, cv_wdw, cv_bdw,
                  bn_scale, bn_shift, cv_wp2, cv_bp2,
                  # mhsa
                  mh_g, mh_be, wqkv, bqkv, wo, bo,
                  # ff2
                  ff2_g, ff2_be, ff2_w1, ff2_b1, ff2_w2, ff2_b2,
                  # final layer norm
                  fin_g, fin_be,
                  o_ref,
                  pad_ref):
    x = x_ref[0].astype(F32)                                        # [T, D]; HBM carries bf16
    T, D = x.shape

    # ---------------- x = 0.5 * ff1(x) + x ----------------
    h = _layer_norm(x, ff1_g[...], ff1_be[...])
    h = _mm(h, ff1_w1[...]) + ff1_b1[...]
    h = h * _sigmoid(h)                                             # SiLU
    h = _mm(h, ff1_w2[...]) + ff1_b2[...]
    x = 0.5 * h + x

    # ---------------- x = conv(x) + x ----------------
    h = _layer_norm(x, cv_g[...], cv_be[...])
    h = _mm(h, cv_wp1[...]) + cv_bp1[...]                           # [T, 2D]
    h = h[:, :D] * _sigmoid(h[:, D:])                               # GLU(dim=-1)

    # depthwise Conv1d along time ('same' zero padding, groups=D):
    # zero-padded VMEM scratch, then K static sublane-offset slices.
    pad = (kernel_size - 1) // 2
    pada = ((pad + 7) // 8) * 8                                     # aligned pad region
    zeros_strip = jnp.zeros((pada, D), F32)
    # NOTE: strips are re-zeroed every grid step (a few sublanes, cheap); guarding on
    # program_id(0)==0 would be wrong under megacore grid sharding (per-core scratch).
    pad_ref[0:pada, :] = zeros_strip
    pad_ref[pada + T:pada + T + pada, :] = zeros_strip
    pad_ref[pada:pada + T, :] = h
    acc = jnp.zeros((T, D), F32)
    # TODO(synk): on v6e/v7x run the tap MACs in bf16 and derive shifted taps with
    # pltpu.roll from an aligned window; kept f32 slices here for v5e safety.
    for j in range(kernel_size):                                    # static taps
        off = pada - pad + j
        acc = acc + pad_ref[off:off + T, :] * cv_wdw[j:j + 1, :]
    h = acc + cv_bdw[...]

    # BatchNorm1d (eval mode) folded into a single scale/shift in the wrapper.
    h = h * bn_scale[...] + bn_shift[...]
    h = h * _sigmoid(h)                                             # SiLU
    h = _mm(h, cv_wp2[...]) + cv_bp2[...]
    x = h + x

    # ---------------- x = mhsa(x, mask) + x ----------------
    dh = D // num_heads
    scale = 1.0 / math.sqrt(dh)
    h = _layer_norm(x, mh_g[...], mh_be[...])
    qkv = _mm(h, wqkv[...]) + bqkv[...]                             # [T, 3D] f32

    # TODO(synk): head split/merge is lane-select stack/concat; switch to
    # pltpu.einshape / pre-permuted wqkv once verified on the target toolchain.
    qh = jnp.stack([qkv[:, i * dh:(i + 1) * dh].astype(BF16)
                    for i in range(num_heads)], axis=0)             # [H, T, dh]
    kh = jnp.stack([qkv[:, D + i * dh:D + (i + 1) * dh].astype(BF16)
                    for i in range(num_heads)], axis=0)
    vh = jnp.stack([qkv[:, 2 * D + i * dh:2 * D + (i + 1) * dh].astype(BF16)
                    for i in range(num_heads)], axis=0)

    # sequence_mask == 1 marks valid frames; masked keys get -1e30 (kept in f32)
    neg = (1.0 - mask_ref[0]) * (-1e30)                             # [1, T]

    # flash-style online softmax over KV tiles: never materializes [H, T, T].
    m_i = jnp.full((num_heads, T, 1), -jnp.inf, F32)
    l_i = jnp.zeros((num_heads, T, 1), F32)
    ctx = jnp.zeros((num_heads, T, dh), F32)
    tkv = min(T, KV_TILE)
    for kv0 in range(0, T, tkv):                                    # static KV tiles
        kv1 = min(T, kv0 + tkv)
        k_t = kh[:, kv0:kv1, :]
        v_t = vh[:, kv0:kv1, :]
        s = lax.dot_general(qh, k_t, (((2,), (2,)), ((0,), (0,))),
                            preferred_element_type=F32) * scale     # [H, T, tkv]
        s = s + neg[:, kv0:kv1][None, :, :]
        m_new = jnp.maximum(m_i, jnp.max(s, axis=-1, keepdims=True))
        alpha = jnp.exp(m_i - m_new)
        p = jnp.exp(s - m_new)
        l_i = alpha * l_i + jnp.sum(p, axis=-1, keepdims=True)
        ctx = alpha * ctx + lax.dot_general(p.astype(BF16), v_t,
                                            (((2,), (1,)), ((0,), (0,))),
                                            preferred_element_type=F32)
        m_i = m_new
    # approx reciprocal (EUP): ~1e-3 relative tolerance vs the PyTorch reference.
    ctx = ctx * pl.reciprocal(l_i, approx=True)

    ctx2 = jnp.concatenate([ctx[i] for i in range(num_heads)], axis=-1)   # [T, D]
    h = _mm(ctx2, wo[...]) + bo[...]                                # single D-wide out-proj
    x = h + x

    # ---------------- x = 0.5 * ff2(x) + x ; final LayerNorm (fused) ----------------
    h = _layer_norm(x, ff2_g[...], ff2_be[...])
    h = _mm(h, ff2_w1[...]) + ff2_b1[...]
    h = h * _sigmoid(h)
    h = _mm(h, ff2_w2[...]) + ff2_b2[...]
    x = 0.5 * h + x
    o_ref[0] = _layer_norm(x, fin_g[...], fin_be[...]).astype(o_ref.dtype)


# ------------------------------ frontend kernel --------------------------------

def _frontend_kernel(x_ref, w_ref, b_ref, o_ref):
    o_ref[0] = (_mm(x_ref[0], w_ref[...]) + b_ref[...]).astype(o_ref.dtype)


# ------------------------------ pallas wrappers -------------------------------

def _rep(shape):
    # Replicated (weight / bias) block: constant index map, single-buffered —
    # the block index never changes, so there is nothing to double-buffer.
    return pl.BlockSpec(shape, lambda b: (0, 0), pipeline_mode=pl.Buffered(1))


def _xspec(T, F):
    return pl.BlockSpec((1, T, F), lambda b: (b, 0, 0))


def pallas_frontend_linear(x, w, b):
    B, T, Fin = x.shape
    Fout = w.shape[1]
    return pl.pallas_call(
        _frontend_kernel,
        out_shape=jax.ShapeDtypeStruct((B, T, Fout), BF16),
        grid=(B,),
        in_specs=[_xspec(T, Fin), _rep((Fin, Fout)), _rep((1, Fout))],
        out_specs=_xspec(T, Fout),
        compiler_params=pltpu.CompilerParams(
            dimension_semantics=("parallel",),
            vmem_limit_bytes=_vmem_limit_bytes()),
    )(x, w, b)


def pallas_conformer_block(x, mask3, p, num_heads):
    B, T, D = x.shape
    Dff = p["ff1"]["w1"].shape[1]
    K = p["conv"]["wdw"].shape[0]
    pad = (K - 1) // 2
    pada = ((pad + 7) // 8) * 8

    # Fold eval-mode BatchNorm into one scale/shift (removes per-element rsqrt).
    bn_scale = p["conv"]["bn_g"] * lax.rsqrt(p["conv"]["bn_v"] + BN_EPS)
    bn_shift = p["conv"]["bn_b"] - p["conv"]["bn_m"] * bn_scale

    in_specs = [
        _xspec(T, D),
        pl.BlockSpec((1, 1, T), lambda b: (b, 0, 0)),
        # ff1
        _rep((1, D)), _rep((1, D)), _rep((D, Dff)), _rep((1, Dff)),
        _rep((Dff, D)), _rep((1, D)),
        # conv module
        _rep((1, D)), _rep((1, D)), _rep((D, 2 * D)), _rep((1, 2 * D)),
        _rep((K, D)), _rep((1, D)),
        _rep((1, D)), _rep((1, D)),
        _rep((D, D)), _rep((1, D)),
        # mhsa
        _rep((1, D)), _rep((1, D)), _rep((D, 3 * D)), _rep((1, 3 * D)),
        _rep((D, D)), _rep((1, D)),
        # ff2
        _rep((1, D)), _rep((1, D)), _rep((D, Dff)), _rep((1, Dff)),
        _rep((Dff, D)), _rep((1, D)),
        # final LN
        _rep((1, D)), _rep((1, D)),
    ]
    args = [
        x, mask3,
        p["ff1"]["ln_g"], p["ff1"]["ln_b"], p["ff1"]["w1"], p["ff1"]["b1"],
        p["ff1"]["w2"], p["ff1"]["b2"],
        p["conv"]["ln_g"], p["conv"]["ln_b"], p["conv"]["wp1"], p["conv"]["bp1"],
        p["conv"]["wdw"], p["conv"]["bdw"],
        bn_scale, bn_shift,
        p["conv"]["wp2"], p["conv"]["bp2"],
        p["mhsa"]["ln_g"], p["mhsa"]["ln_b"], p["mhsa"]["wqkv"], p["mhsa"]["bqkv"],
        p["mhsa"]["wo"], p["mhsa"]["bo"],
        p["ff2"]["ln_g"], p["ff2"]["ln_b"], p["ff2"]["w1"], p["ff2"]["b1"],
        p["ff2"]["w2"], p["ff2"]["b2"],
        p["final_ln_g"], p["final_ln_b"],
    ]
    return pl.pallas_call(
        functools.partial(_block_kernel, num_heads, K),
        out_shape=jax.ShapeDtypeStruct((B, T, D), BF16),
        grid=(B,),
        in_specs=in_specs,
        out_specs=_xspec(T, D),
        scratch_shapes=[pltpu.VMEM((T + 2 * pada, D), F32)],
        compiler_params=pltpu.CompilerParams(
            dimension_semantics=("parallel",),
            vmem_limit_bytes=_vmem_limit_bytes()),
    )(*args)


# ------------------------------ model (glue) ----------------------------------

def conformer_encoder_forward(params, data, seq_mask, *, num_heads, subsample):
    """data: [B, T', F_in], seq_mask: [B, T'] (1 = within sequence).

    Returns (x [B, T, D] bf16, out_seq_mask [B, T]) with T = T' // subsample.
    """
    # TODO(synk): real frontend = raw-wave feature extraction + VGG4LayerActFrontendV1;
    # approximated as subsample + Pallas linear projection.
    x = data[:, ::subsample, :]
    mask = seq_mask[:, ::subsample]
    x = pallas_frontend_linear(x, params["frontend"]["w"], params["frontend"]["b"])

    mask3 = mask.astype(F32)[:, None, :]                            # [B, 1, T]
    for p in params["blocks"]:
        x = pallas_conformer_block(x, mask3, p, num_heads)          # whole block fused
    return x, mask


def init_params(key, num_layers, f_in, d_model, d_ff, kernel_size):
    keys = iter(jax.random.split(key, 16 * num_layers + 4))

    def nrm(shape, dtype=BF16, scale=0.02):
        return (scale * jax.random.normal(next(keys), shape, dtype=F32)).astype(dtype)

    ones = lambda s: jnp.ones(s, F32)
    zeros = lambda s: jnp.zeros(s, F32)
    d = d_model

    def ff_p():
        return dict(ln_g=ones((1, d)), ln_b=zeros((1, d)),
                    w1=nrm((d, d_ff)), b1=zeros((1, d_ff)),
                    w2=nrm((d_ff, d)), b2=zeros((1, d)))

    params = dict(frontend=dict(w=nrm((f_in, d)), b=zeros((1, d))), blocks=[])
    for _ in range(num_layers):
        params["blocks"].append(dict(
            ff1=ff_p(),
            conv=dict(ln_g=ones((1, d)), ln_b=zeros((1, d)),
                      wp1=nrm((d, 2 * d)), bp1=zeros((1, 2 * d)),
                      wdw=nrm((kernel_size, d), dtype=F32), bdw=zeros((1, d)),
                      bn_g=ones((1, d)), bn_b=zeros((1, d)),
                      bn_m=zeros((1, d)), bn_v=ones((1, d)),
                      wp2=nrm((d, d)), bp2=zeros((1, d))),
            mhsa=dict(ln_g=ones((1, d)), ln_b=zeros((1, d)),
                      wqkv=nrm((d, 3 * d)), bqkv=zeros((1, 3 * d)),
                      wo=nrm((d, d)), bo=zeros((1, d))),
            ff2=ff_p(),
            final_ln_g=ones((1, d)), final_ln_b=zeros((1, d)),
        ))
    return params


if __name__ == "__main__":
    # Small shapes (real model: d_model=512, d_ff=2048, 12 layers, conv kernel 31, 8 heads).
    B, T_RAW, F_IN = 2, 64, 64
    D_MODEL, D_FF, N_HEADS, K_CONV, N_LAYERS, SUBSAMPLE = 128, 512, 4, 7, 2, 4

    key = jax.random.PRNGKey(0)
    k_data, k_par = jax.random.split(key)
    data = jax.random.normal(k_data, (B, T_RAW, F_IN), dtype=F32)
    lengths = jnp.array([T_RAW, T_RAW - 16], dtype=jnp.int32)
    seq_mask = (jnp.arange(T_RAW)[None, :] < lengths[:, None]).astype(F32)  # 1 = valid

    params = init_params(k_par, N_LAYERS, F_IN, D_MODEL, D_FF, K_CONV)

    fwd = jax.jit(functools.partial(conformer_encoder_forward,
                                    num_heads=N_HEADS, subsample=SUBSAMPLE))
    out, out_mask = fwd(params, data, seq_mask)
    jax.block_until_ready(out)

    assert out.shape == (B, T_RAW // SUBSAMPLE, D_MODEL)
    assert out_mask.shape == (B, T_RAW // SUBSAMPLE)
    assert bool(jnp.all(jnp.isfinite(out.astype(F32))))
    print("KERNEL_OK")
</pallas_src>

<mosaic_0001>
module attributes {stable_mosaic.version = 11 : i64} {
  func.func @_frontend_kernel(%arg0: i32, %arg1: memref<1x16x64xf32, #tpu.memory_space<vmem>>, %arg2: memref<64x128xbf16, #tpu.memory_space<vmem>>, %arg3: memref<1x128xf32, #tpu.memory_space<vmem>>, %arg4: memref<1x16x128xbf16, #tpu.memory_space<vmem>>) attributes {dimension_semantics = [#tpu.dimension_semantics<parallel>], iteration_bounds = array<i64: 2>, scalar_prefetch = 0 : i64, scratch_operands = 0 : i64, tpu.core_type = #tpu.core_type<tc>, window_params = [{transform_indices = @transform_0, window_bounds = array<i64: 1, 16, 64>}, {pipeline_mode = #tpu.pipeline_mode<synchronous>, transform_indices = @transform_1, window_bounds = array<i64: 64, 128>}, {pipeline_mode = #tpu.pipeline_mode<synchronous>, transform_indices = @transform_2, window_bounds = array<i64: 1, 128>}, {transform_indices = @transform_3, window_bounds = array<i64: 1, 16, 128>}]} {
    %c0 = arith.constant 0 : index
    %c0_0 = arith.constant 0 : index
    %c0_1 = arith.constant 0 : index
    %0 = vector.load %arg1[%c0, %c0_0, %c0_1] : memref<1x16x64xf32, #tpu.memory_space<vmem>>, vector<1x16x64xf32>
    %1 = vector.shape_cast %0 : vector<1x16x64xf32> to vector<16x64xf32>
    %c0_2 = arith.constant 0 : index
    %c0_3 = arith.constant 0 : index
    %2 = vector.load %arg2[%c0_2, %c0_3] : memref<64x128xbf16, #tpu.memory_space<vmem>>, vector<64x128xbf16>
    %3 = arith.truncf %1 : vector<16x64xf32> to vector<16x64xbf16>
    %cst = arith.constant dense<0.000000e+00> : vector<16x128xf32>
    %4 = tpu.matmul %3, %2, %cst {dimension_numbers = #tpu.dot_dimension_numbers<[1], [0], [0], [1], [0, 0, 1, 1], [], []>} : vector<16x64xbf16>, vector<64x128xbf16>, vector<16x128xf32> -> vector<16x128xf32>
    %c0_4 = arith.constant 0 : index
    %c0_5 = arith.constant 0 : index
    %5 = vector.load %arg3[%c0_4, %c0_5] : memref<1x128xf32, #tpu.memory_space<vmem>>, vector<1x128xf32>
    %6 = vector.broadcast %5 : vector<1x128xf32> to vector<16x128xf32>
    %7 = arith.addf %4, %6 : vector<16x128xf32>
    %8 = arith.truncf %7 : vector<16x128xf32> to vector<16x128xbf16>
    %c0_6 = arith.constant 0 : index
    %c0_7 = arith.constant 0 : index
    %c0_8 = arith.constant 0 : index
    %9 = vector.load %arg4[%c0_6, %c0_7, %c0_8] : memref<1x16x128xbf16, #tpu.memory_space<vmem>>, vector<1x16x128xbf16>
    %10 = vector.shape_cast %9 : vector<1x16x128xbf16> to vector<16x128xbf16>
    %11 = vector.shape_cast %8 : vector<16x128xbf16> to vector<1x16x128xbf16>
    tpu.vector_store %arg4[%c0_6, %c0_7, %c0_8], %11 {strides = array<i32>} : memref<1x16x128xbf16, #tpu.memory_space<vmem>>, vector<1x16x128xbf16>,
    return
  }
  func.func @transform_0(%arg0: i32) -> (i32, i32, i32) {
    %c0_i32 = arith.constant 0 : i32
    %c0_i32_0 = arith.constant 0 : i32
    %c0_i32_1 = arith.constant 0 : i32
    return %arg0, %c0_i32, %c0_i32_0 : i32, i32, i32
  }
  func.func @transform_1(%arg0: i32) -> (i32, i32) {
    %c0_i32 = arith.constant 0 : i32
    %c0_i32_0 = arith.constant 0 : i32
    %c0_i32_1 = arith.constant 0 : i32
    return %c0_i32, %c0_i32_0 : i32, i32
  }
  func.func @transform_2(%arg0: i32) -> (i32, i32) {
    %c0_i32 = arith.constant 0 : i32
    %c0_i32_0 = arith.constant 0 : i32
    %c0_i32_1 = arith.constant 0 : i32
    return %c0_i32, %c0_i32_0 : i32, i32
  }
  func.func @transform_3(%arg0: i32) -> (i32, i32, i32) {
    %c0_i32 = arith.constant 0 : i32
    %c0_i32_0 = arith.constant 0 : i32
    %c0_i32_1 = arith.constant 0 : i32
    return %arg0, %c0_i32, %c0_i32_0 : i32, i32, i32
  }
}

module attributes {stable_mosaic.version = 11 : i64} {
  func.func @_block_kernel(%arg0: i32, %arg1: memref<1x16x128xbf16, #tpu.memory_space<vmem>>, %arg2: memref<1x1x16xf32, #tpu.memory_space<vmem>>, %arg3: memref<1x128xf32, #tpu.memory_space<vmem>>, %arg4: memref<1x128xf32, #tpu.memory_space<vmem>>, %arg5: memref<128x512xbf16, #tpu.memory_space<vmem>>, %arg6: memref<1x512xf32, #tpu.memory_space<vmem>>, %arg7: memref<512x128xbf16, #tpu.memory_space<vmem>>, %arg8: memref<1x128xf32, #tpu.memory_space<vmem>>, %arg9: memref<1x128xf32, #tpu.memory_space<vmem>>, %arg10: memref<1x128xf32, #tpu.memory_space<vmem>>, %arg11: memref<128x256xbf16, #tpu.memory_space<vmem>>, %arg12: memref<1x256xf32, #tpu.memory_space<vmem>>, %arg13: memref<7x128xf32, #tpu.memory_space<vmem>>, %arg14: memref<1x128xf32, #tpu.memory_space<vmem>>, %arg15: memref<1x128xf32, #tpu.memory_space<vmem>>, %arg16: memref<1x128xf32, #tpu.memory_space<vmem>>, %arg17: memref<128x128xbf16, #tpu.memory_space<vmem>>, %arg18: memref<1x128xf32, #tpu.memory_space<vmem>>, %arg19: memref<1x128xf32, #tpu.memory_space<vmem>>, %arg20: memref<1x128xf32, #tpu.memory_space<vmem>>, %arg21: memref<128x384xbf16, #tpu.memory_space<vmem>>, %arg22: memref<1x384xf32, #tpu.memory_space<vmem>>, %arg23: memref<128x128xbf16, #tpu.memory_space<vmem>>, %arg24: memref<1x128xf32, #tpu.memory_space<vmem>>, %arg25: memref<1x128xf32, #tpu.memory_space<vmem>>, %arg26: memref<1x128xf32, #tpu.memory_space<vmem>>, %arg27: memref<128x512xbf16, #tpu.memory_space<vmem>>, %arg28: memref<1x512xf32, #tpu.memory_space<vmem>>, %arg29: memref<512x128xbf16, #tpu.memory_space<vmem>>, %arg30: memref<1x128xf32, #tpu.memory_space<vmem>>, %arg31: memref<1x128xf32, #tpu.memory_space<vmem>>, %arg32: memref<1x128xf32, #tpu.memory_space<vmem>>, %arg33: memref<1x16x128xbf16, #tpu.memory_space<vmem>>, %arg34: memref<32x128xf32, #tpu.memory_space<vmem>>) attributes {dimension_semantics = [#tpu.dimension_semantics<parallel>], iteration_bounds = array<i64: 2>, scalar_prefetch = 0 : i64, scratch_operands = 1 : i64, tpu.core_type = #tpu.core_type<tc>, window_params = [{transform_indices = @transform_0, window_bounds = array<i64: 1, 16, 128>}, {transform_indices = @transform_1, window_bounds = array<i64: 1, 1, 16>}, {pipeline_mode = #tpu.pipeline_mode<synchronous>, transform_indices = @transform_2, window_bounds = array<i64: 1, 128>}, {pipeline_mode = #tpu.pipeline_mode<synchronous>, transform_indices = @transform_3, window_bounds = array<i64: 1, 128>}, {pipeline_mode = #tpu.pipeline_mode<synchronous>, transform_indices = @transform_4, window_bounds = array<i64: 128, 512>}, {pipeline_mode = #tpu.pipeline_mode<synchronous>, transform_indices = @transform_5, window_bounds = array<i64: 1, 512>}, {pipeline_mode = #tpu.pipeline_mode<synchronous>, transform_indices = @transform_6, window_bounds = array<i64: 512, 128>}, {pipeline_mode = #tpu.pipeline_mode<synchronous>, transform_indices = @transform_7, window_bounds = array<i64: 1, 128>}, {pipeline_mode = #tpu.pipeline_mode<synchronous>, transform_indices = @transform_8, window_bounds = array<i64: 1, 128>}, {pipeline_mode = #tpu.pipeline_mode<synchronous>, transform_indices = @transform_9, window_bounds = array<i64: 1, 128>}, {pipeline_mode = #tpu.pipeline_mode<synchronous>, transform_indices = @transform_10, window_bounds = array<i64: 128, 256>}, {pipeline_mode = #tpu.pipeline_mode<synchronous>, transform_indices = @transform_11, window_bounds = array<i64: 1, 256>}, {pipeline_mode = #tpu.pipeline_mode<synchronous>, transform_indices = @transform_12, window_bounds = array<i64: 7, 128>}, {pipeline_mode = #tpu.pipeline_mode<synchronous>, transform_indices = @transform_13, window_bounds = array<i64: 1, 128>}, {pipeline_mode = #tpu.pipeline_mode<synchronous>, transform_indices = @transform_14, window_bounds = array<i64: 1, 128>}, {pipeline_mode = #tpu.pipeline_mode<synchronous>, transform_indices = @transform_15, window_bounds = array<i64: 1, 128>}, {pipeline_mode = #tpu.pipeline_mode<synchronous>, transform_indices = @transform_16, window_bounds = array<i64: 128, 128>}, {pipeline_mode = #tpu.pipeline_mode<synchronous>, transform_indices = @transform_17, window_bounds = array<i64: 1, 128>}, {pipeline_mode = #tpu.pipeline_mode<synchronous>, transform_indices = @transform_18, window_bounds = array<i64: 1, 128>}, {pipeline_mode = #tpu.pipeline_mode<synchronous>, transform_indices = @transform_19, window_bounds = array<i64: 1, 128>}, {pipeline_mode = #tpu.pipeline_mode<synchronous>, transform_indices = @transform_20, window_bounds = array<i64: 128, 384>}, {pipeline_mode = #tpu.pipeline_mode<synchronous>, transform_indices = @transform_21, window_bounds = array<i64: 1, 384>}, {pipeline_mode = #tpu.pipeline_mode<synchronous>, transform_indices = @transform_22, window_bounds = array<i64: 128, 128>}, {pipeline_mode = #tpu.pipeline_mode<synchronous>, transform_indices = @transform_23, window_bounds = array<i64: 1, 128>}, {pipeline_mode = #tpu.pipeline_mode<synchronous>, transform_indices = @transform_24, window_bounds = array<i64: 1, 128>}, {pipeline_mode = #tpu.pipeline_mode<synchronous>, transform_indices = @transform_25, window_bounds = array<i64: 1, 128>}, {pipeline_mode = #tpu.pipeline_mode<synchronous>, transform_indices = @transform_26, window_bounds = array<i64: 128, 512>}, {pipeline_mode = #tpu.pipeline_mode<synchronous>, transform_indices = @transform_27, window_bounds = array<i64: 1, 512>}, {pipeline_mode = #tpu.pipeline_mode<synchronous>, transform_indices = @transform_28, window_bounds = array<i64: 512, 128>}, {pipeline_mode = #tpu.pipeline_mode<synchronous>, transform_indices = @transform_29, window_bounds = array<i64: 1, 128>}, {pipeline_mode = #tpu.pipeline_mode<synchronous>, transform_indices = @transform_30, window_bounds = array<i64: 1, 128>}, {pipeline_mode = #tpu.pipeline_mode<synchronous>, transform_indices = @transform_31, window_bounds = array<i64: 1, 128>}, {transform_indices = @transform_32, window_bounds = array<i64: 1, 16, 128>}]} {
    %c0 = arith.constant 0 : index
    %c0_0 = arith.constant 0 : index
    %c0_1 = arith.constant 0 : index
    %0 = vector.load %arg1[%c0, %c0_0, %c0_1] : memref<1x16x128xbf16, #tpu.memory_space<vmem>>, vector<1x16x128xbf16>
    %1 = vector.shape_cast %0 : vector<1x16x128xbf16> to vector<16x128xbf16>
    %2 = arith.extf %1 : vector<16x128xbf16> to vector<16x128xf32>
    %c0_2 = arith.constant 0 : index
    %c0_3 = arith.constant 0 : index
    %3 = vector.load %arg3[%c0_2, %c0_3] : memref<1x128xf32, #tpu.memory_space<vmem>>, vector<1x128xf32>
    %c0_4 = arith.constant 0 : index
    %c0_5 = arith.constant 0 : index
    %4 = vector.load %arg4[%c0_4, %c0_5] : memref<1x128xf32, #tpu.memory_space<vmem>>, vector<1x128xf32>
    %cst = arith.constant dense<0.000000e+00> : vector<16xf32>
    %5 = vector.multi_reduction <add>, %2, %cst [1] : vector<16x128xf32> to vector<16xf32>
    %6 = vector.shape_cast %5 : vector<16xf32> to vector<16x1xf32>
    %cst_6 = arith.constant 1.280000e+02 : f32
    %7 = vector.broadcast %cst_6 : f32 to vector<16x1xf32>
    %8 = arith.divf %6, %7 : vector<16x1xf32>
    %9 = vector.broadcast %8 : vector<16x1xf32> to vector<16x128xf32>
    %10 = arith.subf %2, %9 : vector<16x128xf32>
    %11 = arith.mulf %10, %10 : vector<16x128xf32>
    %cst_7 = arith.constant dense<0.000000e+00> : vector<16xf32>
    %12 = vector.multi_reduction <add>, %11, %cst_7 [1] : vector<16x128xf32> to vector<16xf32>
    %13 = vector.shape_cast %12 : vector<16xf32> to vector<16x1xf32>
    %cst_8 = arith.constant 1.280000e+02 : f32
    %14 = vector.broadcast %cst_8 : f32 to vector<16x1xf32>
    %15 = arith.divf %13, %14 : vector<16x1xf32>
    %16 = vector.broadcast %8 : vector<16x1xf32> to vector<16x128xf32>
    %17 = arith.subf %2, %16 : vector<16x128xf32>
    %cst_9 = arith.constant 9.99999974E-6 : f32
    %18 = vector.broadcast %cst_9 : f32 to vector<16x1xf32>
    %19 = arith.addf %15, %18 : vector<16x1xf32>
    %20 = math.rsqrt %19 : vector<16x1xf32>
    %21 = vector.broadcast %20 : vector<16x1xf32> to vector<16x128xf32>
    %22 = arith.mulf %17, %21 : vector<16x128xf32>
    %23 = vector.broadcast %3 : vector<1x128xf32> to vector<16x128xf32>
    %24 = arith.mulf %22, %23 : vector<16x128xf32>
    %25 = vector.broadcast %4 : vector<1x128xf32> to vector<16x128xf32>
    %26 = arith.addf %24, %25 : vector<16x128xf32>
    %c0_10 = arith.constant 0 : index
    %c0_11 = arith.constant 0 : index
    %27 = vector.load %arg5[%c0_10, %c0_11] : memref<128x512xbf16, #tpu.memory_space<vmem>>, vector<128x512xbf16>
    %28 = arith.truncf %26 : vector<16x128xf32> to vector<16x128xbf16>
    %cst_12 = arith.constant dense<0.000000e+00> : vector<16x512xf32>
    %29 = tpu.matmul %28, %27, %cst_12 {dimension_numbers = #tpu.dot_dimension_numbers<[1], [0], [0], [1], [0, 0, 1, 1], [], []>} : vector<16x128xbf16>, vector<128x512xbf16>, vector<16x512xf32> -> vector<16x512xf32>
    %c0_13 = arith.constant 0 : index
    %c0_14 = arith.constant 0 : index
    %30 = vector.load %arg6[%c0_13, %c0_14] : memref<1x512xf32, #tpu.memory_space<vmem>>, vector<1x512xf32>
    %31 = vector.broadcast %30 : vector<1x512xf32> to vector<16x512xf32>
    %32 = arith.addf %29, %31 : vector<16x512xf32>
    %cst_15 = arith.constant 0.000000e+00 : f32
    %33 = vector.broadcast %cst_15 : f32 to vector<16x512xf32>
    %34 = arith.subf %33, %32 : vector<16x512xf32>
    %35 = math.exp %34 : vector<16x512xf32>
    %cst_16 = arith.constant 1.000000e+00 : f32
    %36 = vector.broadcast %cst_16 : f32 to vector<16x512xf32>
    %37 = arith.addf %36, %35 : vector<16x512xf32>
    %cst_17 = arith.constant 1.000000e+00 : f32
    %38 = vector.broadcast %cst_17 : f32 to vector<16x512xf32>
    %39 = arith.divf %38, %37 : vector<16x512xf32>
    %40 = arith.mulf %32, %39 : vector<16x512xf32>
    %c0_18 = arith.constant 0 : index
    %c0_19 = arith.constant 0 : index
    %41 = vector.load %arg7[%c0_18, %c0_19] : memref<512x128xbf16, #tpu.memory_space<vmem>>, vector<512x128xbf16>
    %42 = arith.truncf %40 : vector<16x512xf32> to vector<16x512xbf16>
    %cst_20 = arith.constant dense<0.000000e+00> : vector<16x128xf32>
    %43 = tpu.matmul %42, %41, %cst_20 {dimension_numbers = #tpu.dot_dimension_numbers<[1], [0], [0], [1], [0, 0, 1, 1], [], []>} : vector<16x512xbf16>, vector<512x128xbf16>, vector<16x128xf32> -> vector<16x128xf32>
    %c0_21 = arith.constant 0 : index
    %c0_22 = arith.constant 0 : index
    %44 = vector.load %arg8[%c0_21, %c0_22] : memref<1x128xf32, #tpu.memory_space<vmem>>, vector<1x128xf32>
    %45 = vector.broadcast %44 : vector<1x128xf32> to vector<16x128xf32>
    %46 = arith.addf %43, %45 : vector<16x128xf32>
    %cst_23 = arith.constant 5.000000e-01 : f32
    %47 = vector.broadcast %cst_23 : f32 to vector<16x128xf32>
    %48 = arith.mulf %47, %46 : vector<16x128xf32>
    %49 = arith.addf %48, %2 : vector<16x128xf32>
    %c0_24 = arith.constant 0 : index
    %c0_25 = arith.constant 0 : index
    %50 = vector.load %arg9[%c0_24, %c0_25] : memref<1x128xf32, #tpu.memory_space<vmem>>, vector<1x128xf32>
    %c0_26 = arith.constant 0 : index
    %c0_27 = arith.constant 0 : index
    %51 = vector.load %arg10[%c0_26, %c0_27] : memref<1x128xf32, #tpu.memory_space<vmem>>, vector<1x128xf32>
    %cst_28 = arith.constant dense<0.000000e+00> : vector<16xf32>
    %52 = vector.multi_reduction <add>, %49, %cst_28 [1] : vector<16x128xf32> to vector<16xf32>
    %53 = vector.shape_cast %52 : vector<16xf32> to vector<16x1xf32>
    %cst_29 = arith.constant 1.280000e+02 : f32
    %54 = vector.broadcast %cst_29 : f32 to vector<16x1xf32>
    %55 = arith.divf %53, %54 : vector<16x1xf32>
    %56 = vector.broadcast %55 : vector<16x1xf32> to vector<16x128xf32>
    %57 = arith.subf %49, %56 : vector<16x128xf32>
    %58 = arith.mulf %57, %57 : vector<16x128xf32>
    %cst_30 = arith.constant dense<0.000000e+00> : vector<16xf32>
    %59 = vector.multi_reduction <add>, %58, %cst_30 [1] : vector<16x128xf32> to vector<16xf32>
    %60 = vector.shape_cast %59 : vector<16xf32> to vector<16x1xf32>
    %cst_31 = arith.constant 1.280000e+02 : f32
    %61 = vector.broadcast %cst_31 : f32 to vector<16x1xf32>
    %62 = arith.divf %60, %61 : vector<16x1xf32>
    %63 = vector.broadcast %55 : vector<16x1xf32> to vector<16x128xf32>
    %64 = arith.subf %49, %63 : vector<16x128xf32>
    %cst_32 = arith.constant 9.99999974E-6 : f32
    %65 = vector.broadcast %cst_32 : f32 to vector<16x1xf32>
    %66 = arith.addf %62, %65 : vector<16x1xf32>
    %67 = math.rsqrt %66 : vector<16x1xf32>
    %68 = vector.broadcast %67 : vector<16x1xf32> to vector<16x128xf32>
    %69 = arith.mulf %64, %68 : vector<16x128xf32>
    %70 = vector.broadcast %50 : vector<1x128xf32> to vector<16x128xf32>
    %71 = arith.mulf %69, %70 : vector<16x128xf32>
    %72 = vector.broadcast %51 : vector<1x128xf32> to vector<16x128xf32>
    %73 = arith.addf %71, %72 : vector<16x128xf32>
    %c0_33 = arith.constant 0 : index
    %c0_34 = arith.constant 0 : index
    %74 = vector.load %arg11[%c0_33, %c0_34] : memref<128x256xbf16, #tpu.memory_space<vmem>>, vector<128x256xbf16>
    %75 = arith.truncf %73 : vector<16x128xf32> to vector<16x128xbf16>
    %cst_35 = arith.constant dense<0.000000e+00> : vector<16x256xf32>
    %76 = tpu.matmul %75, %74, %cst_35 {dimension_numbers = #tpu.dot_dimension_numbers<[1], [0], [0], [1], [0, 0, 1, 1], [], []>} : vector<16x128xbf16>, vector<128x256xbf16>, vector<16x256xf32> -> vector<16x256xf32>
    %c0_36 = arith.constant 0 : index
    %c0_37 = arith.constant 0 : index
    %77 = vector.load %arg12[%c0_36, %c0_37] : memref<1x256xf32, #tpu.memory_space<vmem>>, vector<1x256xf32>
    %78 = vector.broadcast %77 : vector<1x256xf32> to vector<16x256xf32>
    %79 = arith.addf %76, %78 : vector<16x256xf32>
    %80 = vector.extract_strided_slice %79 {offsets = [0, 0], sizes = [16, 128], strides = [1, 1]} : vector<16x256xf32> to vector<16x128xf32>
    %81 = vector.extract_strided_slice %79 {offsets = [0, 128], sizes = [16, 128], strides = [1, 1]} : vector<16x256xf32> to vector<16x128xf32>
    %cst_38 = arith.constant 0.000000e+00 : f32
    %82 = vector.broadcast %cst_38 : f32 to vector<16x128xf32>
    %83 = arith.subf %82, %81 : vector<16x128xf32>
    %84 = math.exp %83 : vector<16x128xf32>
    %cst_39 = arith.constant 1.000000e+00 : f32
    %85 = vector.broadcast %cst_39 : f32 to vector<16x128xf32>
    %86 = arith.addf %85, %84 : vector<16x128xf32>
    %cst_40 = arith.constant 1.000000e+00 : f32
    %87 = vector.broadcast %cst_40 : f32 to vector<16x128xf32>
    %88 = arith.divf %87, %86 : vector<16x128xf32>
    %89 = arith.mulf %80, %88 : vector<16x128xf32>
    %cst_41 = arith.constant 0.000000e+00 : f32
    %90 = vector.broadcast %cst_41 : f32 to vector<8x128xf32>
    %c0_42 = arith.constant 0 : index
    %c0_43 = arith.constant 0 : index
    %91 = vector.load %arg34[%c0_42, %c0_43] : memref<32x128xf32, #tpu.memory_space<vmem>>, vector<8x128xf32>
    tpu.vector_store %arg34[%c0_42, %c0_43], %90 {strides = array<i32>} : memref<32x128xf32, #tpu.memory_space<vmem>>, vector<8x128xf32>,
    %c24 = arith.constant 24 : index
    %c0_44 = arith.constant 0 : index
    %92 = vector.load %arg34[%c24, %c0_44] : memref<32x128xf32, #tpu.memory_space<vmem>>, vector<8x128xf32>
    tpu.vector_store %arg34[%c24, %c0_44], %90 {strides = array<i32>} : memref<32x128xf32, #tpu.memory_space<vmem>>, vector<8x128xf32>,
    %c8 = arith.constant 8 : index
    %c0_45 = arith.constant 0 : index
    %93 = vector.load %arg34[%c8, %c0_45] : memref<32x128xf32, #tpu.memory_space<vmem>>, vector<16x128xf32>
    tpu.vector_store %arg34[%c8, %c0_45], %89 {strides = array<i32>} : memref<32x128xf32, #tpu.memory_space<vmem>>, vector<16x128xf32>,
    %cst_46 = arith.constant 0.000000e+00 : f32
    %94 = vector.broadcast %cst_46 : f32 to vector<16x128xf32>
    %c5 = arith.constant 5 : index
    %c0_47 = arith.constant 0 : index
    %95 = vector.load %arg34[%c5, %c0_47] : memref<32x128xf32, #tpu.memory_space<vmem>>, vector<16x128xf32>
    %c0_48 = arith.constant 0 : index
    %c0_49 = arith.constant 0 : index
    %96 = vector.load %arg13[%c0_48, %c0_49] : memref<7x128xf32, #tpu.memory_space<vmem>>, vector<1x128xf32>
    %97 = vector.broadcast %96 : vector<1x128xf32> to vector<16x128xf32>
    %98 = arith.mulf %95, %97 : vector<16x128xf32>
    %99 = arith.addf %94, %98 : vector<16x128xf32>
    %c6 = arith.constant 6 : index
    %c0_50 = arith.constant 0 : index
    %100 = vector.load %arg34[%c6, %c0_50] : memref<32x128xf32, #tpu.memory_space<vmem>>, vector<16x128xf32>
    %c1 = arith.constant 1 : index
    %c0_51 = arith.constant 0 : index
    %101 = vector.load %arg13[%c1, %c0_51] : memref<7x128xf32, #tpu.memory_space<vmem>>, vector<1x128xf32>
    %102 = vector.broadcast %101 : vector<1x128xf32> to vector<16x128xf32>
    %103 = arith.mulf %100, %102 : vector<16x128xf32>
    %104 = arith.addf %99, %103 : vector<16x128xf32>
    %c7 = arith.constant 7 : index
    %c0_52 = arith.constant 0 : index
    %105 = vector.load %arg34[%c7, %c0_52] : memref<32x128xf32, #tpu.memory_space<vmem>>, vector<16x128xf32>
    %c2 = arith.constant 2 : index
    %c0_53 = arith.constant 0 : index
    %106 = vector.load %arg13[%c2, %c0_53] : memref<7x128xf32, #tpu.memory_space<vmem>>, vector<1x128xf32>
    %107 = vector.broadcast %106 : vector<1x128xf32> to vector<16x128xf32>
    %108 = arith.mulf %105, %107 : vector<16x128xf32>
    %109 = arith.addf %104, %108 : vector<16x128xf32>
    %c8_54 = arith.constant 8 : index
    %c0_55 = arith.constant 0 : index
    %110 = vector.load %arg34[%c8_54, %c0_55] : memref<32x128xf32, #tpu.memory_space<vmem>>, vector<16x128xf32>
    %c3 = arith.constant 3 : index
    %c0_56 = arith.constant 0 : index
    %111 = vector.load %arg13[%c3, %c0_56] : memref<7x128xf32, #tpu.memory_space<vmem>>, vector<1x128xf32>
    %112 = vector.broadcast %111 : vector<1x128xf32> to vector<16x128xf32>
    %113 = arith.mulf %110, %112 : vector<16x128xf32>
    %114 = arith.addf %109, %113 : vector<16x128xf32>
    %c9 = arith.constant 9 : index
    %c0_57 = arith.constant 0 : index
    %115 = vector.load %arg34[%c9, %c0_57] : memref<32x128xf32, #tpu.memory_space<vmem>>, vector<16x128xf32>
    %c4 = arith.constant 4 : index
    %c0_58 = arith.constant 0 : index
    %116 = vector.load %arg13[%c4, %c0_58] : memref<7x128xf32, #tpu.memory_space<vmem>>, vector<1x128xf32>
    %117 = vector.broadcast %116 : vector<1x128xf32> to vector<16x128xf32>
    %118 = arith.mulf %115, %117 : vector<16x128xf32>
    %119 = arith.addf %114, %118 : vector<16x128xf32>
    %c10 = arith.constant 10 : index
    %c0_59 = arith.constant 0 : index
    %120 = vector.load %arg34[%c10, %c0_59] : memref<32x128xf32, #tpu.memory_space<vmem>>, vector<16x128xf32>
    %c5_60 = arith.constant 5 : index
    %c0_61 = arith.constant 0 : index
    %121 = vector.load %arg13[%c5_60, %c0_61] : memref<7x128xf32, #tpu.memory_space<vmem>>, vector<1x128xf32>
    %122 = vector.broadcast %121 : vector<1x128xf32> to vector<16x128xf32>
    %123 = arith.mulf %120, %122 : vector<16x128xf32>
    %124 = arith.addf %119, %123 : vector<16x128xf32>
    %c11 = arith.constant 11 : index
    %c0_62 = arith.constant 0 : index
    %125 = vector.load %arg34[%c11, %c0_62] : memref<32x128xf32, #tpu.memory_space<vmem>>, vector<16x128xf32>
    %c6_63 = arith.constant 6 : index
    %c0_64 = arith.constant 0 : index
    %126 = vector.load %arg13[%c6_63, %c0_64] : memref<7x128xf32, #tpu.memory_space<vmem>>, vector<1x128xf32>
    %127 = vector.broadcast %126 : vector<1x128xf32> to vector<16x128xf32>
    %128 = arith.mulf %125, %127 : vector<16x128xf32>
    %129 = arith.addf %124, %128 : vector<16x128xf32>
    %c0_65 = arith.constant 0 : index
    %c0_66 = arith.constant 0 : index
    %130 = vector.load %arg14[%c0_65, %c0_66] : memref<1x128xf32, #tpu.memory_space<vmem>>, vector<1x128xf32>
    %131 = vector.broadcast %130 : vector<1x128xf32> to vector<16x128xf32>
    %132 = arith.addf %129, %131 : vector<16x128xf32>
    %c0_67 = arith.constant 0 : index
    %c0_68 = arith.constant 0 : index
    %133 = vector.load %arg15[%c0_67, %c0_68] : memref<1x128xf32, #tpu.memory_space<vmem>>, vector<1x128xf32>
    %134 = vector.broadcast %133 : vector<1x128xf32> to vector<16x128xf32>
    %135 = arith.mulf %132, %134 : vector<16x128xf32>
    %c0_69 = arith.constant 0 : index
    %c0_70 = arith.constant 0 : index
    %136 = vector.load %arg16[%c0_69, %c0_70] : memref<1x128xf32, #tpu.memory_space<vmem>>, vector<1x128xf32>
    %137 = vector.broadcast %136 : vector<1x128xf32> to vector<16x128xf32>
    %138 = arith.addf %135, %137 : vector<16x128xf32>
    %cst_71 = arith.constant 0.000000e+00 : f32
    %139 = vector.broadcast %cst_71 : f32 to vector<16x128xf32>
    %140 = arith.subf %139, %138 : vector<16x128xf32>
    %141 = math.exp %140 : vector<16x128xf32>
    %cst_72 = arith.constant 1.000000e+00 : f32
    %142 = vector.broadcast %cst_72 : f32 to vector<16x128xf32>
    %143 = arith.addf %142, %141 : vector<16x128xf32>
    %cst_73 = arith.constant 1.000000e+00 : f32
    %144 = vector.broadcast %cst_73 : f32 to vector<16x128xf32>
    %145 = arith.divf %144, %143 : vector<16x128xf32>
    %146 = arith.mulf %138, %145 : vector<16x128xf32>
    %c0_74 = arith.constant 0 : index
    %c0_75 = arith.constant 0 : index
    %147 = vector.load %arg17[%c0_74, %c0_75] : memref<128x128xbf16, #tpu.memory_space<vmem>>, vector<128x128xbf16>
    %148 = arith.truncf %146 : vector<16x128xf32> to vector<16x128xbf16>
    %cst_76 = arith.constant dense<0.000000e+00> : vector<16x128xf32>
    %149 = tpu.matmul %148, %147, %cst_76 {dimension_numbers = #tpu.dot_dimension_numbers<[1], [0], [0], [1], [0, 0, 1, 1], [], []>} : vector<16x128xbf16>, vector<128x128xbf16>, vector<16x128xf32> -> vector<16x128xf32>
    %c0_77 = arith.constant 0 : index
    %c0_78 = arith.constant 0 : index
    %150 = vector.load %arg18[%c0_77, %c0_78] : memref<1x128xf32, #tpu.memory_space<vmem>>, vector<1x128xf32>
    %151 = vector.broadcast %150 : vector<1x128xf32> to vector<16x128xf32>
    %152 = arith.addf %149, %151 : vector<16x128xf32>
    %153 = arith.addf %152, %49 : vector<16x128xf32>
    %c0_79 = arith.constant 0 : index
    %c0_80 = arith.constant 0 : index
    %154 = vector.load %arg19[%c0_79, %c0_80] : memref<1x128xf32, #tpu.memory_space<vmem>>, vector<1x128xf32>
    %c0_81 = arith.constant 0 : index
    %c0_82 = arith.constant 0 : index
    %155 = vector.load %arg20[%c0_81, %c0_82] : memref<1x128xf32, #tpu.memory_space<vmem>>, vector<1x128xf32>
    %cst_83 = arith.constant dense<0.000000e+00> : vector<16xf32>
    %156 = vector.multi_reduction <add>, %153, %cst_83 [1] : vector<16x128xf32> to vector<16xf32>
    %157 = vector.shape_cast %156 : vector<16xf32> to vector<16x1xf32>
    %cst_84 = arith.constant 1.280000e+02 : f32
    %158 = vector.broadcast %cst_84 : f32 to vector<16x1xf32>
    %159 = arith.divf %157, %158 : vector<16x1xf32>
    %160 = vector.broadcast %159 : vector<16x1xf32> to vector<16x128xf32>
    %161 = arith.subf %153, %160 : vector<16x128xf32>
    %162 = arith.mulf %161, %161 : vector<16x128xf32>
    %cst_85 = arith.constant dense<0.000000e+00> : vector<16xf32>
    %163 = vector.multi_reduction <add>, %162, %cst_85 [1] : vector<16x128xf32> to vector<16xf32>
    %164 = vector.shape_cast %163 : vector<16xf32> to vector<16x1xf32>
    %cst_86 = arith.constant 1.280000e+02 : f32
    %165 = vector.broadcast %cst_86 : f32 to vector<16x1xf32>
    %166 = arith.divf %164, %165 : vector<16x1xf32>
    %167 = vector.broadcast %159 : vector<16x1xf32> to vector<16x128xf32>
    %168 = arith.subf %153, %167 : vector<16x128xf32>
    %cst_87 = arith.constant 9.99999974E-6 : f32
    %169 = vector.broadcast %cst_87 : f32 to vector<16x1xf32>
    %170 = arith.addf %166, %169 : vector<16x1xf32>
    %171 = math.rsqrt %170 : vector<16x1xf32>
    %172 = vector.broadcast %171 : vector<16x1xf32> to vector<16x128xf32>
    %173 = arith.mulf %168, %172 : vector<16x128xf32>
    %174 = vector.broadcast %154 : vector<1x128xf32> to vector<16x128xf32>
    %175 = arith.mulf %173, %174 : vector<16x128xf32>
    %176 = vector.broadcast %155 : vector<1x128xf32> to vector<16x128xf32>
    %177 = arith.addf %175, %176 : vector<16x128xf32>
    %c0_88 = arith.constant 0 : index
    %c0_89 = arith.constant 0 : index
    %178 = vector.load %arg21[%c0_88, %c0_89] : memref<128x384xbf16, #tpu.memory_space<vmem>>, vector<128x384xbf16>
    %179 = arith.truncf %177 : vector<16x128xf32> to vector<16x128xbf16>
    %cst_90 = arith.constant dense<0.000000e+00> : vector<16x384xf32>
    %180 = tpu.matmul %179, %178, %cst_90 {dimension_numbers = #tpu.dot_dimension_numbers<[1], [0], [0], [1], [0, 0, 1, 1], [], []>} : vector<16x128xbf16>, vector<128x384xbf16>, vector<16x384xf32> -> vector<16x384xf32>
    %c0_91 = arith.constant 0 : index
    %c0_92 = arith.constant 0 : index
    %181 = vector.load %arg22[%c0_91, %c0_92] : memref<1x384xf32, #tpu.memory_space<vmem>>, vector<1x384xf32>
    %182 = vector.broadcast %181 : vector<1x384xf32> to vector<16x384xf32>
    %183 = arith.addf %180, %182 : vector<16x384xf32>
    %184 = vector.extract_strided_slice %183 {offsets = [0, 0], sizes = [16, 32], strides = [1, 1]} : vector<16x384xf32> to vector<16x32xf32>
    %185 = arith.truncf %184 : vector<16x32xf32> to vector<16x32xbf16>
    %186 = vector.extract_strided_slice %183 {offsets = [0, 32], sizes = [16, 32], strides = [1, 1]} : vector<16x384xf32> to vector<16x32xf32>
    %187 = arith.truncf %186 : vector<16x32xf32> to vector<16x32xbf16>
    %188 = vector.extract_strided_slice %183 {offsets = [0, 64], sizes = [16, 32], strides = [1, 1]} : vector<16x384xf32> to vector<16x32xf32>
    %189 = arith.truncf %188 : vector<16x32xf32> to vector<16x32xbf16>
    %190 = vector.extract_strided_slice %183 {offsets = [0, 96], sizes = [16, 32], strides = [1, 1]} : vector<16x384xf32> to vector<16x32xf32>
    %191 = arith.truncf %190 : vector<16x32xf32> to vector<16x32xbf16>
    %192 = vector.shape_cast %185 : vector<16x32xbf16> to vector<1x16x32xbf16>
    %193 = vector.shape_cast %187 : vector<16x32xbf16> to vector<1x16x32xbf16>
    %194 = vector.shape_cast %189 : vector<16x32xbf16> to vector<1x16x32xbf16>
    %195 = vector.shape_cast %191 : vector<16x32xbf16> to vector<1x16x32xbf16>
    %196 = tpu.concatenate %192, %193, %194, %195 in 0 : vector<1x16x32xbf16>, vector<1x16x32xbf16>, vector<1x16x32xbf16>, vector<1x16x32xbf16> -> vector<4x16x32xbf16>
    %197 = vector.extract_strided_slice %183 {offsets = [0, 128], sizes = [16, 32], strides = [1, 1]} : vector<16x384xf32> to vector<16x32xf32>
    %198 = arith.truncf %197 : vector<16x32xf32> to vector<16x32xbf16>
    %199 = vector.extract_strided_slice %183 {offsets = [0, 160], sizes = [16, 32], strides = [1, 1]} : vector<16x384xf32> to vector<16x32xf32>
    %200 = arith.truncf %199 : vector<16x32xf32> to vector<16x32xbf16>
    %201 = vector.extract_strided_slice %183 {offsets = [0, 192], sizes = [16, 32], strides = [1, 1]} : vector<16x384xf32> to vector<16x32xf32>
    %202 = arith.truncf %201 : vector<16x32xf32> to vector<16x32xbf16>
    %203 = vector.extract_strided_slice %183 {offsets = [0, 224], sizes = [16, 32], strides = [1, 1]} : vector<16x384xf32> to vector<16x32xf32>
    %204 = arith.truncf %203 : vector<16x32xf32> to vector<16x32xbf16>
    %205 = vector.shape_cast %198 : vector<16x32xbf16> to vector<1x16x32xbf16>
    %206 = vector.shape_cast %200 : vector<16x32xbf16> to vector<1x16x32xbf16>
    %207 = vector.shape_cast %202 : vector<16x32xbf16> to vector<1x16x32xbf16>
    %208 = vector.shape_cast %204 : vector<16x32xbf16> to vector<1x16x32xbf16>
    %209 = tpu.concatenate %205, %206, %207, %208 in 0 : vector<1x16x32xbf16>, vector<1x16x32xbf16>, vector<1x16x32xbf16>, vector<1x16x32xbf16> -> vector<4x16x32xbf16>
    %210 = vector.extract_strided_slice %183 {offsets = [0, 256], sizes = [16, 32], strides = [1, 1]} : vector<16x384xf32> to vector<16x32xf32>
    %211 = arith.truncf %210 : vector<16x32xf32> to vector<16x32xbf16>
    %212 = vector.extract_strided_slice %183 {offsets = [0, 288], sizes = [16, 32], strides = [1, 1]} : vector<16x384xf32> to vector<16x32xf32>
    %213 = arith.truncf %212 : vector<16x32xf32> to vector<16x32xbf16>
    %214 = vector.extract_strided_slice %183 {offsets = [0, 320], sizes = [16, 32], strides = [1, 1]} : vector<16x384xf32> to vector<16x32xf32>
    %215 = arith.truncf %214 : vector<16x32xf32> to vector<16x32xbf16>
    %216 = vector.extract_strided_slice %183 {offsets = [0, 352], sizes = [16, 32], strides = [1, 1]} : vector<16x384xf32> to vector<16x32xf32>
    %217 = arith.truncf %216 : vector<16x32xf32> to vector<16x32xbf16>
    %218 = vector.shape_cast %211 : vector<16x32xbf16> to vector<1x16x32xbf16>
    %219 = vector.shape_cast %213 : vector<16x32xbf16> to vector<1x16x32xbf16>
    %220 = vector.shape_cast %215 : vector<16x32xbf16> to vector<1x16x32xbf16>
    %221 = vector.shape_cast %217 : vector<16x32xbf16> to vector<1x16x32xbf16>
    %222 = tpu.concatenate %218, %219, %220, %221 in 0 : vector<1x16x32xbf16>, vector<1x16x32xbf16>, vector<1x16x32xbf16>, vector<1x16x32xbf16> -> vector<4x16x32xbf16>
    %c0_93 = arith.constant 0 : index
    %c0_94 = arith.constant 0 : index
    %c0_95 = arith.constant 0 : index
    %223 = vector.load %arg2[%c0_93, %c0_94, %c0_95] : memref<1x1x16xf32, #tpu.memory_space<vmem>>, vector<1x1x16xf32>
    %224 = vector.shape_cast %223 : vector<1x1x16xf32> to vector<1x16xf32>
    %cst_96 = arith.constant 1.000000e+00 : f32
    %225 = vector.broadcast %cst_96 : f32 to vector<1x16xf32>
    %226 = arith.subf %225, %224 : vector<1x16xf32>
    %cst_97 = arith.constant -1.000000e+30 : f32
    %227 = vector.broadcast %cst_97 : f32 to vector<1x16xf32>
    %228 = arith.mulf %226, %227 : vector<1x16xf32>
    %cst_98 = arith.constant 0xFF800000 : f32
    %229 = vector.broadcast %cst_98 : f32 to vector<4x16x1xf32>
    %cst_99 = arith.constant 0.000000e+00 : f32
    %230 = vector.broadcast %cst_99 : f32 to vector<4x16x1xf32>
    %cst_100 = arith.constant 0.000000e+00 : f32
    %231 = vector.broadcast %cst_100 : f32 to vector<4x16x32xf32>
    %cst_101 = arith.constant dense<0.000000e+00> : vector<4x16x16xf32>
    %232 = tpu.matmul %196, %209, %cst_101 {dimension_numbers = #tpu.dot_dimension_numbers<[2], [2], [1], [1], [0, 0, 0, 1, 1, 1], [0], [0]>} : vector<4x16x32xbf16>, vector<4x16x32xbf16>, vector<4x16x16xf32> -> vector<4x16x16xf32>
    %cst_102 = arith.constant 0.176776692 : f32
    %233 = vector.broadcast %cst_102 : f32 to vector<4x16x16xf32>
    %234 = arith.mulf %232, %233 : vector<4x16x16xf32>
    %235 = vector.shape_cast %228 : vector<1x16xf32> to vector<1x1x16xf32>
    %236 = vector.broadcast %235 : vector<1x1x16xf32> to vector<4x16x16xf32>
    %237 = arith.addf %234, %236 : vector<4x16x16xf32>
    %cst_103 = arith.constant dense<0xFF800000> : vector<4x16xf32>
    %238 = vector.multi_reduction <maximumf>, %237, %cst_103 [2] : vector<4x16x16xf32> to vector<4x16xf32>
    %239 = vector.shape_cast %238 : vector<4x16xf32> to vector<4x16x1xf32>
    %240 = arith.maximumf %229, %239 : vector<4x16x1xf32>
    %241 = arith.subf %229, %240 : vector<4x16x1xf32>
    %242 = math.exp %241 : vector<4x16x1xf32>
    %243 = vector.broadcast %240 : vector<4x16x1xf32> to vector<4x16x16xf32>
    %244 = arith.subf %237, %243 : vector<4x16x16xf32>
    %245 = math.exp %244 : vector<4x16x16xf32>
    %246 = arith.mulf %242, %230 : vector<4x16x1xf32>
    %cst_104 = arith.constant dense<0.000000e+00> : vector<4x16xf32>
    %247 = vector.multi_reduction <add>, %245, %cst_104 [2] : vector<4x16x16xf32> to vector<4x16xf32>
    %248 = vector.shape_cast %247 : vector<4x16xf32> to vector<4x16x1xf32>
    %249 = arith.addf %246, %248 : vector<4x16x1xf32>
    %250 = vector.broadcast %242 : vector<4x16x1xf32> to vector<4x16x32xf32>
    %251 = arith.mulf %250, %231 : vector<4x16x32xf32>
    %252 = arith.truncf %245 : vector<4x16x16xf32> to vector<4x16x16xbf16>
    %cst_105 = arith.constant dense<0.000000e+00> : vector<4x16x32xf32>
    %253 = tpu.matmul %252, %222, %cst_105 {dimension_numbers = #tpu.dot_dimension_numbers<[2], [1], [1], [2], [0, 0, 0, 1, 1, 2], [0], [0]>} : vector<4x16x16xbf16>, vector<4x16x32xbf16>, vector<4x16x32xf32> -> vector<4x16x32xf32>
    %254 = arith.addf %251, %253 : vector<4x16x32xf32>
    %255 = tpu.reciprocal %249 {approx = true} : vector<4x16x1xf32> -> vector<4x16x1xf32>
    %256 = vector.broadcast %255 : vector<4x16x1xf32> to vector<4x16x32xf32>
    %257 = arith.mulf %254, %256 : vector<4x16x32xf32>
    %258 = vector.extract_strided_slice %257 {offsets = [0, 0, 0], sizes = [1, 16, 32], strides = [1, 1, 1]} : vector<4x16x32xf32> to vector<1x16x32xf32>
    %259 = vector.shape_cast %258 : vector<1x16x32xf32> to vector<16x32xf32>
    %260 = vector.extract_strided_slice %257 {offsets = [1, 0, 0], sizes = [1, 16, 32], strides = [1, 1, 1]} : vector<4x16x32xf32> to vector<1x16x32xf32>
    %261 = vector.shape_cast %260 : vector<1x16x32xf32> to vector<16x32xf32>
    %262 = vector.extract_strided_slice %257 {offsets = [2, 0, 0], sizes = [1, 16, 32], strides = [1, 1, 1]} : vector<4x16x32xf32> to vector<1x16x32xf32>
    %263 = vector.shape_cast %262 : vector<1x16x32xf32> to vector<16x32xf32>
    %264 = vector.extract_strided_slice %257 {offsets = [3, 0, 0], sizes = [1, 16, 32], strides = [1, 1, 1]} : vector<4x16x32xf32> to vector<1x16x32xf32>
    %265 = vector.shape_cast %264 : vector<1x16x32xf32> to vector<16x32xf32>
    %266 = tpu.concatenate %259, %261, %263, %265 in 1 : vector<16x32xf32>, vector<16x32xf32>, vector<16x32xf32>, vector<16x32xf32> -> vector<16x128xf32>
    %c0_106 = arith.constant 0 : index
    %c0_107 = arith.constant 0 : index
    %267 = vector.load %arg23[%c0_106, %c0_107] : memref<128x128xbf16, #tpu.memory_space<vmem>>, vector<128x128xbf16>
    %268 = arith.truncf %266 : vector<16x128xf32> to vector<16x128xbf16>
    %cst_108 = arith.constant dense<0.000000e+00> : vector<16x128xf32>
    %269 = tpu.matmul %268, %267, %cst_108 {dimension_numbers = #tpu.dot_dimension_numbers<[1], [0], [0], [1], [0, 0, 1, 1], [], []>} : vector<16x128xbf16>, vector<128x128xbf16>, vector<16x128xf32> -> vector<16x128xf32>
    %c0_109 = arith.constant 0 : index
    %c0_110 = arith.constant 0 : index
    %270 = vector.load %arg24[%c0_109, %c0_110] : memref<1x128xf32, #tpu.memory_space<vmem>>, vector<1x128xf32>
    %271 = vector.broadcast %270 : vector<1x128xf32> to vector<16x128xf32>
    %272 = arith.addf %269, %271 : vector<16x128xf32>
    %273 = arith.addf %272, %153 : vector<16x128xf32>
    %c0_111 = arith.constant 0 : index
    %c0_112 = arith.constant 0 : index
    %274 = vector.load %arg25[%c0_111, %c0_112] : memref<1x128xf32, #tpu.memory_space<vmem>>, vector<1x128xf32>
    %c0_113 = arith.constant 0 : index
    %c0_114 = arith.constant 0 : index
    %275 = vector.load %arg26[%c0_113, %c0_114] : memref<1x128xf32, #tpu.memory_space<vmem>>, vector<1x128xf32>
    %cst_115 = arith.constant dense<0.000000e+00> : vector<16xf32>
    %276 = vector.multi_reduction <add>, %273, %cst_115 [1] : vector<16x128xf32> to vector<16xf32>
    %277 = vector.shape_cast %276 : vector<16xf32> to vector<16x1xf32>
    %cst_116 = arith.constant 1.280000e+02 : f32
    %278 = vector.broadcast %cst_116 : f32 to vector<16x1xf32>
    %279 = arith.divf %277, %278 : vector<16x1xf32>
    %280 = vector.broadcast %279 : vector<16x1xf32> to vector<16x128xf32>
    %281 = arith.subf %273, %280 : vector<16x128xf32>
    %282 = arith.mulf %281, %281 : vector<16x128xf32>
    %cst_117 = arith.constant dense<0.000000e+00> : vector<16xf32>
    %283 = vector.multi_reduction <add>, %282, %cst_117 [1] : vector<16x128xf32> to vector<16xf32>
    %284 = vector.shape_cast %283 : vector<16xf32> to vector<16x1xf32>
    %cst_118 = arith.constant 1.280000e+02 : f32
    %285 = vector.broadcast %cst_118 : f32 to vector<16x1xf32>
    %286 = arith.divf %284, %285 : vector<16x1xf32>
    %287 = vector.broadcast %279 : vector<16x1xf32> to vector<16x128xf32>
    %288 = arith.subf %273, %287 : vector<16x128xf32>
    %cst_119 = arith.constant 9.99999974E-6 : f32
    %289 = vector.broadcast %cst_119 : f32 to vector<16x1xf32>
    %290 = arith.addf %286, %289 : vector<16x1xf32>
    %291 = math.rsqrt %290 : vector<16x1xf32>
    %292 = vector.broadcast %291 : vector<16x1xf32> to vector<16x128xf32>
    %293 = arith.mulf %288, %292 : vector<16x128xf32>
    %294 = vector.broadcast %274 : vector<1x128xf32> to vector<16x128xf32>
    %295 = arith.mulf %293, %294 : vector<16x128xf32>
    %296 = vector.broadcast %275 : vector<1x128xf32> to vector<16x128xf32>
    %297 = arith.addf %295, %296 : vector<16x128xf32>
    %c0_120 = arith.constant 0 : index
    %c0_121 = arith.constant 0 : index
    %298 = vector.load %arg27[%c0_120, %c0_121] : memref<128x512xbf16, #tpu.memory_space<vmem>>, vector<128x512xbf16>
    %299 = arith.truncf %297 : vector<16x128xf32> to vector<16x128xbf16>
    %cst_122 = arith.constant dense<0.000000e+00> : vector<16x512xf32>
    %300 = tpu.matmul %299, %298, %cst_122 {dimension_numbers = #tpu.dot_dimension_numbers<[1], [0], [0], [1], [0, 0, 1, 1], [], []>} : vector<16x128xbf16>, vector<128x512xbf16>, vector<16x512xf32> -> vector<16x512xf32>
    %c0_123 = arith.constant 0 : index
    %c0_124 = arith.constant 0 : index
    %301 = vector.load %arg28[%c0_123, %c0_124] : memref<1x512xf32, #tpu.memory_space<vmem>>, vector<1x512xf32>
    %302 = vector.broadcast %301 : vector<1x512xf32> to vector<16x512xf32>
    %303 = arith.addf %300, %302 : vector<16x512xf32>
    %cst_125 = arith.constant 0.000000e+00 : f32
    %304 = vector.broadcast %cst_125 : f32 to vector<16x512xf32>
    %305 = arith.subf %304, %303 : vector<16x512xf32>
    %306 = math.exp %305 : vector<16x512xf32>
    %cst_126 = arith.constant 1.000000e+00 : f32
    %307 = vector.broadcast %cst_126 : f32 to vector<16x512xf32>
    %308 = arith.addf %307, %306 : vector<16x512xf32>
    %cst_127 = arith.constant 1.000000e+00 : f32
    %309 = vector.broadcast %cst_127 : f32 to vector<16x512xf32>
    %310 = arith.divf %309, %308 : vector<16x512xf32>
    %311 = arith.mulf %303, %310 : vector<16x512xf32>
    %c0_128 = arith.constant 0 : index
    %c0_129 = arith.constant 0 : index
    %312 = vector.load %arg29[%c0_128, %c0_129] : memref<512x128xbf16, #tpu.memory_space<vmem>>, vector<512x128xbf16>
    %313 = arith.truncf %311 : vector<16x512xf32> to vector<16x512xbf16>
    %cst_130 = arith.constant dense<0.000000e+00> : vector<16x128xf32>
    %314 = tpu.matmul %313, %312, %cst_130 {dimension_numbers = #tpu.dot_dimension_numbers<[1], [0], [0], [1], [0, 0, 1, 1], [], []>} : vector<16x512xbf16>, vector<512x128xbf16>, vector<16x128xf32> -> vector<16x128xf32>
    %c0_131 = arith.constant 0 : index
    %c0_132 = arith.constant 0 : index
    %315 = vector.load %arg30[%c0_131, %c0_132] : memref<1x128xf32, #tpu.memory_space<vmem>>, vector<1x128xf32>
    %316 = vector.broadcast %315 : vector<1x128xf32> to vector<16x128xf32>
    %317 = arith.addf %314, %316 : vector<16x128xf32>
    %cst_133 = arith.constant 5.000000e-01 : f32
    %318 = vector.broadcast %cst_133 : f32 to vector<16x128xf32>
    %319 = arith.mulf %318, %317 : vector<16x128xf32>
    %320 = arith.addf %319, %273 : vector<16x128xf32>
    %c0_134 = arith.constant 0 : index
    %c0_135 = arith.constant 0 : index
    %321 = vector.load %arg31[%c0_134, %c0_135] : memref<1x128xf32, #tpu.memory_space<vmem>>, vector<1x128xf32>
    %c0_136 = arith.constant 0 : index
    %c0_137 = arith.constant 0 : index
    %322 = vector.load %arg32[%c0_136, %c0_137] : memref<1x128xf32, #tpu.memory_space<vmem>>, vector<1x128xf32>
    %cst_138 = arith.constant dense<0.000000e+00> : vector<16xf32>
    %323 = vector.multi_reduction <add>, %320, %cst_138 [1] : vector<16x128xf32> to vector<16xf32>
    %324 = vector.shape_cast %323 : vector<16xf32> to vector<16x1xf32>
    %cst_139 = arith.constant 1.280000e+02 : f32
    %325 = vector.broadcast %cst_139 : f32 to vector<16x1xf32>
    %326 = arith.divf %324, %325 : vector<16x1xf32>
    %327 = vector.broadcast %326 : vector<16x1xf32> to vector<16x128xf32>
    %328 = arith.subf %320, %327 : vector<16x128xf32>
    %329 = arith.mulf %328, %328 : vector<16x128xf32>
    %cst_140 = arith.constant dense<0.000000e+00> : vector<16xf32>
    %330 = vector.multi_reduction <add>, %329, %cst_140 [1] : vector<16x128xf32> to vector<16xf32>
    %331 = vector.shape_cast %330 : vector<16xf32> to vector<16x1xf32>
    %cst_141 = arith.constant 1.280000e+02 : f32
    %332 = vector.broadcast %cst_141 : f32 to vector<16x1xf32>
    %333 = arith.divf %331, %332 : vector<16x1xf32>
    %334 = vector.broadcast %326 : vector<16x1xf32> to vector<16x128xf32>
    %335 = arith.subf %320, %334 : vector<16x128xf32>
    %cst_142 = arith.constant 9.99999974E-6 : f32
    %336 = vector.broadcast %cst_142 : f32 to vector<16x1xf32>
    %337 = arith.addf %333, %336 : vector<16x1xf32>
    %338 = math.rsqrt %337 : vector<16x1xf32>
    %339 = vector.broadcast %338 : vector<16x1xf32> to vector<16x128xf32>
    %340 = arith.mulf %335, %339 : vector<16x128xf32>
    %341 = vector.broadcast %321 : vector<1x128xf32> to vector<16x128xf32>
    %342 = arith.mulf %340, %341 : vector<16x128xf32>
    %343 = vector.broadcast %322 : vector<1x128xf32> to vector<16x128xf32>
    %344 = arith.addf %342, %343 : vector<16x128xf32>
    %345 = arith.truncf %344 : vector<16x128xf32> to vector<16x128xbf16>
    %c0_143 = arith.constant 0 : index
    %c0_144 = arith.constant 0 : index
    %c0_145 = arith.constant 0 : index
    %346 = vector.load %arg33[%c0_143, %c0_144, %c0_145] : memref<1x16x128xbf16, #tpu.memory_space<vmem>>, vector<1x16x128xbf16>
    %347 = vector.shape_cast %346 : vector<1x16x128xbf16> to vector<16x128xbf16>
    %348 = vector.shape_cast %345 : vector<16x128xbf16> to vector<1x16x128xbf16>
    tpu.vector_store %arg33[%c0_143, %c0_144, %c0_145], %348 {strides = array<i32>} : memref<1x16x128xbf16, #tpu.memory_space<vmem>>, vector<1x16x128xbf16>,
    return
  }
  func.func @transform_0(%arg0: i32) -> (i32, i32, i32) {
    %c0_i32 = arith.constant 0 : i32
    %c0_i32_0 = arith.constant 0 : i32
    %c0_i32_1 = arith.constant 0 : i32
    return %arg0, %c0_i32, %c0_i32_0 : i32, i32, i32
  }
  func.func @transform_1(%arg0: i32) -> (i32, i32, i32) {
    %c0_i32 = arith.constant 0 : i32
    %c0_i32_0 = arith.constant 0 : i32
    %c0_i32_1 = arith.constant 0 : i32
    return %arg0, %c0_i32, %c0_i32_0 : i32, i32, i32
  }
  func.func @transform_2(%arg0: i32) -> (i32, i32) {
    %c0_i32 = arith.constant 0 : i32
    %c0_i32_0 = arith.constant 0 : i32
    %c0_i32_1 = arith.constant 0 : i32
    return %c0_i32, %c0_i32_0 : i32, i32
  }
  func.func @transform_3(%arg0: i32) -> (i32, i32) {
    %c0_i32 = arith.constant 0 : i32
    %c0_i32_0 = arith.constant 0 : i32
    %c0_i32_1 = arith.constant 0 : i32
    return %c0_i32, %c0_i32_0 : i32, i32
  }
  func.func @transform_4(%arg0: i32) -> (i32, i32) {
    %c0_i32 = arith.constant 0 : i32
    %c0_i32_0 = arith.constant 0 : i32
    %c0_i32_1 = arith.constant 0 : i32
    return %c0_i32, %c0_i32_0 : i32, i32
  }
  func.func @transform_5(%arg0: i32) -> (i32, i32) {
    %c0_i32 = arith.constant 0 : i32
    %c0_i32_0 = arith.constant 0 : i32
    %c0_i32_1 = arith.constant 0 : i32
    return %c0_i32, %c0_i32_0 : i32, i32
  }
  func.func @transform_6(%arg0: i32) -> (i32, i32) {
    %c0_i32 = arith.constant 0 : i32
    %c0_i32_0 = arith.constant 0 : i32
    %c0_i32_1 = arith.constant 0 : i32
    return %c0_i32, %c0_i32_0 : i32, i32
  }
  func.func @transform_7(%arg0: i32) -> (i32, i32) {
    %c0_i32 = arith.constant 0 : i32
    %c0_i32_0 = arith.constant 0 : i32
    %c0_i32_1 = arith.constant 0 : i32
    return %c0_i32, %c0_i32_0 : i32, i32
  }
  func.func @transform_8(%arg0: i32) -> (i32, i32) {
    %c0_i32 = arith.constant 0 : i32
    %c0_i32_0 = arith.constant 0 : i32
    %c0_i32_1 = arith.constant 0 : i32
    return %c0_i32, %c0_i32_0 : i32, i32
  }
  func.func @transform_9(%arg0: i32) -> (i32, i32) {
    %c0_i32 = arith.constant 0 : i32
    %c0_i32_0 = arith.constant 0 : i32
    %c0_i32_1 = arith.constant 0 : i32
    return %c0_i32, %c0_i32_0 : i32, i32
  }
  func.func @transform_10(%arg0: i32) -> (i32, i32) {
    %c0_i32 = arith.constant 0 : i32
    %c0_i32_0 = arith.constant 0 : i32
    %c0_i32_1 = arith.constant 0 : i32
    return %c0_i32, %c0_i32_0 : i32, i32
  }
  func.func @transform_11(%arg0: i32) -> (i32, i32) {
    %c0_i32 = arith.constant 0 : i32
    %c0_i32_0 = arith.constant 0 : i32
    %c0_i32_1 = arith.constant 0 : i32
    return %c0_i32, %c0_i32_0 : i32, i32
  }
  func.func @transform_12(%arg0: i32) -> (i32, i32) {
    %c0_i32 = arith.constant 0 : i32
    %c0_i32_0 = arith.constant 0 : i32
    %c0_i32_1 = arith.constant 0 : i32
    return %c0_i32, %c0_i32_0 : i32, i32
  }
  func.func @transform_13(%arg0: i32) -> (i32, i32) {
    %c0_i32 = arith.constant 0 : i32
    %c0_i32_0 = arith.constant 0 : i32
    %c0_i32_1 = arith.constant 0 : i32
    return %c0_i32, %c0_i32_0 : i32, i32
  }
  func.func @transform_14(%arg0: i32) -> (i32, i32) {
    %c0_i32 = arith.constant 0 : i32
    %c0_i32_0 = arith.constant 0 : i32
    %c0_i32_1 = arith.constant 0 : i32
    return %c0_i32, %c0_i32_0 : i32, i32
  }
  func.func @transform_15(%arg0: i32) -> (i32, i32) {
    %c0_i32 = arith.constant 0 : i32
    %c0_i32_0 = arith.constant 0 : i32
    %c0_i32_1 = arith.constant 0 : i32
    return %c0_i32, %c0_i32_0 : i32, i32
  }
  func.func @transform_16(%arg0: i32) -> (i32, i32) {
    %c0_i32 = arith.constant 0 : i32
    %c0_i32_0 = arith.constant 0 : i32
    %c0_i32_1 = arith.constant 0 : i32
    return %c0_i32, %c0_i32_0 : i32, i32
  }
  func.func @transform_17(%arg0: i32) -> (i32, i32) {
    %c0_i32 = arith.constant 0 : i32
    %c0_i32_0 = arith.constant 0 : i32
    %c0_i32_1 = arith.constant 0 : i32
    return %c0_i32, %c0_i32_0 : i32, i32
  }
  func.func @transform_18(%arg0: i32) -> (i32, i32) {
    %c0_i32 = arith.constant 0 : i32
    %c0_i32_0 = arith.constant 0 : i32
    %c0_i32_1 = arith.constant 0 : i32
    return %c0_i32, %c0_i32_0 : i32, i32
  }
  func.func @transform_19(%arg0: i32) -> (i32, i32) {
    %c0_i32 = arith.constant 0 : i32
    %c0_i32_0 = arith.constant 0 : i32
    %c0_i32_1 = arith.constant 0 : i32
    return %c0_i32, %c0_i32_0 : i32, i32
  }
  func.func @transform_20(%arg0: i32) -> (i32, i32) {
    %c0_i32 = arith.constant 0 : i32
    %c0_i32_0 = arith.constant 0 : i32
    %c0_i32_1 = arith.constant 0 : i32
    return %c0_i32, %c0_i32_0 : i32, i32
  }
  func.func @transform_21(%arg0: i32) -> (i32, i32) {
    %c0_i32 = arith.constant 0 : i32
    %c0_i32_0 = arith.constant 0 : i32
    %c0_i32_1 = arith.constant 0 : i32
    return %c0_i32, %c0_i32_0 : i32, i32
  }
  func.func @transform_22(%arg0: i32) -> (i32, i32) {
    %c0_i32 = arith.constant 0 : i32
    %c0_i32_0 = arith.constant 0 : i32
    %c0_i32_1 = arith.constant 0 : i32
    return %c0_i32, %c0_i32_0 : i32, i32
  }
  func.func @transform_23(%arg0: i32) -> (i32, i32) {
    %c0_i32 = arith.constant 0 : i32
    %c0_i32_0 = arith.constant 0 : i32
    %c0_i32_1 = arith.constant 0 : i32
    return %c0_i32, %c0_i32_0 : i32, i32
  }
  func.func @transform_24(%arg0: i32) -> (i32, i32) {
    %c0_i32 = arith.constant 0 : i32
    %c0_i32_0 = arith.constant 0 : i32
    %c0_i32_1 = arith.constant 0 : i32
    return %c0_i32, %c0_i32_0 : i32, i32
  }
  func.func @transform_25(%arg0: i32) -> (i32, i32) {
    %c0_i32 = arith.constant 0 : i32
    %c0_i32_0 = arith.constant 0 : i32
    %c0_i32_1 = arith.constant 0 : i32
    return %c0_i32, %c0_i32_0 : i32, i32
  }
  func.func @transform_26(%arg0: i32) -> (i32, i32) {
    %c0_i32 = arith.constant 0 : i32
    %c0_i32_0 = arith.constant 0 : i32
    %c0_i32_1 = arith.constant 0 : i32
    return %c0_i32, %c0_i32_0 : i32, i32
  }
  func.func @transform_27(%arg0: i32) -> (i32, i32) {
    %c0_i32 = arith.constant 0 : i32
    %c0_i32_0 = arith.constant 0 : i32
    %c0_i32_1 = arith.constant 0 : i32
    return %c0_i32, %c0_i32_0 : i32, i32
  }
  func.func @transform_28(%arg0: i32) -> (i32, i32) {
    %c0_i32 = arith.constant 0 : i32
    %c0_i32_0 = arith.constant 0 : i32
    %c0_i32_1 = arith.constant 0 : i32
    return %c0_i32, %c0_i32_0 : i32, i32
  }
  func.func @transform_29(%arg0: i32) -> (i32, i32) {
    %c0_i32 = arith.constant 0 : i32
    %c0_i32_0 = arith.constant 0 : i32
    %c0_i32_1 = arith.constant 0 : i32
    return %c0_i32, %c0_i32_0 : i32, i32
  }
  func.func @transform_30(%arg0: i32) -> (i32, i32) {
    %c0_i32 = arith.constant 0 : i32
    %c0_i32_0 = arith.constant 0 : i32
    %c0_i32_1 = arith.constant 0 : i32
    return %c0_i32, %c0_i32_0 : i32, i32
  }
  func.func @transform_31(%arg0: i32) -> (i32, i32) {
    %c0_i32 = arith.constant 0 : i32
    %c0_i32_0 = arith.constant 0 : i32
    %c0_i32_1 = arith.constant 0 : i32
    return %c0_i32, %c0_i32_0 : i32, i32
  }
  func.func @transform_32(%arg0: i32) -> (i32, i32, i32) {
    %c0_i32 = arith.constant 0 : i32
    %c0_i32_0 = arith.constant 0 : i32
    %c0_i32_1 = arith.constant 0 : i32
    return %arg0, %c0_i32, %c0_i32_0 : i32, i32, i32
  }
}

</mosaic_0001>

<llo_original>
// kernel: conformer_encoder_forward.3
$region0: #{conformer_encoder_forward.3}
  #allocation0 [shape = 'u32[]', space=smem, size = 0x4, offset = 0x4, fixed_abs, tag = 'smem constant byte address 0x4 - core index']
  #allocation1 [shape = 'u32[144,128]{1,0:T(1,128)}', space=vmem, size = 0x12000, scoped, tag = 'internal scratch']
  %s0 = inlined_call_operand.hbm [shape: f32[2,16,64], index: 0, kind: input, shape index: {}]
  %s1 = inlined_call_operand.hbm [shape: bf16[64,128], index: 1, kind: input, shape index: {}]
  %s2 = inlined_call_operand.hbm [shape: f32[1,128], index: 2, kind: input, shape index: {}]
  %s3 = inlined_call_operand.hbm [shape: bf16[2,16,128], index: 3, kind: output, shape index: {}]
  %s4 = sld [smem:[#allocation0]]
  $region57: #{conformer_encoder_forward.3} parent=0
    _
  %s6 = ssub.s32 1, %s4
  %s7 = scalar_select 0, %s6, %s4
  $region1: #{conformer_encoder_forward.3} parent=0
    #allocation2 [shape = 'u8[16384]{0}', space=vmem, size = 0x4000, scoped, tag = 'input window, operand 0']
    #allocation3 [shape = 's32[2]{0}', space=sflag, size = 0x8, scoped, tag = 'scoped memory for conformer_encoder_forward.3']
    #allocation4 [shape = 's32[2]{0}', space=sflag, size = 0x8, scoped, tag = 'scoped memory for conformer_encoder_forward.3']
    #allocation5 [shape = 'u8[16384]{0}', space=vmem, size = 0x4000, scoped, tag = 'input window, operand 1, single buffered']
    #allocation6 [shape = 's32[1]{0}', space=sflag, size = 0x4, scoped, tag = 'scoped memory for conformer_encoder_forward.3']
    #allocation7 [shape = 'u8[512]{0}', space=vmem, size = 0x400, scoped, tag = 'input window, operand 2, single buffered']
    #allocation8 [shape = 'u8[8192]{0}', space=vmem, size = 0x2000, scoped, tag = 'output window, operand 0']
    %8 = vsyncpa [#allocation3], 0
    %s9 = scalar_lea.sflag [#allocation3], 1
    %10 = vsyncpa %s9, 0
    %11 = vsyncpa [#allocation6], 0
    %12 = vsyncpa [#allocation4], 0
    %s13 = scalar_lea.sflag [#allocation4], 1
    %14 = vsyncpa %s13, 0
    loop: start=0, step=1, limit=4
    $region2: #{conformer_encoder_forward.3} parent=1 // loop_pre_header
      _
    $region3: #{conformer_encoder_forward.3} parent=1 // loop_header
      %s16 = sphi 0, %s20
      %p17 = scmp.ge.s32.totalorder %s16, 4
      %s26 = sphi 0, %s28
      %s29 = sphi 0, %s26
      %s30 = sphi 0, %s29
      %s46 = sphi 0, %s30
      %s50 = sphi 0, %s50
      %s52 = sphi 0, %s50
      %s53 = sphi 0, %s52
      %s67 = sphi 0, %s53
      %s71 = sphi 0, %s71
      %s73 = sphi 0, %s71
      %s74 = sphi 0, %s73
      %s88 = sphi 0, %s74
      %s94 = sphi 0, %s96
      %s97 = sphi 0, %s94
      %s98 = sphi 0, %s97
      %s114 = sphi 0, %s98
    $region4: #{conformer_encoder_forward.3} parent=1 // loop_header_branch
      %19 = sbr.rel (%p17) target = $region8
    $region5: #{conformer_encoder_forward.3} parent=1 // loop_body
      %s21 = ssub.s32 %s16, 1
      %s22 = ssub.s32 %s16, 2
      %s23 = sadd.s32 %s16, 1
      %s24 = ssub.s32 %s16, %s23
      %p25 = scmp.eq.s32.totalorder %s24, 0
      %s27 = sadd.s32 %s26, 1
      %s28 = scalar_select %p25, %s26, %s27
      %p31 = pneg %p25
      %p32 = scmp.eq.s32.totalorder %s16, 1
      %p33 = por %p31, %p32
      %p34 = scmp.ne.s32.totalorder %s26, %s29
      %p35 = scmp.eq.s32.totalorder %s16, 0
      %p36 = por %p34, %p35
      %p37 = scmp.ne.s32.totalorder %s26, %s29
      %p38 = scmp.eq.s32.totalorder %s21, 1
      %p39 = por %p37, %p38
      %p40 = scmp.ne.s32.totalorder %s29, %s30
      %p41 = scmp.eq.s32.totalorder %s21, 0
      %p42 = por %p40, %p41
      %p43 = scmp.ne.s32.totalorder %s29, %s30
      %p44 = scmp.eq.s32.totalorder %s22, 1
      %p45 = por %p43, %p44
      %p47 = scmp.ne.s32.totalorder %s30, %s46
      %p48 = scmp.eq.s32.totalorder %s22, 0
      %p49 = por %p47, %p48
      %s51 = sadd.s32 %s50, 1
      %p54 = scmp.eq.s32.totalorder %s16, 1
      %p55 = scmp.ne.s32.totalorder %s50, %s52
      %p56 = scmp.eq.s32.totalorder %s16, 0
      %p57 = por %p55, %p56
      %p58 = scmp.ne.s32.totalorder %s50, %s52
      %p59 = scmp.eq.s32.totalorder %s21, 1
      %p60 = por %p58, %p59
      %p61 = scmp.ne.s32.totalorder %s52, %s53
      %p62 = scmp.eq.s32.totalorder %s21, 0
      %p63 = por %p61, %p62
      %p64 = scmp.ne.s32.totalorder %s52, %s53
      %p65 = scmp.eq.s32.totalorder %s22, 1
      %p66 = por %p64, %p65
      %p68 = scmp.ne.s32.totalorder %s53, %s67
      %p69 = scmp.eq.s32.totalorder %s22, 0
      %p70 = por %p68, %p69
      %s72 = sadd.s32 %s71, 1
      %p75 = scmp.eq.s32.totalorder %s16, 1
      %p76 = scmp.ne.s32.totalorder %s71, %s73
      %p77 = scmp.eq.s32.totalorder %s16, 0
      %p78 = por %p76, %p77
      %p79 = scmp.ne.s32.totalorder %s71, %s73
      %p80 = scmp.eq.s32.totalorder %s21, 1
      %p81 = por %p79, %p80
      %p82 = scmp.ne.s32.totalorder %s73, %s74
      %p83 = scmp.eq.s32.totalorder %s21, 0
      %p84 = por %p82, %p83
      %p85 = scmp.ne.s32.totalorder %s73, %s74
      %p86 = scmp.eq.s32.totalorder %s22, 1
      %p87 = por %p85, %p86
      %p89 = scmp.ne.s32.totalorder %s74, %s88
      %p90 = scmp.eq.s32.totalorder %s22, 0
      %p91 = por %p89, %p90
      %s92 = ssub.s32 %s16, %s23
      %p93 = scmp.eq.s32.totalorder %s92, 0
      %s95 = sadd.s32 %s94, 1
      %s96 = scalar_select %p93, %s94, %s95
      %p99 = pneg %p93
      %p100 = scmp.eq.s32.totalorder %s16, 1
      %p101 = por %p99, %p100
      %p102 = scmp.ne.s32.totalorder %s94, %s97
      %p103 = scmp.eq.s32.totalorder %s16, 0
      %p104 = por %p102, %p103
      %p105 = scmp.ne.s32.totalorder %s94, %s97
      %p106 = scmp.eq.s32.totalorder %s21, 1
      %p107 = por %p105, %p106
      %p108 = scmp.ne.s32.totalorder %s97, %s98
      %p109 = scmp.eq.s32.totalorder %s21, 0
      %p110 = por %p108, %p109
      %p111 = scmp.ne.s32.totalorder %s97, %s98
      %p112 = scmp.eq.s32.totalorder %s22, 1
      %p113 = por %p111, %p112
      %p115 = scmp.ne.s32.totalorder %s98, %s114
      %p116 = scmp.eq.s32.totalorder %s22, 0
      %p117 = por %p115, %p116
      %p118 = scmp.le.s32.totalorder 1, %s16
      %p119 = scmp.lt.s32.totalorder %s16, 3
      %p120 = pnand %p118, %p119
      %p121 = pneg %p120
      // Predicated region
      $region9: #{conformer_encoder_forward.3} parent=5 // pred_check
        _
      $region10: #{conformer_encoder_forward.3} parent=5 // pred_check_branch
        %123 = sbr.rel (%p120) target = $region12
      $region11: #{conformer_encoder_forward.3} parent=5 // pred_region
        %s124 = ssub.s32 %s16, 1
        // Predicated region
        $region13: #{conformer_encoder_forward.3} parent=11 // pred_check
          %p125 = pneg %p63
        $region14: #{conformer_encoder_forward.3} parent=11 // pred_check_branch
          %127 = sbr.rel (%p125) target = $region16
        $region15: #{conformer_encoder_forward.3} parent=11 // pred_region
          %s129 = ssub.s32 512, 512
          %130 = vsyncadd [#allocation6], %s129
          %s131 = sshll.u32 [#allocation5], 4
          %s132 = int_to_ptr.vmem [resolvable:$true] %s131
          %137 = dma.hbm_to_vmem [thread:$0]  %s1, 512, %s132, [#allocation6], 64, 64, 4
        $region16: #{conformer_encoder_forward.3} parent=11 // pred_fallthru
          _
        // Predicated region
        $region17: #{conformer_encoder_forward.3} parent=11 // pred_check
          %p138 = pneg %p84
        $region18: #{conformer_encoder_forward.3} parent=11 // pred_check_branch
          %140 = sbr.rel (%p138) target = $region20
        $region19: #{conformer_encoder_forward.3} parent=11 // pred_region
          %s142 = ssub.s32 16, 16
          %143 = vsyncadd [#allocation6], %s142
          %s145 = sshll.u32 [#allocation7], 4
          %s146 = int_to_ptr.vmem [resolvable:$true] %s145
          %148 = dma.hbm_to_vmem [thread:$0]  %s2, 16, %s146, [#allocation6]
        $region20: #{conformer_encoder_forward.3} parent=11 // pred_fallthru
          _
      $region12: #{conformer_encoder_forward.3} parent=5 // pred_fallthru
        _
      %p149 = scmp.lt.s32.totalorder %s16, 2
      // Predicated region
      $region21: #{conformer_encoder_forward.3} parent=5 // pred_check
        %p150 = pneg %p149
      $region22: #{conformer_encoder_forward.3} parent=5 // pred_check_branch
        %152 = sbr.rel (%p150) target = $region24
      $region23: #{conformer_encoder_forward.3} parent=5 // pred_region
        // Predicated region
        $region25: #{conformer_encoder_forward.3} parent=23 // pred_check
          %p153 = pneg %p36
        $region26: #{conformer_encoder_forward.3} parent=23 // pred_check_branch
          %155 = sbr.rel (%p153) target = $region28
        $region27: #{conformer_encoder_forward.3} parent=23 // pred_region
          %s156 = sand.u32 %s26, 1
          %s157 = scalar_lea.sflag [#allocation3], %s156
          %s158 = sand.u32 %s26, 1
          %s159 = smul.addr %s158, 16
          %s160 = scalar_lea.vmem [#allocation2], %s159
          %s162 = ssub.s32 256, 256
          %163 = vsyncadd %s157, %s162
          %s164 = smul.addr %s16, 2
          %s165 = smul.addr %s164, 128
          %s166 = scalar_lea.hbm %s0, %s165
          %s167 = sshll.u32 %s160, 4
          %s168 = int_to_ptr.vmem [resolvable:$true] %s167
          %173 = dma.hbm_to_vmem [thread:$0]  %s166, 256, %s168, %s157, 128, 128, 8
        $region28: #{conformer_encoder_forward.3} parent=23 // pred_fallthru
          _
      $region24: #{conformer_encoder_forward.3} parent=5 // pred_fallthru
        _
      %p174 = scmp.le.s32.totalorder 1, %s16
      %p175 = scmp.lt.s32.totalorder %s16, 3
      %p176 = pnand %p174, %p175
      %p177 = pneg %p176
      // Predicated region
      $region29: #{conformer_encoder_forward.3} parent=5 // pred_check
        _
      $region30: #{conformer_encoder_forward.3} parent=5 // pred_check_branch
        %179 = sbr.rel (%p176) target = $region32
      $region31: #{conformer_encoder_forward.3} parent=5 // pred_region
        %s180 = ssub.s32 %s16, 1
        %s181 = sand.u32 %s29, 1
        %s182 = scalar_lea.sflag [#allocation3], %s181
        %s183 = sand.u32 %s29, 1
        %s184 = smul.addr %s183, 16
        %s185 = scalar_lea.vmem [#allocation2], %s184
        // Predicated region
        $region33: #{conformer_encoder_forward.3} parent=31 // pred_check
          %p186 = pneg %p42
        $region34: #{conformer_encoder_forward.3} parent=31 // pred_check_branch
          %188 = sbr.rel (%p186) target = $region36
        $region35: #{conformer_encoder_forward.3} parent=31 // pred_region
          %189 = dma.done %s182, 256
        $region36: #{conformer_encoder_forward.3} parent=31 // pred_fallthru
          _
        // Predicated region
        $region37: #{conformer_encoder_forward.3} parent=31 // pred_check
          %p190 = pneg %p63
        $region38: #{conformer_encoder_forward.3} parent=31 // pred_check_branch
          %192 = sbr.rel (%p190) target = $region40
        $region39: #{conformer_encoder_forward.3} parent=31 // pred_region
          %193 = dma.done [#allocation6], 512
        $region40: #{conformer_encoder_forward.3} parent=31 // pred_fallthru
          _
        // Predicated region
        $region41: #{conformer_encoder_forward.3} parent=31 // pred_check
          %p194 = pneg %p84
        $region42: #{conformer_encoder_forward.3} parent=31 // pred_check_branch
          %196 = sbr.rel (%p194) target = $region44
        $region43: #{conformer_encoder_forward.3} parent=31 // pred_region
          %197 = dma.done [#allocation6], 16
        $region44: #{conformer_encoder_forward.3} parent=31 // pred_fallthru
          _
        %s198 = sand.u32 %s29, 1
        %s199 = scalar_lea.sflag [#allocation3], %s198
        %s200 = sand.u32 %s29, 1
        %s201 = smul.addr %s200, 16
        %s202 = scalar_lea.vmem [#allocation2], %s201
        %p203 = pneg %p42
        %p204 = pneg %p39
        %p205 = pneg %p63
        %p206 = pneg %p60
        %p207 = pneg %p84
        %p208 = pneg %p81
        %p209 = pneg %p110
        %p210 = pneg %p107
        %s211 = sand.u32 %s97, 1
        %s212 = scalar_lea.sflag [#allocation4], %s211
        %s213 = sand.u32 %s97, 1
        %s214 = smul.addr %s213, 8
        %s215 = scalar_lea.vmem [#allocation8], %s214
        %v217 = vld [vmem:[%s185] sm:$0xff]
        %v218 = vld [vmem:[%s185 + $0x8] sm:$0xff]
        %v219 = vld [vmem:[#allocation5] sm:$0xf]
        %v220 = vld [vmem:[#allocation5 + $0x4] sm:$0xf]
        %v221 = vld [vmem:[#allocation5 + $0x8] sm:$0xf]
        %v222 = vld [vmem:[#allocation5 + $0xc] sm:$0xf]
        %v223 = vld [vmem:[#allocation5 + $0x10] sm:$0xf]
        %v224 = vld [vmem:[#allocation5 + $0x14] sm:$0xf]
        %v225 = vld [vmem:[#allocation5 + $0x18] sm:$0xf]
        %v226 = vld [vmem:[#allocation5 + $0x1c] sm:$0xf]
        %v227 = vpack.c.bf16 %v218, %v217
        %v228 = vld [vmem:[#allocation7] sm:$0x1]
        %v230 = vlaneseq
        %v231 = vshrl.u32 %v230, 7
        %v232 = vsub.s32 0, %v231
        %v233 = vrot.slane %v228, %v232
        %v243 = vunpack.c.l.b16 %v219
        %v244 = vunpack.c.l.b16 %v220
        %v245 = vunpack.c.l.b16 %v221
        %v246 = vunpack.c.l.b16 %v222
        %v247 = vunpack.c.l.b16 %v223
        %v248 = vunpack.c.l.b16 %v224
        %v249 = vunpack.c.l.b16 %v225
        %v250 = vunpack.c.l.b16 %v226
        %v251 = vpack.c.b16 %v244, %v243
        %v252 = vpack.c.b16 %v246, %v245
        %v253 = vpack.c.b16 %v248, %v247
        %v254 = vpack.c.b16 %v250, %v249
        %vm259 = vcmask 523264
        %v261 = vsel %vm259, %v227, 0
        %263 = vmatprep.subr.bf16.mxu0 0
        %264 = vmatpush1.bf16.msra.mxu0 %v251
        %265 = vmatprep.subr.bf16.mxu0 0
        %266 = vmatpush1.bf16.msra.mxu0 %v252
        %267 = vmatprep.subr.bf16.mxu0 0
        %268 = vmatpush1.bf16.msra.mxu0 %v253
        %269 = vmatprep.subr.bf16.mxu0 0
        %270 = vmatpush1.bf16.msra.mxu0 %v254
        %271 = vmatprep.subr.bf16.mxu0 0
        %272 = vmatpush1.bf16.msra.mxu0 0
        %273 = vmatprep.subr.bf16.mxu0 0
        %274 = vmatpush1.bf16.msra.mxu0 0
        %275 = vmatprep.subr.bf16.mxu0 0
        %276 = vmatpush1.bf16.msra.mxu0 0
        %277 = vmatprep.subr.bf16.mxu0 0
        %278 = vmatpush1.bf16.msra.mxu0 0
        %279 = vmatprep.subr.bf16.mxu0 0
        %280 = vmatpush1.bf16.msra.mxu0 0
        %281 = vmatprep.subr.bf16.mxu0 0
        %282 = vmatpush1.bf16.msra.mxu0 0
        %283 = vmatprep.subr.bf16.mxu0 0
        %284 = vmatpush1.bf16.msra.mxu0 0
        %285 = vmatprep.subr.bf16.mxu0 0
        %286 = vmatpush1.bf16.msra.mxu0 0
        %287 = vmatprep.subr.bf16.mxu0 0
        %288 = vmatpush1.bf16.msra.mxu0 0
        %289 = vmatprep.subr.bf16.mxu0 0
        %290 = vmatpush1.bf16.msra.mxu0 0
        %291 = vmatprep.subr.bf16.mxu0 0
        %292 = vmatpush1.bf16.msra.mxu0 0
        %293 = vmatprep.subr.bf16.mxu0 0
        %294 = vmatpush1.bf16.msra.mxu0 0
        %295 = vmatprep.mubr.bf16.mxu0 0
        %296 = vmatmul.mubr.bf16.gmra.mrb[0].mxu0 %v261
        %v297 = vpop.f32.mrb[0].mxu0
        %v298 = vadd.f32 %v233, %v297
        %v299 = vpop.f32.mrb[0].mxu0
        %v300 = vpop.f32.mrb[0].mxu0
        %v301 = vadd.f32 %v233, %v300
        %v302 = vpop.f32.mrb[0].mxu0
        %303 = vdwg.mxu0
        %v304 = vpack.c.bf16 %v301, %v298
        %v306 = vunpack.c.l.b16 %v304
        %v307 = vunpack.c.h.b16 %v304
        %v308 = vpack.c.b16 %v306, %v306
        %v309 = vpack.c.b16 %v307, %v307
        %312 = vst [vmem:[%s215] sm:$0xf] %v308
        %313 = vst [vmem:[%s215 + $0x4] sm:$0xf] %v309
        %s314 = sand.u32 %s97, 1
        %s315 = scalar_lea.sflag [#allocation4], %s314
        %s316 = sand.u32 %s97, 1
        %s317 = smul.addr %s316, 8
        %s318 = scalar_lea.vmem [#allocation8], %s317
        // Predicated region
        $region45: #{conformer_encoder_forward.3} parent=31 // pred_check
          %p319 = pneg %p107
        $region46: #{conformer_encoder_forward.3} parent=31 // pred_check_branch
          %321 = sbr.rel (%p319) target = $region48
        $region47: #{conformer_encoder_forward.3} parent=31 // pred_region
          %s323 = ssub.s32 128, 128
          %324 = vsyncadd %s315, %s323
          %s325 = smul.addr %s21, 2
          %s326 = smul.addr %s325, 64
          %s327 = scalar_lea.hbm %s3, %s326
          %s328 = sshll.u32 %s318, 4
          %s329 = int_to_ptr.vmem [resolvable:$true] %s328
          %334 = dma.vmem_to_hbm [thread:$0]  %s329, 128, %s327, %s315, 64, 64, 4
        $region48: #{conformer_encoder_forward.3} parent=31 // pred_fallthru
          _
      $region32: #{conformer_encoder_forward.3} parent=5 // pred_fallthru
        _
      %p335 = scmp.le.s32.totalorder 2, %s16
      // Predicated region
      $region49: #{conformer_encoder_forward.3} parent=5 // pred_check
        %p336 = pneg %p335
      $region50: #{conformer_encoder_forward.3} parent=5 // pred_check_branch
        %338 = sbr.rel (%p336) target = $region52
      $region51: #{conformer_encoder_forward.3} parent=5 // pred_region
        %s339 = ssub.s32 %s16, 2
        // Predicated region
        $region53: #{conformer_encoder_forward.3} parent=51 // pred_check
          %p340 = pneg %p113
        $region54: #{conformer_encoder_forward.3} parent=51 // pred_check_branch
          %342 = sbr.rel (%p340) target = $region56
        $region55: #{conformer_encoder_forward.3} parent=51 // pred_region
          %s343 = sand.u32 %s98, 1
          %s344 = scalar_lea.sflag [#allocation4], %s343
          %s345 = sand.u32 %s98, 1
          %s346 = smul.addr %s345, 8
          %s347 = scalar_lea.vmem [#allocation8], %s346
          %348 = dma.done %s344, 128
        $region56: #{conformer_encoder_forward.3} parent=51 // pred_fallthru
          _
      $region52: #{conformer_encoder_forward.3} parent=5 // pred_fallthru
        _
    $region6: #{conformer_encoder_forward.3} parent=1 // loop_footer
      %s20 = sadd.s32 1, %s16
    $region7: #{conformer_encoder_forward.3} parent=1 // loop_footer_branch
      %15 = sbr.rel target = $region3
    $region8: #{conformer_encoder_forward.3} parent=1 // loop_exit
      _
    %349 = vsyncpa [#allocation3], 1
    %s350 = scalar_lea.sflag [#allocation3], 1
    %351 = vsyncpa %s350, 1
    %352 = vsyncpa [#allocation6], 1
    %353 = vsyncpa [#allocation4], 1
    %s354 = scalar_lea.sflag [#allocation4], 1
    %355 = vsyncpa %s354, 1

// kernel: conformer_encoder_forward.4
$region0: #{conformer_encoder_forward.4}
  #allocation0 [shape = 'u32[]', space=smem, size = 0x4, offset = 0x4, fixed_abs, tag = 'smem constant byte address 0x4 - core index']
  #allocation1 [shape = 'u32[144,128]{1,0:T(1,128)}', space=vmem, size = 0x12000, scoped, tag = 'internal scratch']
  #allocation2 [shape = 'f32[32,128]{1,0:T(8,128)}', space=vmem, size = 0x4000, scoped, tag = 'scratch operand']
  %s0 = inlined_call_operand.smem [shape: u32[33], index: -1, kind: input, shape index: {}]
  %s1 = sld [smem:[%s0]]
  %s2 = scalar_lea.smem %s0, 1
  %s3 = sld [smem:[%s2]]
  %s4 = scalar_lea.smem %s0, 2
  %s5 = sld [smem:[%s4]]
  %s6 = scalar_lea.smem %s0, 3
  %s7 = sld [smem:[%s6]]
  %s8 = scalar_lea.smem %s0, 4
  %s9 = sld [smem:[%s8]]
  %s10 = scalar_lea.smem %s0, 5
  %s11 = sld [smem:[%s10]]
  %s12 = scalar_lea.smem %s0, 6
  %s13 = sld [smem:[%s12]]
  %s14 = scalar_lea.smem %s0, 7
  %s15 = sld [smem:[%s14]]
  %s16 = scalar_lea.smem %s0, 8
  %s17 = sld [smem:[%s16]]
  %s18 = scalar_lea.smem %s0, 9
  %s19 = sld [smem:[%s18]]
  %s20 = scalar_lea.smem %s0, 10
  %s21 = sld [smem:[%s20]]
  %s22 = scalar_lea.smem %s0, 11
  %s23 = sld [smem:[%s22]]
  %s24 = scalar_lea.smem %s0, 12
  %s25 = sld [smem:[%s24]]
  %s26 = scalar_lea.smem %s0, 13
  %s27 = sld [smem:[%s26]]
  %s28 = scalar_lea.smem %s0, 14
  %s29 = sld [smem:[%s28]]
  %s30 = scalar_lea.smem %s0, 15
  %s31 = sld [smem:[%s30]]
  %s32 = scalar_lea.smem %s0, 16
  %s33 = sld [smem:[%s32]]
  %s34 = scalar_lea.smem %s0, 17
  %s35 = sld [smem:[%s34]]
  %s36 = scalar_lea.smem %s0, 18
  %s37 = sld [smem:[%s36]]
  %s38 = scalar_lea.smem %s0, 19
  %s39 = sld [smem:[%s38]]
  %s40 = scalar_lea.smem %s0, 20
  %s41 = sld [smem:[%s40]]
  %s42 = scalar_lea.smem %s0, 21
  %s43 = sld [smem:[%s42]]
  %s44 = scalar_lea.smem %s0, 22
  %s45 = sld [smem:[%s44]]
  %s46 = scalar_lea.smem %s0, 23
  %s47 = sld [smem:[%s46]]
  %s48 = scalar_lea.smem %s0, 24
  %s49 = sld [smem:[%s48]]
  %s50 = scalar_lea.smem %s0, 25
  %s51 = sld [smem:[%s50]]
  %s52 = scalar_lea.smem %s0, 26
  %s53 = sld [smem:[%s52]]
  %s54 = scalar_lea.smem %s0, 27
  %s55 = sld [smem:[%s54]]
  %s56 = scalar_lea.smem %s0, 28
  %s57 = sld [smem:[%s56]]
  %s58 = scalar_lea.smem %s0, 29
  %s59 = sld [smem:[%s58]]
  %s60 = scalar_lea.smem %s0, 30
  %s61 = sld [smem:[%s60]]
  %s62 = scalar_lea.smem %s0, 31
  %s63 = sld [smem:[%s62]]
  %s64 = scalar_lea.smem %s0, 32
  %s65 = sld [smem:[%s64]]
  %s66 = sld [smem:[#allocation0]]
  $region289: #{conformer_encoder_forward.4} parent=0
    _
  %s68 = ssub.s32 1, %s66
  %s69 = scalar_select 0, %s68, %s66
  $region1: #{conformer_encoder_forward.4} parent=0
    #allocation3 [shape = 'u8[8192]{0}', space=vmem, size = 0x2000, scoped, tag = 'input window, operand 0']
    #allocation4 [shape = 's32[2]{0}', space=sflag, size = 0x8, scoped, tag = 'scoped memory for conformer_encoder_forward.4']
    #allocation5 [shape = 's32[2]{0}', space=sflag, size = 0x8, scoped, tag = 'scoped memory for conformer_encoder_forward.4']
    #allocation6 [shape = 'u8[1024]{0}', space=vmem, size = 0x400, scoped, tag = 'input window, operand 1']
    #allocation7 [shape = 's32[2]{0}', space=sflag, size = 0x8, scoped, tag = 'scoped memory for conformer_encoder_forward.4']
    #allocation8 [shape = 'u8[512]{0}', space=vmem, size = 0x400, scoped, tag = 'input window, operand 2, single buffered']
    #allocation9 [shape = 'u8[512]{0}', space=vmem, size = 0x400, scoped, tag = 'input window, operand 3, single buffered']
    #allocation10 [shape = 's32[1]{0}', space=sflag, size = 0x4, scoped, tag = 'scoped memory for conformer_encoder_forward.4']
    #allocation11 [shape = 'u8[131072]{0}', space=vmem, size = 0x20000, scoped, tag = 'input window, operand 4, single buffered']
    #allocation12 [shape = 'u8[2048]{0}', space=vmem, size = 0x800, scoped, tag = 'input window, operand 5, single buffered']
    #allocation13 [shape = 's32[1]{0}', space=sflag, size = 0x4, scoped, tag = 'scoped memory for conformer_encoder_forward.4']
    #allocation14 [shape = 'u8[131072]{0}', space=vmem, size = 0x20000, scoped, tag = 'input window, operand 6, single buffered']
    #allocation15 [shape = 'u8[512]{0}', space=vmem, size = 0x400, scoped, tag = 'input window, operand 7, single buffered']
    #allocation16 [shape = 's32[1]{0}', space=sflag, size = 0x4, scoped, tag = 'scoped memory for conformer_encoder_forward.4']
    #allocation17 [shape = 'u8[512]{0}', space=vmem, size = 0x400, scoped, tag = 'input window, operand 8, single buffered']
    #allocation18 [shape = 'u8[512]{0}', space=vmem, size = 0x400, scoped, tag = 'input window, operand 9, single buffered']
    #allocation19 [shape = 's32[1]{0}', space=sflag, size = 0x4, scoped, tag = 'scoped memory for conformer_encoder_forward.4']
    #allocation20 [shape = 'u8[65536]{0}', space=vmem, size = 0x10000, scoped, tag = 'input window, operand 10, single buffered']
    #allocation21 [shape = 'u8[1024]{0}', space=vmem, size = 0x400, scoped, tag = 'input window, operand 11, single buffered']
    #allocation22 [shape = 's32[1]{0}', space=sflag, size = 0x4, scoped, tag = 'scoped memory for conformer_encoder_forward.4']
    #allocation23 [shape = 'u8[4096]{0}', space=vmem, size = 0x1000, scoped, tag = 'input window, operand 12, single buffered']
    #allocation24 [shape = 'u8[512]{0}', space=vmem, size = 0x400, scoped, tag = 'input window, operand 13, single buffered']
    #allocation25 [shape = 's32[1]{0}', space=sflag, size = 0x4, scoped, tag = 'scoped memory for conformer_encoder_forward.4']
    #allocation26 [shape = 'u8[512]{0}', space=vmem, size = 0x400, scoped, tag = 'input window, operand 14, single buffered']
    #allocation27 [shape = 'u8[512]{0}', space=vmem, size = 0x400, scoped, tag = 'input window, operand 15, single buffered']
    #allocation28 [shape = 's32[1]{0}', space=sflag, size = 0x4, scoped, tag = 'scoped memory for conformer_encoder_forward.4']
    #allocation29 [shape = 'u8[32768]{0}', space=vmem, size = 0x8000, scoped, tag = 'input window, operand 16, single buffered']
    #allocation30 [shape = 'u8[512]{0}', space=vmem, size = 0x400, scoped, tag = 'input window, operand 17, single buffered']
    #allocation31 [shape = 's32[1]{0}', space=sflag, size = 0x4, scoped, tag = 'scoped memory for conformer_encoder_forward.4']
    #allocation32 [shape = 'u8[512]{0}', space=vmem, size = 0x400, scoped, tag = 'input window, operand 18, single buffered']
    #allocation33 [shape = 'u8[512]{0}', space=vmem, size = 0x400, scoped, tag = 'input window, operand 19, single buffered']
    #allocation34 [shape = 's32[1]{0}', space=sflag, size = 0x4, scoped, tag = 'scoped memory for conformer_encoder_forward.4']
    #allocation35 [shape = 'u8[98304]{0}', space=vmem, size = 0x18000, scoped, tag = 'input window, operand 20, single buffered']
    #allocation36 [shape = 'u8[1536]{0}', space=vmem, size = 0x800, scoped, tag = 'input window, operand 21, single buffered']
    #allocation37 [shape = 's32[1]{0}', space=sflag, size = 0x4, scoped, tag = 'scoped memory for conformer_encoder_forward.4']
    #allocation38 [shape = 'u8[32768]{0}', space=vmem, size = 0x8000, scoped, tag = 'input window, operand 22, single buffered']
    #allocation39 [shape = 'u8[512]{0}', space=vmem, size = 0x400, scoped, tag = 'input window, operand 23, single buffered']
    #allocation40 [shape = 's32[1]{0}', space=sflag, size = 0x4, scoped, tag = 'scoped memory for conformer_encoder_forward.4']
    #allocation41 [shape = 'u8[512]{0}', space=vmem, size = 0x400, scoped, tag = 'input window, operand 24, single buffered']
    #allocation42 [shape = 'u8[512]{0}', space=vmem, size = 0x400, scoped, tag = 'input window, operand 25, single buffered']
    #allocation43 [shape = 's32[1]{0}', space=sflag, size = 0x4, scoped, tag = 'scoped memory for conformer_encoder_forward.4']
    #allocation44 [shape = 'u8[131072]{0}', space=vmem, size = 0x20000, scoped, tag = 'input window, operand 26, single buffered']
    #allocation45 [shape = 'u8[2048]{0}', space=vmem, size = 0x800, scoped, tag = 'input window, operand 27, single buffered']
    #allocation46 [shape = 's32[1]{0}', space=sflag, size = 0x4, scoped, tag = 'scoped memory for conformer_encoder_forward.4']
    #allocation47 [shape = 'u8[131072]{0}', space=vmem, size = 0x20000, scoped, tag = 'input window, operand 28, single buffered']
    #allocation48 [shape = 'u8[512]{0}', space=vmem, size = 0x400, scoped, tag = 'input window, operand 29, single buffered']
    #allocation49 [shape = 's32[1]{0}', space=sflag, size = 0x4, scoped, tag = 'scoped memory for conformer_encoder_forward.4']
    #allocation50 [shape = 'u8[512]{0}', space=vmem, size = 0x400, scoped, tag = 'input window, operand 30, single buffered']
    #allocation51 [shape = 'u8[512]{0}', space=vmem, size = 0x400, scoped, tag = 'input window, operand 31, single buffered']
    #allocation52 [shape = 's32[1]{0}', space=sflag, size = 0x4, scoped, tag = 'scoped memory for conformer_encoder_forward.4']
    #allocation53 [shape = 'u8[8192]{0}', space=vmem, size = 0x2000, scoped, tag = 'output window, operand 0']
    %70 = vsyncpa [#allocation4], 0
    %s71 = scalar_lea.sflag [#allocation4], 1
    %72 = vsyncpa %s71, 0
    %73 = vsyncpa [#allocation7], 0
    %s74 = scalar_lea.sflag [#allocation7], 1
    %75 = vsyncpa %s74, 0
    %76 = vsyncpa [#allocation10], 0
    %77 = vsyncpa [#allocation13], 0
    %78 = vsyncpa [#allocation16], 0
    %79 = vsyncpa [#allocation19], 0
    %80 = vsyncpa [#allocation22], 0
    %81 = vsyncpa [#allocation25], 0
    %82 = vsyncpa [#allocation28], 0
    %83 = vsyncpa [#allocation31], 0
    %84 = vsyncpa [#allocation34], 0
    %85 = vsyncpa [#allocation37], 0
    %86 = vsyncpa [#allocation40], 0
    %87 = vsyncpa [#allocation43], 0
    %88 = vsyncpa [#allocation46], 0
    %89 = vsyncpa [#allocation49], 0
    %90 = vsyncpa [#allocation52], 0
    %91 = vsyncpa [#allocation5], 0
    %s92 = scalar_lea.sflag [#allocation5], 1
    %93 = vsyncpa %s92, 0
    loop: start=0, step=1, limit=4
    $region2: #{conformer_encoder_forward.4} parent=1 // loop_pre_header
      _
    $region3: #{conformer_encoder_forward.4} parent=1 // loop_header
      %s95 = sphi 0, %s99
      %p96 = scmp.ge.s32.totalorder %s95, 4
      %s105 = sphi 0, %s107
      %s108 = sphi 0, %s105
      %s109 = sphi 0, %s108
      %s125 = sphi 0, %s109
      %s131 = sphi 0, %s133
      %s134 = sphi 0, %s131
      %s135 = sphi 0, %s134
      %s151 = sphi 0, %s135
      %s155 = sphi 0, %s155
      %s157 = sphi 0, %s155
      %s158 = sphi 0, %s157
      %s172 = sphi 0, %s158
      %s176 = sphi 0, %s176
      %s178 = sphi 0, %s176
      %s179 = sphi 0, %s178
      %s193 = sphi 0, %s179
      %s197 = sphi 0, %s197
      %s199 = sphi 0, %s197
      %s200 = sphi 0, %s199
      %s214 = sphi 0, %s200
      %s218 = sphi 0, %s218
      %s220 = sphi 0, %s218
      %s221 = sphi 0, %s220
      %s235 = sphi 0, %s221
      %s239 = sphi 0, %s239
      %s241 = sphi 0, %s239
      %s242 = sphi 0, %s241
      %s256 = sphi 0, %s242
      %s260 = sphi 0, %s260
      %s262 = sphi 0, %s260
      %s263 = sphi 0, %s262
      %s277 = sphi 0, %s263
      %s281 = sphi 0, %s281
      %s283 = sphi 0, %s281
      %s284 = sphi 0, %s283
      %s298 = sphi 0, %s284
      %s302 = sphi 0, %s302
      %s304 = sphi 0, %s302
      %s305 = sphi 0, %s304
      %s319 = sphi 0, %s305
      %s323 = sphi 0, %s323
      %s325 = sphi 0, %s323
      %s326 = sphi 0, %s325
      %s340 = sphi 0, %s326
      %s344 = sphi 0, %s344
      %s346 = sphi 0, %s344
      %s347 = sphi 0, %s346
      %s361 = sphi 0, %s347
      %s365 = sphi 0, %s365
      %s367 = sphi 0, %s365
      %s368 = sphi 0, %s367
      %s382 = sphi 0, %s368
      %s386 = sphi 0, %s386
      %s388 = sphi 0, %s386
      %s389 = sphi 0, %s388
      %s403 = sphi 0, %s389
      %s407 = sphi 0, %s407
      %s409 = sphi 0, %s407
      %s410 = sphi 0, %s409
      %s424 = sphi 0, %s410
      %s428 = sphi 0, %s428
      %s430 = sphi 0, %s428
      %s431 = sphi 0, %s430
      %s445 = sphi 0, %s431
      %s449 = sphi 0, %s449
      %s451 = sphi 0, %s449
      %s452 = sphi 0, %s451
      %s466 = sphi 0, %s452
      %s470 = sphi 0, %s470
      %s472 = sphi 0, %s470
      %s473 = sphi 0, %s472
      %s487 = sphi 0, %s473
      %s491 = sphi 0, %s491
      %s493 = sphi 0, %s491
      %s494 = sphi 0, %s493
      %s508 = sphi 0, %s494
      %s512 = sphi 0, %s512
      %s514 = sphi 0, %s512
      %s515 = sphi 0, %s514
      %s529 = sphi 0, %s515
      %s533 = sphi 0, %s533
      %s535 = sphi 0, %s533
      %s536 = sphi 0, %s535
      %s550 = sphi 0, %s536
      %s554 = sphi 0, %s554
      %s556 = sphi 0, %s554
      %s557 = sphi 0, %s556
      %s571 = sphi 0, %s557
      %s575 = sphi 0, %s575
      %s577 = sphi 0, %s575
      %s578 = sphi 0, %s577
      %s592 = sphi 0, %s578
      %s596 = sphi 0, %s596
      %s598 = sphi 0, %s596
      %s599 = sphi 0, %s598
      %s613 = sphi 0, %s599
      %s617 = sphi 0, %s617
      %s619 = sphi 0, %s617
      %s620 = sphi 0, %s619
      %s634 = sphi 0, %s620
      %s638 = sphi 0, %s638
      %s640 = sphi 0, %s638
      %s641 = sphi 0, %s640
      %s655 = sphi 0, %s641
      %s659 = sphi 0, %s659
      %s661 = sphi 0, %s659
      %s662 = sphi 0, %s661
      %s676 = sphi 0, %s662
      %s680 = sphi 0, %s680
      %s682 = sphi 0, %s680
      %s683 = sphi 0, %s682
      %s697 = sphi 0, %s683
      %s701 = sphi 0, %s701
      %s703 = sphi 0, %s701
      %s704 = sphi 0, %s703
      %s718 = sphi 0, %s704
      %s722 = sphi 0, %s722
      %s724 = sphi 0, %s722
      %s725 = sphi 0, %s724
      %s739 = sphi 0, %s725
      %s743 = sphi 0, %s743
      %s745 = sphi 0, %s743
      %s746 = sphi 0, %s745
      %s760 = sphi 0, %s746
      %s764 = sphi 0, %s764
      %s766 = sphi 0, %s764
      %s767 = sphi 0, %s766
      %s781 = sphi 0, %s767
      %s787 = sphi 0, %s789
      %s790 = sphi 0, %s787
      %s791 = sphi 0, %s790
      %s807 = sphi 0, %s791
    $region4: #{conformer_encoder_forward.4} parent=1 // loop_header_branch
      %98 = sbr.rel (%p96) target = $region8
    $region5: #{conformer_encoder_forward.4} parent=1 // loop_body
      %s100 = ssub.s32 %s95, 1
      %s101 = ssub.s32 %s95, 2
      %s102 = sadd.s32 %s95, 1
      %s103 = ssub.s32 %s95, %s102
      %p104 = scmp.eq.s32.totalorder %s103, 0
      %s106 = sadd.s32 %s105, 1
      %s107 = scalar_select %p104, %s105, %s106
      %p110 = pneg %p104
      %p111 = scmp.eq.s32.totalorder %s95, 1
      %p112 = por %p110, %p111
      %p113 = scmp.ne.s32.totalorder %s105, %s108
      %p114 = scmp.eq.s32.totalorder %s95, 0
      %p115 = por %p113, %p114
      %p116 = scmp.ne.s32.totalorder %s105, %s108
      %p117 = scmp.eq.s32.totalorder %s100, 1
      %p118 = por %p116, %p117
      %p119 = scmp.ne.s32.totalorder %s108, %s109
      %p120 = scmp.eq.s32.totalorder %s100, 0
      %p121 = por %p119, %p120
      %p122 = scmp.ne.s32.totalorder %s108, %s109
      %p123 = scmp.eq.s32.totalorder %s101, 1
      %p124 = por %p122, %p123
      %p126 = scmp.ne.s32.totalorder %s109, %s125
      %p127 = scmp.eq.s32.totalorder %s101, 0
      %p128 = por %p126, %p127
      %s129 = ssub.s32 %s95, %s102
      %p130 = scmp.eq.s32.totalorder %s129, 0
      %s132 = sadd.s32 %s131, 1
      %s133 = scalar_select %p130, %s131, %s132
      %p136 = pneg %p130
      %p137 = scmp.eq.s32.totalorder %s95, 1
      %p138 = por %p136, %p137
      %p139 = scmp.ne.s32.totalorder %s131, %s134
      %p140 = scmp.eq.s32.totalorder %s95, 0
      %p141 = por %p139, %p140
      %p142 = scmp.ne.s32.totalorder %s131, %s134
      %p143 = scmp.eq.s32.totalorder %s100, 1
      %p144 = por %p142, %p143
      %p145 = scmp.ne.s32.totalorder %s134, %s135
      %p146 = scmp.eq.s32.totalorder %s100, 0
      %p147 = por %p145, %p146
      %p148 = scmp.ne.s32.totalorder %s134, %s135
      %p149 = scmp.eq.s32.totalorder %s101, 1
      %p150 = por %p148, %p149
      %p152 = scmp.ne.s32.totalorder %s135, %s151
      %p153 = scmp.eq.s32.totalorder %s101, 0
      %p154 = por %p152, %p153
      %s156 = sadd.s32 %s155, 1
      %p159 = scmp.eq.s32.totalorder %s95, 1
      %p160 = scmp.ne.s32.totalorder %s155, %s157
      %p161 = scmp.eq.s32.totalorder %s95, 0
      %p162 = por %p160, %p161
      %p163 = scmp.ne.s32.totalorder %s155, %s157
      %p164 = scmp.eq.s32.totalorder %s100, 1
      %p165 = por %p163, %p164
      %p166 = scmp.ne.s32.totalorder %s157, %s158
      %p167 = scmp.eq.s32.totalorder %s100, 0
      %p168 = por %p166, %p167
      %p169 = scmp.ne.s32.totalorder %s157, %s158
      %p170 = scmp.eq.s32.totalorder %s101, 1
      %p171 = por %p169, %p170
      %p173 = scmp.ne.s32.totalorder %s158, %s172
      %p174 = scmp.eq.s32.totalorder %s101, 0
      %p175 = por %p173, %p174
      %s177 = sadd.s32 %s176, 1
      %p180 = scmp.eq.s32.totalorder %s95, 1
      %p181 = scmp.ne.s32.totalorder %s176, %s178
      %p182 = scmp.eq.s32.totalorder %s95, 0
      %p183 = por %p181, %p182
      %p184 = scmp.ne.s32.totalorder %s176, %s178
      %p185 = scmp.eq.s32.totalorder %s100, 1
      %p186 = por %p184, %p185
      %p187 = scmp.ne.s32.totalorder %s178, %s179
      %p188 = scmp.eq.s32.totalorder %s100, 0
      %p189 = por %p187, %p188
      %p190 = scmp.ne.s32.totalorder %s178, %s179
      %p191 = scmp.eq.s32.totalorder %s101, 1
      %p192 = por %p190, %p191
      %p194 = scmp.ne.s32.totalorder %s179, %s193
      %p195 = scmp.eq.s32.totalorder %s101, 0
      %p196 = por %p194, %p195
      %s198 = sadd.s32 %s197, 1
      %p201 = scmp.eq.s32.totalorder %s95, 1
      %p202 = scmp.ne.s32.totalorder %s197, %s199
      %p203 = scmp.eq.s32.totalorder %s95, 0
      %p204 = por %p202, %p203
      %p205 = scmp.ne.s32.totalorder %s197, %s199
      %p206 = scmp.eq.s32.totalorder %s100, 1
      %p207 = por %p205, %p206
      %p208 = scmp.ne.s32.totalorder %s199, %s200
      %p209 = scmp.eq.s32.totalorder %s100, 0
      %p210 = por %p208, %p209
      %p211 = scmp.ne.s32.totalorder %s199, %s200
      %p212 = scmp.eq.s32.totalorder %s101, 1
      %p213 = por %p211, %p212
      %p215 = scmp.ne.s32.totalorder %s200, %s214
      %p216 = scmp.eq.s32.totalorder %s101, 0
      %p217 = por %p215, %p216
      %s219 = sadd.s32 %s218, 1
      %p222 = scmp.eq.s32.totalorder %s95, 1
      %p223 = scmp.ne.s32.totalorder %s218, %s220
      %p224 = scmp.eq.s32.totalorder %s95, 0
      %p225 = por %p223, %p224
      %p226 = scmp.ne.s32.totalorder %s218, %s220
      %p227 = scmp.eq.s32.totalorder %s100, 1
      %p228 = por %p226, %p227
      %p229 = scmp.ne.s32.totalorder %s220, %s221
      %p230 = scmp.eq.s32.totalorder %s100, 0
      %p231 = por %p229, %p230
      %p232 = scmp.ne.s32.totalorder %s220, %s221
      %p233 = scmp.eq.s32.totalorder %s101, 1
      %p234 = por %p232, %p233
      %p236 = scmp.ne.s32.totalorder %s221, %s235
      %p237 = scmp.eq.s32.totalorder %s101, 0
      %p238 = por %p236, %p237
      %s240 = sadd.s32 %s239, 1
      %p243 = scmp.eq.s32.totalorder %s95, 1
      %p244 = scmp.ne.s32.totalorder %s239, %s241
      %p245 = scmp.eq.s32.totalorder %s95, 0
      %p246 = por %p244, %p245
      %p247 = scmp.ne.s32.totalorder %s239, %s241
      %p248 = scmp.eq.s32.totalorder %s100, 1
      %p249 = por %p247, %p248
      %p250 = scmp.ne.s32.totalorder %s241, %s242
      %p251 = scmp.eq.s32.totalorder %s100, 0
      %p252 = por %p250, %p251
      %p253 = scmp.ne.s32.totalorder %s241, %s242
      %p254 = scmp.eq.s32.totalorder %s101, 1
      %p255 = por %p253, %p254
      %p257 = scmp.ne.s32.totalorder %s242, %s256
      %p258 = scmp.eq.s32.totalorder %s101, 0
      %p259 = por %p257, %p258
      %s261 = sadd.s32 %s260, 1
      %p264 = scmp.eq.s32.totalorder %s95, 1
      %p265 = scmp.ne.s32.totalorder %s260, %s262
      %p266 = scmp.eq.s32.totalorder %s95, 0
      %p267 = por %p265, %p266
      %p268 = scmp.ne.s32.totalorder %s260, %s262
      %p269 = scmp.eq.s32.totalorder %s100, 1
      %p270 = por %p268, %p269
      %p271 = scmp.ne.s32.totalorder %s262, %s263
      %p272 = scmp.eq.s32.totalorder %s100, 0
      %p273 = por %p271, %p272
      %p274 = scmp.ne.s32.totalorder %s262, %s263
      %p275 = scmp.eq.s32.totalorder %s101, 1
      %p276 = por %p274, %p275
      %p278 = scmp.ne.s32.totalorder %s263, %s277
      %p279 = scmp.eq.s32.totalorder %s101, 0
      %p280 = por %p278, %p279
      %s282 = sadd.s32 %s281, 1
      %p285 = scmp.eq.s32.totalorder %s95, 1
      %p286 = scmp.ne.s32.totalorder %s281, %s283
      %p287 = scmp.eq.s32.totalorder %s95, 0
      %p288 = por %p286, %p287
      %p289 = scmp.ne.s32.totalorder %s281, %s283
      %p290 = scmp.eq.s32.totalorder %s100, 1
      %p291 = por %p289, %p290
      %p292 = scmp.ne.s32.totalorder %s283, %s284
      %p293 = scmp.eq.s32.totalorder %s100, 0
      %p294 = por %p292, %p293
      %p295 = scmp.ne.s32.totalorder %s283, %s284
      %p296 = scmp.eq.s32.totalorder %s101, 1
      %p297 = por %p295, %p296
      %p299 = scmp.ne.s32.totalorder %s284, %s298
      %p300 = scmp.eq.s32.totalorder %s101, 0
      %p301 = por %p299, %p300
      %s303 = sadd.s32 %s302, 1
      %p306 = scmp.eq.s32.totalorder %s95, 1
      %p307 = scmp.ne.s32.totalorder %s302, %s304
      %p308 = scmp.eq.s32.totalorder %s95, 0
      %p309 = por %p307, %p308
      %p310 = scmp.ne.s32.totalorder %s302, %s304
      %p311 = scmp.eq.s32.totalorder %s100, 1
      %p312 = por %p310, %p311
      %p313 = scmp.ne.s32.totalorder %s304, %s305
      %p314 = scmp.eq.s32.totalorder %s100, 0
      %p315 = por %p313, %p314
      %p316 = scmp.ne.s32.totalorder %s304, %s305
      %p317 = scmp.eq.s32.totalorder %s101, 1
      %p318 = por %p316, %p317
      %p320 = scmp.ne.s32.totalorder %s305, %s319
      %p321 = scmp.eq.s32.totalorder %s101, 0
      %p322 = por %p320, %p321
      %s324 = sadd.s32 %s323, 1
      %p327 = scmp.eq.s32.totalorder %s95, 1
      %p328 = scmp.ne.s32.totalorder %s323, %s325
      %p329 = scmp.eq.s32.totalorder %s95, 0
      %p330 = por %p328, %p329
      %p331 = scmp.ne.s32.totalorder %s323, %s325
      %p332 = scmp.eq.s32.totalorder %s100, 1
      %p333 = por %p331, %p332
      %p334 = scmp.ne.s32.totalorder %s325, %s326
      %p335 = scmp.eq.s32.totalorder %s100, 0
      %p336 = por %p334, %p335
      %p337 = scmp.ne.s32.totalorder %s325, %s326
      %p338 = scmp.eq.s32.totalorder %s101, 1
      %p339 = por %p337, %p338
      %p341 = scmp.ne.s32.totalorder %s326, %s340
      %p342 = scmp.eq.s32.totalorder %s101, 0
      %p343 = por %p341, %p342
      %s345 = sadd.s32 %s344, 1
      %p348 = scmp.eq.s32.totalorder %s95, 1
      %p349 = scmp.ne.s32.totalorder %s344, %s346
      %p350 = scmp.eq.s32.totalorder %s95, 0
      %p351 = por %p349, %p350
      %p352 = scmp.ne.s32.totalorder %s344, %s346
      %p353 = scmp.eq.s32.totalorder %s100, 1
      %p354 = por %p352, %p353
      %p355 = scmp.ne.s32.totalorder %s346, %s347
      %p356 = scmp.eq.s32.totalorder %s100, 0
      %p357 = por %p355, %p356
      %p358 = scmp.ne.s32.totalorder %s346, %s347
      %p359 = scmp.eq.s32.totalorder %s101, 1
      %p360 = por %p358, %p359
      %p362 = scmp.ne.s32.totalorder %s347, %s361
      %p363 = scmp.eq.s32.totalorder %s101, 0
      %p364 = por %p362, %p363
      %s366 = sadd.s32 %s365, 1
      %p369 = scmp.eq.s32.totalorder %s95, 1
      %p370 = scmp.ne.s32.totalorder %s365, %s367
      %p371 = scmp.eq.s32.totalorder %s95, 0
      %p372 = por %p370, %p371
      %p373 = scmp.ne.s32.totalorder %s365, %s367
      %p374 = scmp.eq.s32.totalorder %s100, 1
      %p375 = por %p373, %p374
      %p376 = scmp.ne.s32.totalorder %s367, %s368
      %p377 = scmp.eq.s32.totalorder %s100, 0
      %p378 = por %p376, %p377
      %p379 = scmp.ne.s32.totalorder %s367, %s368
      %p380 = scmp.eq.s32.totalorder %s101, 1
      %p381 = por %p379, %p380
      %p383 = scmp.ne.s32.totalorder %s368, %s382
      %p384 = scmp.eq.s32.totalorder %s101, 0
      %p385 = por %p383, %p384
      %s387 = sadd.s32 %s386, 1
      %p390 = scmp.eq.s32.totalorder %s95, 1
      %p391 = scmp.ne.s32.totalorder %s386, %s388
      %p392 = scmp.eq.s32.totalorder %s95, 0
      %p393 = por %p391, %p392
      %p394 = scmp.ne.s32.totalorder %s386, %s388
      %p395 = scmp.eq.s32.totalorder %s100, 1
      %p396 = por %p394, %p395
      %p397 = scmp.ne.s32.totalorder %s388, %s389
      %p398 = scmp.eq.s32.totalorder %s100, 0
      %p399 = por %p397, %p398
      %p400 = scmp.ne.s32.totalorder %s388, %s389
      %p401 = scmp.eq.s32.totalorder %s101, 1
      %p402 = por %p400, %p401
      %p404 = scmp.ne.s32.totalorder %s389, %s403
      %p405 = scmp.eq.s32.totalorder %s101, 0
      %p406 = por %p404, %p405
      %s408 = sadd.s32 %s407, 1
      %p411 = scmp.eq.s32.totalorder %s95, 1
      %p412 = scmp.ne.s32.totalorder %s407, %s409
      %p413 = scmp.eq.s32.totalorder %s95, 0
      %p414 = por %p412, %p413
      %p415 = scmp.ne.s32.totalorder %s407, %s409
      %p416 = scmp.eq.s32.totalorder %s100, 1
      %p417 = por %p415, %p416
      %p418 = scmp.ne.s32.totalorder %s409, %s410
      %p419 = scmp.eq.s32.totalorder %s100, 0
      %p420 = por %p418, %p419
      %p421 = scmp.ne.s32.totalorder %s409, %s410
      %p422 = scmp.eq.s32.totalorder %s101, 1
      %p423 = por %p421, %p422
      %p425 = scmp.ne.s32.totalorder %s410, %s424
      %p426 = scmp.eq.s32.totalorder %s101, 0
      %p427 = por %p425, %p426
      %s429 = sadd.s32 %s428, 1
      %p432 = scmp.eq.s32.totalorder %s95, 1
      %p433 = scmp.ne.s32.totalorder %s428, %s430
      %p434 = scmp.eq.s32.totalorder %s95, 0
      %p435 = por %p433, %p434
      %p436 = scmp.ne.s32.totalorder %s428, %s430
      %p437 = scmp.eq.s32.totalorder %s100, 1
      %p438 = por %p436, %p437
      %p439 = scmp.ne.s32.totalorder %s430, %s431
      %p440 = scmp.eq.s32.totalorder %s100, 0
      %p441 = por %p439, %p440
      %p442 = scmp.ne.s32.totalorder %s430, %s431
      %p443 = scmp.eq.s32.totalorder %s101, 1
      %p444 = por %p442, %p443
      %p446 = scmp.ne.s32.totalorder %s431, %s445
      %p447 = scmp.eq.s32.totalorder %s101, 0
      %p448 = por %p446, %p447
      %s450 = sadd.s32 %s449, 1
      %p453 = scmp.eq.s32.totalorder %s95, 1
      %p454 = scmp.ne.s32.totalorder %s449, %s451
      %p455 = scmp.eq.s32.totalorder %s95, 0
      %p456 = por %p454, %p455
      %p457 = scmp.ne.s32.totalorder %s449, %s451
      %p458 = scmp.eq.s32.totalorder %s100, 1
      %p459 = por %p457, %p458
      %p460 = scmp.ne.s32.totalorder %s451, %s452
      %p461 = scmp.eq.s32.totalorder %s100, 0
      %p462 = por %p460, %p461
      %p463 = scmp.ne.s32.totalorder %s451, %s452
      %p464 = scmp.eq.s32.totalorder %s101, 1
      %p465 = por %p463, %p464
      %p467 = scmp.ne.s32.totalorder %s452, %s466
      %p468 = scmp.eq.s32.totalorder %s101, 0
      %p469 = por %p467, %p468
      %s471 = sadd.s32 %s470, 1
      %p474 = scmp.eq.s32.totalorder %s95, 1
      %p475 = scmp.ne.s32.totalorder %s470, %s472
      %p476 = scmp.eq.s32.totalorder %s95, 0
      %p477 = por %p475, %p476
      %p478 = scmp.ne.s32.totalorder %s470, %s472
      %p479 = scmp.eq.s32.totalorder %s100, 1
      %p480 = por %p478, %p479
      %p481 = scmp.ne.s32.totalorder %s472, %s473
      %p482 = scmp.eq.s32.totalorder %s100, 0
      %p483 = por %p481, %p482
      %p484 = scmp.ne.s32.totalorder %s472, %s473
      %p485 = scmp.eq.s32.totalorder %s101, 1
      %p486 = por %p484, %p485
      %p488 = scmp.ne.s32.totalorder %s473, %s487
      %p489 = scmp.eq.s32.totalorder %s101, 0
      %p490 = por %p488, %p489
      %s492 = sadd.s32 %s491, 1
      %p495 = scmp.eq.s32.totalorder %s95, 1
      %p496 = scmp.ne.s32.totalorder %s491, %s493
      %p497 = scmp.eq.s32.totalorder %s95, 0
      %p498 = por %p496, %p497
      %p499 = scmp.ne.s32.totalorder %s491, %s493
      %p500 = scmp.eq.s32.totalorder %s100, 1
      %p501 = por %p499, %p500
      %p502 = scmp.ne.s32.totalorder %s493, %s494
      %p503 = scmp.eq.s32.totalorder %s100, 0
      %p504 = por %p502, %p503
      %p505 = scmp.ne.s32.totalorder %s493, %s494
      %p506 = scmp.eq.s32.totalorder %s101, 1
      %p507 = por %p505, %p506
      %p509 = scmp.ne.s32.totalorder %s494, %s508
      %p510 = scmp.eq.s32.totalorder %s101, 0
      %p511 = por %p509, %p510
      %s513 = sadd.s32 %s512, 1
      %p516 = scmp.eq.s32.totalorder %s95, 1
      %p517 = scmp.ne.s32.totalorder %s512, %s514
      %p518 = scmp.eq.s32.totalorder %s95, 0
      %p519 = por %p517, %p518
      %p520 = scmp.ne.s32.totalorder %s512, %s514
      %p521 = scmp.eq.s32.totalorder %s100, 1
      %p522 = por %p520, %p521
      %p523 = scmp.ne.s32.totalorder %s514, %s515
      %p524 = scmp.eq.s32.totalorder %s100, 0
      %p525 = por %p523, %p524
      %p526 = scmp.ne.s32.totalorder %s514, %s515
      %p527 = scmp.eq.s32.totalorder %s101, 1
      %p528 = por %p526, %p527
      %p530 = scmp.ne.s32.totalorder %s515, %s529
      %p531 = scmp.eq.s32.totalorder %s101, 0
      %p532 = por %p530, %p531
      %s534 = sadd.s32 %s533, 1
      %p537 = scmp.eq.s32.totalorder %s95, 1
      %p538 = scmp.ne.s32.totalorder %s533, %s535
      %p539 = scmp.eq.s32.totalorder %s95, 0
      %p540 = por %p538, %p539
      %p541 = scmp.ne.s32.totalorder %s533, %s535
      %p542 = scmp.eq.s32.totalorder %s100, 1
      %p543 = por %p541, %p542
      %p544 = scmp.ne.s32.totalorder %s535, %s536
      %p545 = scmp.eq.s32.totalorder %s100, 0
      %p546 = por %p544, %p545
      %p547 = scmp.ne.s32.totalorder %s535, %s536
      %p548 = scmp.eq.s32.totalorder %s101, 1
      %p549 = por %p547, %p548
      %p551 = scmp.ne.s32.totalorder %s536, %s550
      %p552 = scmp.eq.s32.totalorder %s101, 0
      %p553 = por %p551, %p552
      %s555 = sadd.s32 %s554, 1
      %p558 = scmp.eq.s32.totalorder %s95, 1
      %p559 = scmp.ne.s32.totalorder %s554, %s556
      %p560 = scmp.eq.s32.totalorder %s95, 0
      %p561 = por %p559, %p560
      %p562 = scmp.ne.s32.totalorder %s554, %s556
      %p563 = scmp.eq.s32.totalorder %s100, 1
      %p564 = por %p562, %p563
      %p565 = scmp.ne.s32.totalorder %s556, %s557
      %p566 = scmp.eq.s32.totalorder %s100, 0
      %p567 = por %p565, %p566
      %p568 = scmp.ne.s32.totalorder %s556, %s557
      %p569 = scmp.eq.s32.totalorder %s101, 1
      %p570 = por %p568, %p569
      %p572 = scmp.ne.s32.totalorder %s557, %s571
      %p573 = scmp.eq.s32.totalorder %s101, 0
      %p574 = por %p572, %p573
      %s576 = sadd.s32 %s575, 1
      %p579 = scmp.eq.s32.totalorder %s95, 1
      %p580 = scmp.ne.s32.totalorder %s575, %s577
      %p581 = scmp.eq.s32.totalorder %s95, 0
      %p582 = por %p580, %p581
      %p583 = scmp.ne.s32.totalorder %s575, %s577
      %p584 = scmp.eq.s32.totalorder %s100, 1
      %p585 = por %p583, %p584
      %p586 = scmp.ne.s32.totalorder %s577, %s578
      %p587 = scmp.eq.s32.totalorder %s100, 0
      %p588 = por %p586, %p587
      %p589 = scmp.ne.s32.totalorder %s577, %s578
      %p590 = scmp.eq.s32.totalorder %s101, 1
      %p591 = por %p589, %p590
      %p593 = scmp.ne.s32.totalorder %s578, %s592
      %p594 = scmp.eq.s32.totalorder %s101, 0
      %p595 = por %p593, %p594
      %s597 = sadd.s32 %s596, 1
      %p600 = scmp.eq.s32.totalorder %s95, 1
      %p601 = scmp.ne.s32.totalorder %s596, %s598
      %p602 = scmp.eq.s32.totalorder %s95, 0
      %p603 = por %p601, %p602
      %p604 = scmp.ne.s32.totalorder %s596, %s598
      %p605 = scmp.eq.s32.totalorder %s100, 1
      %p606 = por %p604, %p605
      %p607 = scmp.ne.s32.totalorder %s598, %s599
      %p608 = scmp.eq.s32.totalorder %s100, 0
      %p609 = por %p607, %p608
      %p610 = scmp.ne.s32.totalorder %s598, %s599
      %p611 = scmp.eq.s32.totalorder %s101, 1
      %p612 = por %p610, %p611
      %p614 = scmp.ne.s32.totalorder %s599, %s613
      %p615 = scmp.eq.s32.totalorder %s101, 0
      %p616 = por %p614, %p615
      %s618 = sadd.s32 %s617, 1
      %p621 = scmp.eq.s32.totalorder %s95, 1
      %p622 = scmp.ne.s32.totalorder %s617, %s619
      %p623 = scmp.eq.s32.totalorder %s95, 0
      %p624 = por %p622, %p623
      %p625 = scmp.ne.s32.totalorder %s617, %s619
      %p626 = scmp.eq.s32.totalorder %s100, 1
      %p627 = por %p625, %p626
      %p628 = scmp.ne.s32.totalorder %s619, %s620
      %p629 = scmp.eq.s32.totalorder %s100, 0
      %p630 = por %p628, %p629
      %p631 = scmp.ne.s32.totalorder %s619, %s620
      %p632 = scmp.eq.s32.totalorder %s101, 1
      %p633 = por %p631, %p632
      %p635 = scmp.ne.s32.totalorder %s620, %s634
      %p636 = scmp.eq.s32.totalorder %s101, 0
      %p637 = por %p635, %p636
      %s639 = sadd.s32 %s638, 1
      %p642 = scmp.eq.s32.totalorder %s95, 1
      %p643 = scmp.ne.s32.totalorder %s638, %s640
      %p644 = scmp.eq.s32.totalorder %s95, 0
      %p645 = por %p643, %p644
      %p646 = scmp.ne.s32.totalorder %s638, %s640
      %p647 = scmp.eq.s32.totalorder %s100, 1
      %p648 = por %p646, %p647
      %p649 = scmp.ne.s32.totalorder %s640, %s641
      %p650 = scmp.eq.s32.totalorder %s100, 0
      %p651 = por %p649, %p650
      %p652 = scmp.ne.s32.totalorder %s640, %s641
      %p653 = scmp.eq.s32.totalorder %s101, 1
      %p654 = por %p652, %p653
      %p656 = scmp.ne.s32.totalorder %s641, %s655
      %p657 = scmp.eq.s32.totalorder %s101, 0
      %p658 = por %p656, %p657
      %s660 = sadd.s32 %s659, 1
      %p663 = scmp.eq.s32.totalorder %s95, 1
      %p664 = scmp.ne.s32.totalorder %s659, %s661
      %p665 = scmp.eq.s32.totalorder %s95, 0
      %p666 = por %p664, %p665
      %p667 = scmp.ne.s32.totalorder %s659, %s661
      %p668 = scmp.eq.s32.totalorder %s100, 1
      %p669 = por %p667, %p668
      %p670 = scmp.ne.s32.totalorder %s661, %s662
      %p671 = scmp.eq.s32.totalorder %s100, 0
      %p672 = por %p670, %p671
      %p673 = scmp.ne.s32.totalorder %s661, %s662
      %p674 = scmp.eq.s32.totalorder %s101, 1
      %p675 = por %p673, %p674
      %p677 = scmp.ne.s32.totalorder %s662, %s676
      %p678 = scmp.eq.s32.totalorder %s101, 0
      %p679 = por %p677, %p678
      %s681 = sadd.s32 %s680, 1
      %p684 = scmp.eq.s32.totalorder %s95, 1
      %p685 = scmp.ne.s32.totalorder %s680, %s682
      %p686 = scmp.eq.s32.totalorder %s95, 0
      %p687 = por %p685, %p686
      %p688 = scmp.ne.s32.totalorder %s680, %s682
      %p689 = scmp.eq.s32.totalorder %s100, 1
      %p690 = por %p688, %p689
      %p691 = scmp.ne.s32.totalorder %s682, %s683
      %p692 = scmp.eq.s32.totalorder %s100, 0
      %p693 = por %p691, %p692
      %p694 = scmp.ne.s32.totalorder %s682, %s683
      %p695 = scmp.eq.s32.totalorder %s101, 1
      %p696 = por %p694, %p695
      %p698 = scmp.ne.s32.totalorder %s683, %s697
      %p699 = scmp.eq.s32.totalorder %s101, 0
      %p700 = por %p698, %p699
      %s702 = sadd.s32 %s701, 1
      %p705 = scmp.eq.s32.totalorder %s95, 1
      %p706 = scmp.ne.s32.totalorder %s701, %s703
      %p707 = scmp.eq.s32.totalorder %s95, 0
      %p708 = por %p706, %p707
      %p709 = scmp.ne.s32.totalorder %s701, %s703
      %p710 = scmp.eq.s32.totalorder %s100, 1
      %p711 = por %p709, %p710
      %p712 = scmp.ne.s32.totalorder %s703, %s704
      %p713 = scmp.eq.s32.totalorder %s100, 0
      %p714 = por %p712, %p713
      %p715 = scmp.ne.s32.totalorder %s703, %s704
      %p716 = scmp.eq.s32.totalorder %s101, 1
      %p717 = por %p715, %p716
      %p719 = scmp.ne.s32.totalorder %s704, %s718
      %p720 = scmp.eq.s32.totalorder %s101, 0
      %p721 = por %p719, %p720
      %s723 = sadd.s32 %s722, 1
      %p726 = scmp.eq.s32.totalorder %s95, 1
      %p727 = scmp.ne.s32.totalorder %s722, %s724
      %p728 = scmp.eq.s32.totalorder %s95, 0
      %p729 = por %p727, %p728
      %p730 = scmp.ne.s32.totalorder %s722, %s724
      %p731 = scmp.eq.s32.totalorder %s100, 1
      %p732 = por %p730, %p731
      %p733 = scmp.ne.s32.totalorder %s724, %s725
      %p734 = scmp.eq.s32.totalorder %s100, 0
      %p735 = por %p733, %p734
      %p736 = scmp.ne.s32.totalorder %s724, %s725
      %p737 = scmp.eq.s32.totalorder %s101, 1
      %p738 = por %p736, %p737
      %p740 = scmp.ne.s32.totalorder %s725, %s739
      %p741 = scmp.eq.s32.totalorder %s101, 0
      %p742 = por %p740, %p741
      %s744 = sadd.s32 %s743, 1
      %p747 = scmp.eq.s32.totalorder %s95, 1
      %p748 = scmp.ne.s32.totalorder %s743, %s745
      %p749 = scmp.eq.s32.totalorder %s95, 0
      %p750 = por %p748, %p749
      %p751 = scmp.ne.s32.totalorder %s743, %s745
      %p752 = scmp.eq.s32.totalorder %s100, 1
      %p753 = por %p751, %p752
      %p754 = scmp.ne.s32.totalorder %s745, %s746
      %p755 = scmp.eq.s32.totalorder %s100, 0
      %p756 = por %p754, %p755
      %p757 = scmp.ne.s32.totalorder %s745, %s746
      %p758 = scmp.eq.s32.totalorder %s101, 1
      %p759 = por %p757, %p758
      %p761 = scmp.ne.s32.totalorder %s746, %s760
      %p762 = scmp.eq.s32.totalorder %s101, 0
      %p763 = por %p761, %p762
      %s765 = sadd.s32 %s764, 1
      %p768 = scmp.eq.s32.totalorder %s95, 1
      %p769 = scmp.ne.s32.totalorder %s764, %s766
      %p770 = scmp.eq.s32.totalorder %s95, 0
      %p771 = por %p769, %p770
      %p772 = scmp.ne.s32.totalorder %s764, %s766
      %p773 = scmp.eq.s32.totalorder %s100, 1
      %p774 = por %p772, %p773
      %p775 = scmp.ne.s32.totalorder %s766, %s767
      %p776 = scmp.eq.s32.totalorder %s100, 0
      %p777 = por %p775, %p776
      %p778 = scmp.ne.s32.totalorder %s766, %s767
      %p779 = scmp.eq.s32.totalorder %s101, 1
      %p780 = por %p778, %p779
      %p782 = scmp.ne.s32.totalorder %s767, %s781
      %p783 = scmp.eq.s32.totalorder %s101, 0
      %p784 = por %p782, %p783
      %s785 = ssub.s32 %s95, %s102
      %p786 = scmp.eq.s32.totalorder %s785, 0
      %s788 = sadd.s32 %s787, 1
      %s789 = scalar_select %p786, %s787, %s788
      %p792 = pneg %p786
      %p793 = scmp.eq.s32.totalorder %s95, 1
      %p794 = por %p792, %p793
      %p795 = scmp.ne.s32.totalorder %s787, %s790
      %p796 = scmp.eq.s32.totalorder %s95, 0
      %p797 = por %p795, %p796
      %p798 = scmp.ne.s32.totalorder %s787, %s790
      %p799 = scmp.eq.s32.totalorder %s100, 1
      %p800 = por %p798, %p799
      %p801 = scmp.ne.s32.totalorder %s790, %s791
      %p802 = scmp.eq.s32.totalorder %s100, 0
      %p803 = por %p801, %p802
      %p804 = scmp.ne.s32.totalorder %s790, %s791
      %p805 = scmp.eq.s32.totalorder %s101, 1
      %p806 = por %p804, %p805
      %p808 = scmp.ne.s32.totalorder %s791, %s807
      %p809 = scmp.eq.s32.totalorder %s101, 0
      %p810 = por %p808, %p809
      %p811 = scmp.le.s32.totalorder 1, %s95
      %p812 = scmp.lt.s32.totalorder %s95, 3
      %p813 = pnand %p811, %p812
      %p814 = pneg %p813
      // Predicated region
      $region9: #{conformer_encoder_forward.4} parent=5 // pred_check
        _
      $region10: #{conformer_encoder_forward.4} parent=5 // pred_check_branch
        %816 = sbr.rel (%p813) target = $region12
      $region11: #{conformer_encoder_forward.4} parent=5 // pred_region
        %s817 = ssub.s32 %s95, 1
        // Predicated region
        $region13: #{conformer_encoder_forward.4} parent=11 // pred_check
          %p818 = pneg %p168
        $region14: #{conformer_encoder_forward.4} parent=11 // pred_check_branch
          %820 = sbr.rel (%p818) target = $region16
        $region15: #{conformer_encoder_forward.4} parent=11 // pred_region
          %s822 = ssub.s32 16, 16
          %823 = vsyncadd [#allocation7], %s822
          %s825 = sshll.u32 [#allocation8], 4
          %s826 = int_to_ptr.vmem [resolvable:$true] %s825
          %828 = dma.hbm_to_vmem [thread:$0]  %s5, 16, %s826, [#allocation7]
        $region16: #{conformer_encoder_forward.4} parent=11 // pred_fallthru
          _
        // Predicated region
        $region17: #{conformer_encoder_forward.4} parent=11 // pred_check
          %p829 = pneg %p189
        $region18: #{conformer_encoder_forward.4} parent=11 // pred_check_branch
          %831 = sbr.rel (%p829) target = $region20
        $region19: #{conformer_encoder_forward.4} parent=11 // pred_region
          %s833 = ssub.s32 16, 16
          %834 = vsyncadd [#allocation10], %s833
          %s836 = sshll.u32 [#allocation9], 4
          %s837 = int_to_ptr.vmem [resolvable:$true] %s836
          %839 = dma.hbm_to_vmem [thread:$0]  %s7, 16, %s837, [#allocation10]
        $region20: #{conformer_encoder_forward.4} parent=11 // pred_fallthru
          _
        // Predicated region
        $region21: #{conformer_encoder_forward.4} parent=11 // pred_check
          %p840 = pneg %p210
        $region22: #{conformer_encoder_forward.4} parent=11 // pred_check_branch
          %842 = sbr.rel (%p840) target = $region24
        $region23: #{conformer_encoder_forward.4} parent=11 // pred_region
          %s844 = ssub.s32 4096, 4096
          %845 = vsyncadd [#allocation10], %s844
          %s846 = sshll.u32 [#allocation11], 4
          %s847 = int_to_ptr.vmem [resolvable:$true] %s846
          %852 = dma.hbm_to_vmem [thread:$0]  %s9, 4096, %s847, [#allocation10], 256, 256, 16
        $region24: #{conformer_encoder_forward.4} parent=11 // pred_fallthru
          _
        // Predicated region
        $region25: #{conformer_encoder_forward.4} parent=11 // pred_check
          %p853 = pneg %p231
        $region26: #{conformer_encoder_forward.4} parent=11 // pred_check_branch
          %855 = sbr.rel (%p853) target = $region28
        $region27: #{conformer_encoder_forward.4} parent=11 // pred_region
          %s857 = ssub.s32 64, 64
          %858 = vsyncadd [#allocation13], %s857
          %s860 = sshll.u32 [#allocation12], 4
          %s861 = int_to_ptr.vmem [resolvable:$true] %s860
          %863 = dma.hbm_to_vmem [thread:$0]  %s11, 64, %s861, [#allocation13]
        $region28: #{conformer_encoder_forward.4} parent=11 // pred_fallthru
          _
        // Predicated region
        $region29: #{conformer_encoder_forward.4} parent=11 // pred_check
          %p864 = pneg %p252
        $region30: #{conformer_encoder_forward.4} parent=11 // pred_check_branch
          %866 = sbr.rel (%p864) target = $region32
        $region31: #{conformer_encoder_forward.4} parent=11 // pred_region
          %s868 = ssub.s32 4096, 4096
          %869 = vsyncadd [#allocation13], %s868
          %s870 = sshll.u32 [#allocation14], 4
          %s871 = int_to_ptr.vmem [resolvable:$true] %s870
          %876 = dma.hbm_to_vmem [thread:$0]  %s13, 4096, %s871, [#allocation13], 64, 64, 4
        $region32: #{conformer_encoder_forward.4} parent=11 // pred_fallthru
          _
        // Predicated region
        $region33: #{conformer_encoder_forward.4} parent=11 // pred_check
          %p877 = pneg %p273
        $region34: #{conformer_encoder_forward.4} parent=11 // pred_check_branch
          %879 = sbr.rel (%p877) target = $region36
        $region35: #{conformer_encoder_forward.4} parent=11 // pred_region
          %s881 = ssub.s32 16, 16
          %882 = vsyncadd [#allocation16], %s881
          %s884 = sshll.u32 [#allocation15], 4
          %s885 = int_to_ptr.vmem [resolvable:$true] %s884
          %887 = dma.hbm_to_vmem [thread:$0]  %s15, 16, %s885, [#allocation16]
        $region36: #{conformer_encoder_forward.4} parent=11 // pred_fallthru
          _
        // Predicated region
        $region37: #{conformer_encoder_forward.4} parent=11 // pred_check
          %p888 = pneg %p294
        $region38: #{conformer_encoder_forward.4} parent=11 // pred_check_branch
          %890 = sbr.rel (%p888) target = $region40
        $region39: #{conformer_encoder_forward.4} parent=11 // pred_region
          %s892 = ssub.s32 16, 16
          %893 = vsyncadd [#allocation16], %s892
          %s895 = sshll.u32 [#allocation17], 4
          %s896 = int_to_ptr.vmem [resolvable:$true] %s895
          %898 = dma.hbm_to_vmem [thread:$0]  %s17, 16, %s896, [#allocation16]
        $region40: #{conformer_encoder_forward.4} parent=11 // pred_fallthru
          _
        // Predicated region
        $region41: #{conformer_encoder_forward.4} parent=11 // pred_check
          %p899 = pneg %p315
        $region42: #{conformer_encoder_forward.4} parent=11 // pred_check_branch
          %901 = sbr.rel (%p899) target = $region44
        $region43: #{conformer_encoder_forward.4} parent=11 // pred_region
          %s903 = ssub.s32 16, 16
          %904 = vsyncadd [#allocation19], %s903
          %s906 = sshll.u32 [#allocation18], 4
          %s907 = int_to_ptr.vmem [resolvable:$true] %s906
          %909 = dma.hbm_to_vmem [thread:$0]  %s19, 16, %s907, [#allocation19]
        $region44: #{conformer_encoder_forward.4} parent=11 // pred_fallthru
          _
        // Predicated region
        $region45: #{conformer_encoder_forward.4} parent=11 // pred_check
          %p910 = pneg %p336
        $region46: #{conformer_encoder_forward.4} parent=11 // pred_check_branch
          %912 = sbr.rel (%p910) target = $region48
        $region47: #{conformer_encoder_forward.4} parent=11 // pred_region
          %s914 = ssub.s32 2048, 2048
          %915 = vsyncadd [#allocation19], %s914
          %s916 = sshll.u32 [#allocation20], 4
          %s917 = int_to_ptr.vmem [resolvable:$true] %s916
          %922 = dma.hbm_to_vmem [thread:$0]  %s21, 2048, %s917, [#allocation19], 128, 128, 8
        $region48: #{conformer_encoder_forward.4} parent=11 // pred_fallthru
          _
        // Predicated region
        $region49: #{conformer_encoder_forward.4} parent=11 // pred_check
          %p923 = pneg %p357
        $region50: #{conformer_encoder_forward.4} parent=11 // pred_check_branch
          %925 = sbr.rel (%p923) target = $region52
        $region51: #{conformer_encoder_forward.4} parent=11 // pred_region
          %s927 = ssub.s32 32, 32
          %928 = vsyncadd [#allocation22], %s927
          %s930 = sshll.u32 [#allocation21], 4
          %s931 = int_to_ptr.vmem [resolvable:$true] %s930
          %933 = dma.hbm_to_vmem [thread:$0]  %s23, 32, %s931, [#allocation22]
        $region52: #{conformer_encoder_forward.4} parent=11 // pred_fallthru
          _
        // Predicated region
        $region53: #{conformer_encoder_forward.4} parent=11 // pred_check
          %p934 = pneg %p378
        $region54: #{conformer_encoder_forward.4} parent=11 // pred_check_branch
          %936 = sbr.rel (%p934) target = $region56
        $region55: #{conformer_encoder_forward.4} parent=11 // pred_region
          %s938 = ssub.s32 128, 128
          %939 = vsyncadd [#allocation22], %s938
          %s941 = sshll.u32 [#allocation23], 4
          %s942 = int_to_ptr.vmem [resolvable:$true] %s941
          %944 = dma.hbm_to_vmem [thread:$0]  %s25, 128, %s942, [#allocation22]
        $region56: #{conformer_encoder_forward.4} parent=11 // pred_fallthru
          _
        // Predicated region
        $region57: #{conformer_encoder_forward.4} parent=11 // pred_check
          %p945 = pneg %p399
        $region58: #{conformer_encoder_forward.4} parent=11 // pred_check_branch
          %947 = sbr.rel (%p945) target = $region60
        $region59: #{conformer_encoder_forward.4} parent=11 // pred_region
          %s949 = ssub.s32 16, 16
          %950 = vsyncadd [#allocation25], %s949
          %s952 = sshll.u32 [#allocation24], 4
          %s953 = int_to_ptr.vmem [resolvable:$true] %s952
          %955 = dma.hbm_to_vmem [thread:$0]  %s27, 16, %s953, [#allocation25]
        $region60: #{conformer_encoder_forward.4} parent=11 // pred_fallthru
          _
        // Predicated region
        $region61: #{conformer_encoder_forward.4} parent=11 // pred_check
          %p956 = pneg %p420
        $region62: #{conformer_encoder_forward.4} parent=11 // pred_check_branch
          %958 = sbr.rel (%p956) target = $region64
        $region63: #{conformer_encoder_forward.4} parent=11 // pred_region
          %s960 = ssub.s32 16, 16
          %961 = vsyncadd [#allocation25], %s960
          %s963 = sshll.u32 [#allocation26], 4
          %s964 = int_to_ptr.vmem [resolvable:$true] %s963
          %966 = dma.hbm_to_vmem [thread:$0]  %s29, 16, %s964, [#allocation25]
        $region64: #{conformer_encoder_forward.4} parent=11 // pred_fallthru
          _
        // Predicated region
        $region65: #{conformer_encoder_forward.4} parent=11 // pred_check
          %p967 = pneg %p441
        $region66: #{conformer_encoder_forward.4} parent=11 // pred_check_branch
          %969 = sbr.rel (%p967) target = $region68
        $region67: #{conformer_encoder_forward.4} parent=11 // pred_region
          %s971 = ssub.s32 16, 16
          %972 = vsyncadd [#allocation28], %s971
          %s974 = sshll.u32 [#allocation27], 4
          %s975 = int_to_ptr.vmem [resolvable:$true] %s974
          %977 = dma.hbm_to_vmem [thread:$0]  %s31, 16, %s975, [#allocation28]
        $region68: #{conformer_encoder_forward.4} parent=11 // pred_fallthru
          _
        // Predicated region
        $region69: #{conformer_encoder_forward.4} parent=11 // pred_check
          %p978 = pneg %p462
        $region70: #{conformer_encoder_forward.4} parent=11 // pred_check_branch
          %980 = sbr.rel (%p978) target = $region72
        $region71: #{conformer_encoder_forward.4} parent=11 // pred_region
          %s982 = ssub.s32 1024, 1024
          %983 = vsyncadd [#allocation28], %s982
          %s984 = sshll.u32 [#allocation29], 4
          %s985 = int_to_ptr.vmem [resolvable:$true] %s984
          %990 = dma.hbm_to_vmem [thread:$0]  %s33, 1024, %s985, [#allocation28], 64, 64, 4
        $region72: #{conformer_encoder_forward.4} parent=11 // pred_fallthru
          _
        // Predicated region
        $region73: #{conformer_encoder_forward.4} parent=11 // pred_check
          %p991 = pneg %p483
        $region74: #{conformer_encoder_forward.4} parent=11 // pred_check_branch
          %993 = sbr.rel (%p991) target = $region76
        $region75: #{conformer_encoder_forward.4} parent=11 // pred_region
          %s995 = ssub.s32 16, 16
          %996 = vsyncadd [#allocation31], %s995
          %s998 = sshll.u32 [#allocation30], 4
          %s999 = int_to_ptr.vmem [resolvable:$true] %s998
          %1001 = dma.hbm_to_vmem [thread:$0]  %s35, 16, %s999, [#allocation31]
        $region76: #{conformer_encoder_forward.4} parent=11 // pred_fallthru
          _
        // Predicated region
        $region77: #{conformer_encoder_forward.4} parent=11 // pred_check
          %p1002 = pneg %p504
        $region78: #{conformer_encoder_forward.4} parent=11 // pred_check_branch
          %1004 = sbr.rel (%p1002) target = $region80
        $region79: #{conformer_encoder_forward.4} parent=11 // pred_region
          %s1006 = ssub.s32 16, 16
          %1007 = vsyncadd [#allocation31], %s1006
          %s1009 = sshll.u32 [#allocation32], 4
          %s1010 = int_to_ptr.vmem [resolvable:$true] %s1009
          %1012 = dma.hbm_to_vmem [thread:$0]  %s37, 16, %s1010, [#allocation31]
        $region80: #{conformer_encoder_forward.4} parent=11 // pred_fallthru
          _
        // Predicated region
        $region81: #{conformer_encoder_forward.4} parent=11 // pred_check
          %p1013 = pneg %p525
        $region82: #{conformer_encoder_forward.4} parent=11 // pred_check_branch
          %1015 = sbr.rel (%p1013) target = $region84
        $region83: #{conformer_encoder_forward.4} parent=11 // pred_region
          %s1017 = ssub.s32 16, 16
          %1018 = vsyncadd [#allocation34], %s1017
          %s1020 = sshll.u32 [#allocation33], 4
          %s1021 = int_to_ptr.vmem [resolvable:$true] %s1020
          %1023 = dma.hbm_to_vmem [thread:$0]  %s39, 16, %s1021, [#allocation34]
        $region84: #{conformer_encoder_forward.4} parent=11 // pred_fallthru
          _
        // Predicated region
        $region85: #{conformer_encoder_forward.4} parent=11 // pred_check
          %p1024 = pneg %p546
        $region86: #{conformer_encoder_forward.4} parent=11 // pred_check_branch
          %1026 = sbr.rel (%p1024) target = $region88
        $region87: #{conformer_encoder_forward.4} parent=11 // pred_region
          %s1028 = ssub.s32 3072, 3072
          %1029 = vsyncadd [#allocation34], %s1028
          %s1030 = sshll.u32 [#allocation35], 4
          %s1031 = int_to_ptr.vmem [resolvable:$true] %s1030
          %1036 = dma.hbm_to_vmem [thread:$0]  %s41, 3072, %s1031, [#allocation34], 192, 192, 12
        $region88: #{conformer_encoder_forward.4} parent=11 // pred_fallthru
          _
        // Predicated region
        $region89: #{conformer_encoder_forward.4} parent=11 // pred_check
          %p1037 = pneg %p567
        $region90: #{conformer_encoder_forward.4} parent=11 // pred_check_branch
          %1039 = sbr.rel (%p1037) target = $region92
        $region91: #{conformer_encoder_forward.4} parent=11 // pred_region
          %s1041 = ssub.s32 48, 48
          %1042 = vsyncadd [#allocation37], %s1041
          %s1044 = sshll.u32 [#allocation36], 4
          %s1045 = int_to_ptr.vmem [resolvable:$true] %s1044
          %1047 = dma.hbm_to_vmem [thread:$0]  %s43, 48, %s1045, [#allocation37]
        $region92: #{conformer_encoder_forward.4} parent=11 // pred_fallthru
          _
        // Predicated region
        $region93: #{conformer_encoder_forward.4} parent=11 // pred_check
          %p1048 = pneg %p588
        $region94: #{conformer_encoder_forward.4} parent=11 // pred_check_branch
          %1050 = sbr.rel (%p1048) target = $region96
        $region95: #{conformer_encoder_forward.4} parent=11 // pred_region
          %s1052 = ssub.s32 1024, 1024
          %1053 = vsyncadd [#allocation37], %s1052
          %s1054 = sshll.u32 [#allocation38], 4
          %s1055 = int_to_ptr.vmem [resolvable:$true] %s1054
          %1060 = dma.hbm_to_vmem [thread:$0]  %s45, 1024, %s1055, [#allocation37], 64, 64, 4
        $region96: #{conformer_encoder_forward.4} parent=11 // pred_fallthru
          _
        // Predicated region
        $region97: #{conformer_encoder_forward.4} parent=11 // pred_check
          %p1061 = pneg %p609
        $region98: #{conformer_encoder_forward.4} parent=11 // pred_check_branch
          %1063 = sbr.rel (%p1061) target = $region100
        $region99: #{conformer_encoder_forward.4} parent=11 // pred_region
          %s1065 = ssub.s32 16, 16
          %1066 = vsyncadd [#allocation40], %s1065
          %s1068 = sshll.u32 [#allocation39], 4
          %s1069 = int_to_ptr.vmem [resolvable:$true] %s1068
          %1071 = dma.hbm_to_vmem [thread:$0]  %s47, 16, %s1069, [#allocation40]
        $region100: #{conformer_encoder_forward.4} parent=11 // pred_fallthru
          _
        // Predicated region
        $region101: #{conformer_encoder_forward.4} parent=11 // pred_check
          %p1072 = pneg %p630
        $region102: #{conformer_encoder_forward.4} parent=11 // pred_check_branch
          %1074 = sbr.rel (%p1072) target = $region104
        $region103: #{conformer_encoder_forward.4} parent=11 // pred_region
          %s1076 = ssub.s32 16, 16
          %1077 = vsyncadd [#allocation40], %s1076
          %s1079 = sshll.u32 [#allocation41], 4
          %s1080 = int_to_ptr.vmem [resolvable:$true] %s1079
          %1082 = dma.hbm_to_vmem [thread:$0]  %s49, 16, %s1080, [#allocation40]
        $region104: #{conformer_encoder_forward.4} parent=11 // pred_fallthru
          _
        // Predicated region
        $region105: #{conformer_encoder_forward.4} parent=11 // pred_check
          %p1083 = pneg %p651
        $region106: #{conformer_encoder_forward.4} parent=11 // pred_check_branch
          %1085 = sbr.rel (%p1083) target = $region108
        $region107: #{conformer_encoder_forward.4} parent=11 // pred_region
          %s1087 = ssub.s32 16, 16
          %1088 = vsyncadd [#allocation43], %s1087
          %s1090 = sshll.u32 [#allocation42], 4
          %s1091 = int_to_ptr.vmem [resolvable:$true] %s1090
          %1093 = dma.hbm_to_vmem [thread:$0]  %s51, 16, %s1091, [#allocation43]
        $region108: #{conformer_encoder_forward.4} parent=11 // pred_fallthru
          _
        // Predicated region
        $region109: #{conformer_encoder_forward.4} parent=11 // pred_check
          %p1094 = pneg %p672
        $region110: #{conformer_encoder_forward.4} parent=11 // pred_check_branch
          %1096 = sbr.rel (%p1094) target = $region112
        $region111: #{conformer_encoder_forward.4} parent=11 // pred_region
          %s1098 = ssub.s32 4096, 4096
          %1099 = vsyncadd [#allocation43], %s1098
          %s1100 = sshll.u32 [#allocation44], 4
          %s1101 = int_to_ptr.vmem [resolvable:$true] %s1100
          %1106 = dma.hbm_to_vmem [thread:$0]  %s53, 4096, %s1101, [#allocation43], 256, 256, 16
        $region112: #{conformer_encoder_forward.4} parent=11 // pred_fallthru
          _
        // Predicated region
        $region113: #{conformer_encoder_forward.4} parent=11 // pred_check
          %p1107 = pneg %p693
        $region114: #{conformer_encoder_forward.4} parent=11 // pred_check_branch
          %1109 = sbr.rel (%p1107) target = $region116
        $region115: #{conformer_encoder_forward.4} parent=11 // pred_region
          %s1111 = ssub.s32 64, 64
          %1112 = vsyncadd [#allocation46], %s1111
          %s1114 = sshll.u32 [#allocation45], 4
          %s1115 = int_to_ptr.vmem [resolvable:$true] %s1114
          %1117 = dma.hbm_to_vmem [thread:$0]  %s55, 64, %s1115, [#allocation46]
        $region116: #{conformer_encoder_forward.4} parent=11 // pred_fallthru
          _
        // Predicated region
        $region117: #{conformer_encoder_forward.4} parent=11 // pred_check
          %p1118 = pneg %p714
        $region118: #{conformer_encoder_forward.4} parent=11 // pred_check_branch
          %1120 = sbr.rel (%p1118) target = $region120
        $region119: #{conformer_encoder_forward.4} parent=11 // pred_region
          %s1122 = ssub.s32 4096, 4096
          %1123 = vsyncadd [#allocation46], %s1122
          %s1124 = sshll.u32 [#allocation47], 4
          %s1125 = int_to_ptr.vmem [resolvable:$true] %s1124
          %1130 = dma.hbm_to_vmem [thread:$0]  %s57, 4096, %s1125, [#allocation46], 64, 64, 4
        $region120: #{conformer_encoder_forward.4} parent=11 // pred_fallthru
          _
        // Predicated region
        $region121: #{conformer_encoder_forward.4} parent=11 // pred_check
          %p1131 = pneg %p735
        $region122: #{conformer_encoder_forward.4} parent=11 // pred_check_branch
          %1133 = sbr.rel (%p1131) target = $region124
        $region123: #{conformer_encoder_forward.4} parent=11 // pred_region
          %s1135 = ssub.s32 16, 16
          %1136 = vsyncadd [#allocation49], %s1135
          %s1138 = sshll.u32 [#allocation48], 4
          %s1139 = int_to_ptr.vmem [resolvable:$true] %s1138
          %1141 = dma.hbm_to_vmem [thread:$0]  %s59, 16, %s1139, [#allocation49]
        $region124: #{conformer_encoder_forward.4} parent=11 // pred_fallthru
          _
        // Predicated region
        $region125: #{conformer_encoder_forward.4} parent=11 // pred_check
          %p1142 = pneg %p756
        $region126: #{conformer_encoder_forward.4} parent=11 // pred_check_branch
          %1144 = sbr.rel (%p1142) target = $region128
        $region127: #{conformer_encoder_forward.4} parent=11 // pred_region
          %s1146 = ssub.s32 16, 16
          %1147 = vsyncadd [#allocation49], %s1146
          %s1149 = sshll.u32 [#allocation50], 4
          %s1150 = int_to_ptr.vmem [resolvable:$true] %s1149
          %1152 = dma.hbm_to_vmem [thread:$0]  %s61, 16, %s1150, [#allocation49]
        $region128: #{conformer_encoder_forward.4} parent=11 // pred_fallthru
          _
        // Predicated region
        $region129: #{conformer_encoder_forward.4} parent=11 // pred_check
          %p1153 = pneg %p777
        $region130: #{conformer_encoder_forward.4} parent=11 // pred_check_branch
          %1155 = sbr.rel (%p1153) target = $region132
        $region131: #{conformer_encoder_forward.4} parent=11 // pred_region
          %s1157 = ssub.s32 16, 16
          %1158 = vsyncadd [#allocation52], %s1157
          %s1160 = sshll.u32 [#allocation51], 4
          %s1161 = int_to_ptr.vmem [resolvable:$true] %s1160
          %1163 = dma.hbm_to_vmem [thread:$0]  %s63, 16, %s1161, [#allocation52]
        $region132: #{conformer_encoder_forward.4} parent=11 // pred_fallthru
          _
      $region12: #{conformer_encoder_forward.4} parent=5 // pred_fallthru
        _
      %p1164 = scmp.lt.s32.totalorder %s95, 2
      // Predicated region
      $region133: #{conformer_encoder_forward.4} parent=5 // pred_check
        %p1165 = pneg %p1164
      $region134: #{conformer_encoder_forward.4} parent=5 // pred_check_branch
        %1167 = sbr.rel (%p1165) target = $region136
      $region135: #{conformer_encoder_forward.4} parent=5 // pred_region
        // Predicated region
        $region137: #{conformer_encoder_forward.4} parent=135 // pred_check
          %p1168 = pneg %p115
        $region138: #{conformer_encoder_forward.4} parent=135 // pred_check_branch
          %1170 = sbr.rel (%p1168) target = $region140
        $region139: #{conformer_encoder_forward.4} parent=135 // pred_region
          %s1171 = sand.u32 %s105, 1
          %s1172 = scalar_lea.sflag [#allocation4], %s1171
          %s1173 = sand.u32 %s105, 1
          %s1174 = smul.addr %s1173, 8
          %s1175 = scalar_lea.vmem [#allocation3], %s1174
          %s1177 = ssub.s32 128, 128
          %1178 = vsyncadd %s1172, %s1177
          %s1179 = smul.addr %s95, 2
          %s1180 = smul.addr %s1179, 64
          %s1181 = scalar_lea.hbm %s1, %s1180
          %s1182 = sshll.u32 %s1175, 4
          %s1183 = int_to_ptr.vmem [resolvable:$true] %s1182
          %1188 = dma.hbm_to_vmem [thread:$0]  %s1181, 128, %s1183, %s1172, 64, 64, 4
        $region140: #{conformer_encoder_forward.4} parent=135 // pred_fallthru
          _
        // Predicated region
        $region141: #{conformer_encoder_forward.4} parent=135 // pred_check
          %p1189 = pneg %p141
        $region142: #{conformer_encoder_forward.4} parent=135 // pred_check_branch
          %1191 = sbr.rel (%p1189) target = $region144
        $region143: #{conformer_encoder_forward.4} parent=135 // pred_region
          %s1192 = sand.u32 %s95, 1
          %s1193 = scalar_lea.sflag [#allocation7], %s1192
          %s1194 = sand.u32 %s131, 1
          %s1195 = scalar_lea.vmem [#allocation6], %s1194
          %s1197 = ssub.s32 16, 16
          %1198 = vsyncadd %s1193, %s1197
          %s1199 = smul.addr %s95, 16
          %s1200 = scalar_lea.hbm %s3, %s1199
          %s1202 = sshll.u32 %s1195, 4
          %s1203 = int_to_ptr.vmem [resolvable:$true] %s1202
          %1205 = dma.hbm_to_vmem [thread:$0]  %s1200, 16, %s1203, %s1193
        $region144: #{conformer_encoder_forward.4} parent=135 // pred_fallthru
          _
      $region136: #{conformer_encoder_forward.4} parent=5 // pred_fallthru
        _
      %p1206 = scmp.le.s32.totalorder 1, %s95
      %p1207 = scmp.lt.s32.totalorder %s95, 3
      %p1208 = pnand %p1206, %p1207
      %p1209 = pneg %p1208
      // Predicated region
      $region145: #{conformer_encoder_forward.4} parent=5 // pred_check
        _
      $region146: #{conformer_encoder_forward.4} parent=5 // pred_check_branch
        %1211 = sbr.rel (%p1208) target = $region148
      $region147: #{conformer_encoder_forward.4} parent=5 // pred_region
        %s1212 = ssub.s32 %s95, 1
        %s1213 = sand.u32 %s108, 1
        %s1214 = scalar_lea.sflag [#allocation4], %s1213
        %s1215 = sand.u32 %s108, 1
        %s1216 = smul.addr %s1215, 8
        %s1217 = scalar_lea.vmem [#allocation3], %s1216
        // Predicated region
        $region149: #{conformer_encoder_forward.4} parent=147 // pred_check
          %p1218 = pneg %p121
        $region150: #{conformer_encoder_forward.4} parent=147 // pred_check_branch
          %1220 = sbr.rel (%p1218) target = $region152
        $region151: #{conformer_encoder_forward.4} parent=147 // pred_region
          %1221 = dma.done %s1214, 128
        $region152: #{conformer_encoder_forward.4} parent=147 // pred_fallthru
          _
        %s1222 = sand.u32 %s100, 1
        %s1223 = scalar_lea.sflag [#allocation7], %s1222
        %s1224 = sand.u32 %s134, 1
        %s1225 = scalar_lea.vmem [#allocation6], %s1224
        // Predicated region
        $region153: #{conformer_encoder_forward.4} parent=147 // pred_check
          %p1226 = pneg %p147
        $region154: #{conformer_encoder_forward.4} parent=147 // pred_check_branch
          %1228 = sbr.rel (%p1226) target = $region156
        $region155: #{conformer_encoder_forward.4} parent=147 // pred_region
          %1229 = dma.done %s1223, 16
        $region156: #{conformer_encoder_forward.4} parent=147 // pred_fallthru
          _
        // Predicated region
        $region157: #{conformer_encoder_forward.4} parent=147 // pred_check
          %p1230 = pneg %p168
        $region158: #{conformer_encoder_forward.4} parent=147 // pred_check_branch
          %1232 = sbr.rel (%p1230) target = $region160
        $region159: #{conformer_encoder_forward.4} parent=147 // pred_region
          %1233 = dma.done [#allocation7], 16
        $region160: #{conformer_encoder_forward.4} parent=147 // pred_fallthru
          _
        // Predicated region
        $region161: #{conformer_encoder_forward.4} parent=147 // pred_check
          %p1234 = pneg %p189
        $region162: #{conformer_encoder_forward.4} parent=147 // pred_check_branch
          %1236 = sbr.rel (%p1234) target = $region164
        $region163: #{conformer_encoder_forward.4} parent=147 // pred_region
          %1237 = dma.done [#allocation10], 16
        $region164: #{conformer_encoder_forward.4} parent=147 // pred_fallthru
          _
        // Predicated region
        $region165: #{conformer_encoder_forward.4} parent=147 // pred_check
          %p1238 = pneg %p210
        $region166: #{conformer_encoder_forward.4} parent=147 // pred_check_branch
          %1240 = sbr.rel (%p1238) target = $region168
        $region167: #{conformer_encoder_forward.4} parent=147 // pred_region
          %1241 = dma.done [#allocation10], 4096
        $region168: #{conformer_encoder_forward.4} parent=147 // pred_fallthru
          _
        // Predicated region
        $region169: #{conformer_encoder_forward.4} parent=147 // pred_check
          %p1242 = pneg %p231
        $region170: #{conformer_encoder_forward.4} parent=147 // pred_check_branch
          %1244 = sbr.rel (%p1242) target = $region172
        $region171: #{conformer_encoder_forward.4} parent=147 // pred_region
          %1245 = dma.done [#allocation13], 64
        $region172: #{conformer_encoder_forward.4} parent=147 // pred_fallthru
          _
        // Predicated region
        $region173: #{conformer_encoder_forward.4} parent=147 // pred_check
          %p1246 = pneg %p252
        $region174: #{conformer_encoder_forward.4} parent=147 // pred_check_branch
          %1248 = sbr.rel (%p1246) target = $region176
        $region175: #{conformer_encoder_forward.4} parent=147 // pred_region
          %1249 = dma.done [#allocation13], 4096
        $region176: #{conformer_encoder_forward.4} parent=147 // pred_fallthru
          _
        // Predicated region
        $region177: #{conformer_encoder_forward.4} parent=147 // pred_check
          %p1250 = pneg %p273
        $region178: #{conformer_encoder_forward.4} parent=147 // pred_check_branch
          %1252 = sbr.rel (%p1250) target = $region180
        $region179: #{conformer_encoder_forward.4} parent=147 // pred_region
          %1253 = dma.done [#allocation16], 16
        $region180: #{conformer_encoder_forward.4} parent=147 // pred_fallthru
          _
        // Predicated region
        $region181: #{conformer_encoder_forward.4} parent=147 // pred_check
          %p1254 = pneg %p294
        $region182: #{conformer_encoder_forward.4} parent=147 // pred_check_branch
          %1256 = sbr.rel (%p1254) target = $region184
        $region183: #{conformer_encoder_forward.4} parent=147 // pred_region
          %1257 = dma.done [#allocation16], 16
        $region184: #{conformer_encoder_forward.4} parent=147 // pred_fallthru
          _
        // Predicated region
        $region185: #{conformer_encoder_forward.4} parent=147 // pred_check
          %p1258 = pneg %p315
        $region186: #{conformer_encoder_forward.4} parent=147 // pred_check_branch
          %1260 = sbr.rel (%p1258) target = $region188
        $region187: #{conformer_encoder_forward.4} parent=147 // pred_region
          %1261 = dma.done [#allocation19], 16
        $region188: #{conformer_encoder_forward.4} parent=147 // pred_fallthru
          _
        // Predicated region
        $region189: #{conformer_encoder_forward.4} parent=147 // pred_check
          %p1262 = pneg %p336
        $region190: #{conformer_encoder_forward.4} parent=147 // pred_check_branch
          %1264 = sbr.rel (%p1262) target = $region192
        $region191: #{conformer_encoder_forward.4} parent=147 // pred_region
          %1265 = dma.done [#allocation19], 2048
        $region192: #{conformer_encoder_forward.4} parent=147 // pred_fallthru
          _
        // Predicated region
        $region193: #{conformer_encoder_forward.4} parent=147 // pred_check
          %p1266 = pneg %p357
        $region194: #{conformer_encoder_forward.4} parent=147 // pred_check_branch
          %1268 = sbr.rel (%p1266) target = $region196
        $region195: #{conformer_encoder_forward.4} parent=147 // pred_region
          %1269 = dma.done [#allocation22], 32
        $region196: #{conformer_encoder_forward.4} parent=147 // pred_fallthru
          _
        // Predicated region
        $region197: #{conformer_encoder_forward.4} parent=147 // pred_check
          %p1270 = pneg %p378
        $region198: #{conformer_encoder_forward.4} parent=147 // pred_check_branch
          %1272 = sbr.rel (%p1270) target = $region200
        $region199: #{conformer_encoder_forward.4} parent=147 // pred_region
          %1273 = dma.done [#allocation22], 128
        $region200: #{conformer_encoder_forward.4} parent=147 // pred_fallthru
          _
        // Predicated region
        $region201: #{conformer_encoder_forward.4} parent=147 // pred_check
          %p1274 = pneg %p399
        $region202: #{conformer_encoder_forward.4} parent=147 // pred_check_branch
          %1276 = sbr.rel (%p1274) target = $region204
        $region203: #{conformer_encoder_forward.4} parent=147 // pred_region
          %1277 = dma.done [#allocation25], 16
        $region204: #{conformer_encoder_forward.4} parent=147 // pred_fallthru
          _
        // Predicated region
        $region205: #{conformer_encoder_forward.4} parent=147 // pred_check
          %p1278 = pneg %p420
        $region206: #{conformer_encoder_forward.4} parent=147 // pred_check_branch
          %1280 = sbr.rel (%p1278) target = $region208
        $region207: #{conformer_encoder_forward.4} parent=147 // pred_region
          %1281 = dma.done [#allocation25], 16
        $region208: #{conformer_encoder_forward.4} parent=147 // pred_fallthru
          _
        // Predicated region
        $region209: #{conformer_encoder_forward.4} parent=147 // pred_check
          %p1282 = pneg %p441
        $region210: #{conformer_encoder_forward.4} parent=147 // pred_check_branch
          %1284 = sbr.rel (%p1282) target = $region212
        $region211: #{conformer_encoder_forward.4} parent=147 // pred_region
          %1285 = dma.done [#allocation28], 16
        $region212: #{conformer_encoder_forward.4} parent=147 // pred_fallthru
          _
        // Predicated region
        $region213: #{conformer_encoder_forward.4} parent=147 // pred_check
          %p1286 = pneg %p462
        $region214: #{conformer_encoder_forward.4} parent=147 // pred_check_branch
          %1288 = sbr.rel (%p1286) target = $region216
        $region215: #{conformer_encoder_forward.4} parent=147 // pred_region
          %1289 = dma.done [#allocation28], 1024
        $region216: #{conformer_encoder_forward.4} parent=147 // pred_fallthru
          _
        // Predicated region
        $region217: #{conformer_encoder_forward.4} parent=147 // pred_check
          %p1290 = pneg %p483
        $region218: #{conformer_encoder_forward.4} parent=147 // pred_check_branch
          %1292 = sbr.rel (%p1290) target = $region220
        $region219: #{conformer_encoder_forward.4} parent=147 // pred_region
          %1293 = dma.done [#allocation31], 16
        $region220: #{conformer_encoder_forward.4} parent=147 // pred_fallthru
          _
        // Predicated region
        $region221: #{conformer_encoder_forward.4} parent=147 // pred_check
          %p1294 = pneg %p504
        $region222: #{conformer_encoder_forward.4} parent=147 // pred_check_branch
          %1296 = sbr.rel (%p1294) target = $region224
        $region223: #{conformer_encoder_forward.4} parent=147 // pred_region
          %1297 = dma.done [#allocation31], 16
        $region224: #{conformer_encoder_forward.4} parent=147 // pred_fallthru
          _
        // Predicated region
        $region225: #{conformer_encoder_forward.4} parent=147 // pred_check
          %p1298 = pneg %p525
        $region226: #{conformer_encoder_forward.4} parent=147 // pred_check_branch
          %1300 = sbr.rel (%p1298) target = $region228
        $region227: #{conformer_encoder_forward.4} parent=147 // pred_region
          %1301 = dma.done [#allocation34], 16
        $region228: #{conformer_encoder_forward.4} parent=147 // pred_fallthru
          _
        // Predicated region
        $region229: #{conformer_encoder_forward.4} parent=147 // pred_check
          %p1302 = pneg %p546
        $region230: #{conformer_encoder_forward.4} parent=147 // pred_check_branch
          %1304 = sbr.rel (%p1302) target = $region232
        $region231: #{conformer_encoder_forward.4} parent=147 // pred_region
          %1305 = dma.done [#allocation34], 3072
        $region232: #{conformer_encoder_forward.4} parent=147 // pred_fallthru
          _
        // Predicated region
        $region233: #{conformer_encoder_forward.4} parent=147 // pred_check
          %p1306 = pneg %p567
        $region234: #{conformer_encoder_forward.4} parent=147 // pred_check_branch
          %1308 = sbr.rel (%p1306) target = $region236
        $region235: #{conformer_encoder_forward.4} parent=147 // pred_region
          %1309 = dma.done [#allocation37], 48
        $region236: #{conformer_encoder_forward.4} parent=147 // pred_fallthru
          _
        // Predicated region
        $region237: #{conformer_encoder_forward.4} parent=147 // pred_check
          %p1310 = pneg %p588
        $region238: #{conformer_encoder_forward.4} parent=147 // pred_check_branch
          %1312 = sbr.rel (%p1310) target = $region240
        $region239: #{conformer_encoder_forward.4} parent=147 // pred_region
          %1313 = dma.done [#allocation37], 1024
        $region240: #{conformer_encoder_forward.4} parent=147 // pred_fallthru
          _
        // Predicated region
        $region241: #{conformer_encoder_forward.4} parent=147 // pred_check
          %p1314 = pneg %p609
        $region242: #{conformer_encoder_forward.4} parent=147 // pred_check_branch
          %1316 = sbr.rel (%p1314) target = $region244
        $region243: #{conformer_encoder_forward.4} parent=147 // pred_region
          %1317 = dma.done [#allocation40], 16
        $region244: #{conformer_encoder_forward.4} parent=147 // pred_fallthru
          _
        // Predicated region
        $region245: #{conformer_encoder_forward.4} parent=147 // pred_check
          %p1318 = pneg %p630
        $region246: #{conformer_encoder_forward.4} parent=147 // pred_check_branch
          %1320 = sbr.rel (%p1318) target = $region248
        $region247: #{conformer_encoder_forward.4} parent=147 // pred_region
          %1321 = dma.done [#allocation40], 16
        $region248: #{conformer_encoder_forward.4} parent=147 // pred_fallthru
          _
        // Predicated region
        $region249: #{conformer_encoder_forward.4} parent=147 // pred_check
          %p1322 = pneg %p651
        $region250: #{conformer_encoder_forward.4} parent=147 // pred_check_branch
          %1324 = sbr.rel (%p1322) target = $region252
        $region251: #{conformer_encoder_forward.4} parent=147 // pred_region
          %1325 = dma.done [#allocation43], 16
        $region252: #{conformer_encoder_forward.4} parent=147 // pred_fallthru
          _
        // Predicated region
        $region253: #{conformer_encoder_forward.4} parent=147 // pred_check
          %p1326 = pneg %p672
        $region254: #{conformer_encoder_forward.4} parent=147 // pred_check_branch
          %1328 = sbr.rel (%p1326) target = $region256
        $region255: #{conformer_encoder_forward.4} parent=147 // pred_region
          %1329 = dma.done [#allocation43], 4096
        $region256: #{conformer_encoder_forward.4} parent=147 // pred_fallthru
          _
        // Predicated region
        $region257: #{conformer_encoder_forward.4} parent=147 // pred_check
          %p1330 = pneg %p693
        $region258: #{conformer_encoder_forward.4} parent=147 // pred_check_branch
          %1332 = sbr.rel (%p1330) target = $region260
        $region259: #{conformer_encoder_forward.4} parent=147 // pred_region
          %1333 = dma.done [#allocation46], 64
        $region260: #{conformer_encoder_forward.4} parent=147 // pred_fallthru
          _
        // Predicated region
        $region261: #{conformer_encoder_forward.4} parent=147 // pred_check
          %p1334 = pneg %p714
        $region262: #{conformer_encoder_forward.4} parent=147 // pred_check_branch
          %1336 = sbr.rel (%p1334) target = $region264
        $region263: #{conformer_encoder_forward.4} parent=147 // pred_region
          %1337 = dma.done [#allocation46], 4096
        $region264: #{conformer_encoder_forward.4} parent=147 // pred_fallthru
          _
        // Predicated region
        $region265: #{conformer_encoder_forward.4} parent=147 // pred_check
          %p1338 = pneg %p735
        $region266: #{conformer_encoder_forward.4} parent=147 // pred_check_branch
          %1340 = sbr.rel (%p1338) target = $region268
        $region267: #{conformer_encoder_forward.4} parent=147 // pred_region
          %1341 = dma.done [#allocation49], 16
        $region268: #{conformer_encoder_forward.4} parent=147 // pred_fallthru
          _
        // Predicated region
        $region269: #{conformer_encoder_forward.4} parent=147 // pred_check
          %p1342 = pneg %p756
        $region270: #{conformer_encoder_forward.4} parent=147 // pred_check_branch
          %1344 = sbr.rel (%p1342) target = $region272
        $region271: #{conformer_encoder_forward.4} parent=147 // pred_region
          %1345 = dma.done [#allocation49], 16
        $region272: #{conformer_encoder_forward.4} parent=147 // pred_fallthru
          _
        // Predicated region
        $region273: #{conformer_encoder_forward.4} parent=147 // pred_check
          %p1346 = pneg %p777
        $region274: #{conformer_encoder_forward.4} parent=147 // pred_check_branch
          %1348 = sbr.rel (%p1346) target = $region276
        $region275: #{conformer_encoder_forward.4} parent=147 // pred_region
          %1349 = dma.done [#allocation52], 16
        $region276: #{conformer_encoder_forward.4} parent=147 // pred_fallthru
          _
        %s1350 = sand.u32 %s108, 1
        %s1351 = scalar_lea.sflag [#allocation4], %s1350
        %s1352 = sand.u32 %s108, 1
        %s1353 = smul.addr %s1352, 8
        %s1354 = scalar_lea.vmem [#allocation3], %s1353
        %p1355 = pneg %p121
        %p1356 = pneg %p118
        %s1357 = sand.u32 %s100, 1
        %s1358 = scalar_lea.sflag [#allocation7], %s1357
        %s1359 = sand.u32 %s134, 1
        %s1360 = scalar_lea.vmem [#allocation6], %s1359
        %p1361 = pneg %p147
        %p1362 = pneg %p144
        %p1363 = pneg %p168
        %p1364 = pneg %p165
        %p1365 = pneg %p189
        %p1366 = pneg %p186
        %p1367 = pneg %p210
        %p1368 = pneg %p207
        %p1369 = pneg %p231
        %p1370 = pneg %p228
        %p1371 = pneg %p252
        %p1372 = pneg %p249
        %p1373 = pneg %p273
        %p1374 = pneg %p270
        %p1375 = pneg %p294
        %p1376 = pneg %p291
        %p1377 = pneg %p315
        %p1378 = pneg %p312
        %p1379 = pneg %p336
        %p1380 = pneg %p333
        %p1381 = pneg %p357
        %p1382 = pneg %p354
        %p1383 = pneg %p378
        %p1384 = pneg %p375
        %p1385 = pneg %p399
        %p1386 = pneg %p396
        %p1387 = pneg %p420
        %p1388 = pneg %p417
        %p1389 = pneg %p441
        %p1390 = pneg %p438
        %p1391 = pneg %p462
        %p1392 = pneg %p459
        %p1393 = pneg %p483
        %p1394 = pneg %p480
        %p1395 = pneg %p504
        %p1396 = pneg %p501
        %p1397 = pneg %p525
        %p1398 = pneg %p522
        %p1399 = pneg %p546
        %p1400 = pneg %p543
        %p1401 = pneg %p567
        %p1402 = pneg %p564
        %p1403 = pneg %p588
        %p1404 = pneg %p585
        %p1405 = pneg %p609
        %p1406 = pneg %p606
        %p1407 = pneg %p630
        %p1408 = pneg %p627
        %p1409 = pneg %p651
        %p1410 = pneg %p648
        %p1411 = pneg %p672
        %p1412 = pneg %p669
        %p1413 = pneg %p693
        %p1414 = pneg %p690
        %p1415 = pneg %p714
        %p1416 = pneg %p711
        %p1417 = pneg %p735
        %p1418 = pneg %p732
        %p1419 = pneg %p756
        %p1420 = pneg %p753
        %p1421 = pneg %p777
        %p1422 = pneg %p774
        %p1423 = pneg %p803
        %p1424 = pneg %p800
        %s1425 = sand.u32 %s790, 1
        %s1426 = scalar_lea.sflag [#allocation5], %s1425
        %s1427 = sand.u32 %s790, 1
        %s1428 = smul.addr %s1427, 8
        %s1429 = scalar_lea.vmem [#allocation53], %s1428
        %v1431 = vld [vmem:[%s1217] sm:$0xf]
        %v1432 = vld [vmem:[%s1217 + $0x4] sm:$0xf]
        %v1433 = vunpack.c.l.bf16 %v1431
        %v1434 = vunpack.c.l.bf16 %v1432
        %v1435 = vld [vmem:[#allocation8] sm:$0x1]
        %v1436 = vld [vmem:[#allocation9] sm:$0x1]
        %1437 = vadd.xlane.f32.xlu0 %v1433
        %v1438 = vpop.xlane.xlu0 %1437
        %1439 = vadd.xlane.f32.xlu0 %v1434
        %v1440 = vpop.xlane.xlu0 %1439
        %v1441 = vrcp.pop 128.0
        %v1442 = vmul.f32 %v1438, %v1441
        %v1443 = vmul.f32 %v1440, %v1441
        %v1444 = vsub.f32 %v1433, %v1442
        %v1445 = vsub.f32 %v1434, %v1443
        %v1446 = vmul.f32 %v1444, %v1444
        %v1447 = vmul.f32 %v1445, %v1445
        %1448 = vadd.xlane.f32.xlu0 %v1446
        %v1449 = vpop.xlane.xlu0 %1448
        %1450 = vadd.xlane.f32.xlu0 %v1447
        %v1451 = vpop.xlane.xlu0 %1450
        %v1452 = vmul.f32 %v1449, %v1441
        %v1453 = vmul.f32 %v1451, %v1441
        %v1454 = vadd.f32 %v1452, 1e-05
        %v1455 = vadd.f32 %v1453, 1e-05
        %v1456 = vrsqrt.pop %v1454
        %v1457 = vrsqrt.pop %v1455
        %v1458 = vmul.f32 %v1444, %v1456
        %v1459 = vmul.f32 %v1445, %v1457
        %v1461 = vlaneseq
        %v1462 = vshrl.u32 %v1461, 7
        %v1463 = vsub.s32 0, %v1462
        %v1464 = vrot.slane %v1435, %v1463
        %v1466 = vmul.f32 %v1458, %v1464
        %v1467 = vmul.f32 %v1459, %v1464
        %v1469 = vlaneseq
        %v1470 = vshrl.u32 %v1469, 7
        %v1471 = vsub.s32 0, %v1470
        %v1472 = vrot.slane %v1436, %v1471
        %v1474 = vadd.f32 %v1466, %v1472
        %v1475 = vadd.f32 %v1467, %v1472
        %v1476 = vld [vmem:[#allocation11] sm:$0xff]
        %v1477 = vld [vmem:[#allocation11 + $0x8] sm:$0xff]
        %v1478 = vld [vmem:[#allocation11 + $0x10] sm:$0xff]
        %v1479 = vld [vmem:[#allocation11 + $0x18] sm:$0xff]
        %v1480 = vld [vmem:[#allocation11 + $0x20] sm:$0xff]
        %v1481 = vld [vmem:[#allocation11 + $0x28] sm:$0xff]
        %v1482 = vld [vmem:[#allocation11 + $0x30] sm:$0xff]
        %v1483 = vld [vmem:[#allocation11 + $0x38] sm:$0xff]
        %v1484 = vld [vmem:[#allocation11 + $0x40] sm:$0xff]
        %v1485 = vld [vmem:[#allocation11 + $0x48] sm:$0xff]
        %v1486 = vld [vmem:[#allocation11 + $0x50] sm:$0xff]
        %v1487 = vld [vmem:[#allocation11 + $0x58] sm:$0xff]
        %v1488 = vld [vmem:[#allocation11 + $0x60] sm:$0xff]
        %v1489 = vld [vmem:[#allocation11 + $0x68] sm:$0xff]
        %v1490 = vld [vmem:[#allocation11 + $0x70] sm:$0xff]
        %v1491 = vld [vmem:[#allocation11 + $0x78] sm:$0xff]
        %v1492 = vld [vmem:[#allocation11 + $0x80] sm:$0xff]
        %v1493 = vld [vmem:[#allocation11 + $0x88] sm:$0xff]
        %v1494 = vld [vmem:[#allocation11 + $0x90] sm:$0xff]
        %v1495 = vld [vmem:[#allocation11 + $0x98] sm:$0xff]
        %v1496 = vld [vmem:[#allocation11 + $0xa0] sm:$0xff]
        %v1497 = vld [vmem:[#allocation11 + $0xa8] sm:$0xff]
        %v1498 = vld [vmem:[#allocation11 + $0xb0] sm:$0xff]
        %v1499 = vld [vmem:[#allocation11 + $0xb8] sm:$0xff]
        %v1500 = vld [vmem:[#allocation11 + $0xc0] sm:$0xff]
        %v1501 = vld [vmem:[#allocation11 + $0xc8] sm:$0xff]
        %v1502 = vld [vmem:[#allocation11 + $0xd0] sm:$0xff]
        %v1503 = vld [vmem:[#allocation11 + $0xd8] sm:$0xff]
        %v1504 = vld [vmem:[#allocation11 + $0xe0] sm:$0xff]
        %v1505 = vld [vmem:[#allocation11 + $0xe8] sm:$0xff]
        %v1506 = vld [vmem:[#allocation11 + $0xf0] sm:$0xff]
        %v1507 = vld [vmem:[#allocation11 + $0xf8] sm:$0xff]
        %v1508 = vpack.c.bf16 %v1475, %v1474
        %v1509 = vld [vmem:[#allocation12] sm:$0xf]
        %v1511 = vlaneseq
        %v1512 = vshrl.u32 %v1511, 7
        %v1513 = vsub.s32 0, %v1512
        %v1514 = vrot.slane %v1509, %v1513
        %v1515 = vlaneseq
        %v1516 = vshrl.u32 %v1515, 7
        %v1517 = vsub.s32 1, %v1516
        %v1518 = vrot.slane %v1509, %v1517
        %v1519 = vlaneseq
        %v1520 = vshrl.u32 %v1519, 7
        %v1521 = vsub.s32 2, %v1520
        %v1522 = vrot.slane %v1509, %v1521
        %v1523 = vlaneseq
        %v1524 = vshrl.u32 %v1523, 7
        %v1525 = vsub.s32 3, %v1524
        %v1526 = vrot.slane %v1509, %v1525
        %v1563 = vunpack.c.l.b16 %v1476
        %v1564 = vunpack.c.h.b16 %v1476
        %v1565 = vunpack.c.l.b16 %v1477
        %v1566 = vunpack.c.h.b16 %v1477
        %v1567 = vunpack.c.l.b16 %v1478
        %v1568 = vunpack.c.h.b16 %v1478
        %v1569 = vunpack.c.l.b16 %v1479
        %v1570 = vunpack.c.h.b16 %v1479
        %v1571 = vunpack.c.l.b16 %v1480
        %v1572 = vunpack.c.h.b16 %v1480
        %v1573 = vunpack.c.l.b16 %v1481
        %v1574 = vunpack.c.h.b16 %v1481
        %v1575 = vunpack.c.l.b16 %v1482
        %v1576 = vunpack.c.h.b16 %v1482
        %v1577 = vunpack.c.l.b16 %v1483
        %v1578 = vunpack.c.h.b16 %v1483
        %v1579 = vunpack.c.l.b16 %v1484
        %v1580 = vunpack.c.h.b16 %v1484
        %v1581 = vunpack.c.l.b16 %v1485
        %v1582 = vunpack.c.h.b16 %v1485
        %v1583 = vunpack.c.l.b16 %v1486
        %v1584 = vunpack.c.h.b16 %v1486
        %v1585 = vunpack.c.l.b16 %v1487
        %v1586 = vunpack.c.h.b16 %v1487
        %v1587 = vunpack.c.l.b16 %v1488
        %v1588 = vunpack.c.h.b16 %v1488
        %v1589 = vunpack.c.l.b16 %v1489
        %v1590 = vunpack.c.h.b16 %v1489
        %v1591 = vunpack.c.l.b16 %v1490
        %v1592 = vunpack.c.h.b16 %v1490
        %v1593 = vunpack.c.l.b16 %v1491
        %v1594 = vunpack.c.h.b16 %v1491
        %v1595 = vunpack.c.l.b16 %v1492
        %v1596 = vunpack.c.h.b16 %v1492
        %v1597 = vunpack.c.l.b16 %v1493
        %v1598 = vunpack.c.h.b16 %v1493
        %v1599 = vunpack.c.l.b16 %v1494
        %v1600 = vunpack.c.h.b16 %v1494
        %v1601 = vunpack.c.l.b16 %v1495
        %v1602 = vunpack.c.h.b16 %v1495
        %v1603 = vunpack.c.l.b16 %v1496
        %v1604 = vunpack.c.h.b16 %v1496
        %v1605 = vunpack.c.l.b16 %v1497
        %v1606 = vunpack.c.h.b16 %v1497
        %v1607 = vunpack.c.l.b16 %v1498
        %v1608 = vunpack.c.h.b16 %v1498
        %v1609 = vunpack.c.l.b16 %v1499
        %v1610 = vunpack.c.h.b16 %v1499
        %v1611 = vunpack.c.l.b16 %v1500
        %v1612 = vunpack.c.h.b16 %v1500
        %v1613 = vunpack.c.l.b16 %v1501
        %v1614 = vunpack.c.h.b16 %v1501
        %v1615 = vunpack.c.l.b16 %v1502
        %v1616 = vunpack.c.h.b16 %v1502
        %v1617 = vunpack.c.l.b16 %v1503
        %v1618 = vunpack.c.h.b16 %v1503
        %v1619 = vunpack.c.l.b16 %v1504
        %v1620 = vunpack.c.h.b16 %v1504
        %v1621 = vunpack.c.l.b16 %v1505
        %v1622 = vunpack.c.h.b16 %v1505
        %v1623 = vunpack.c.l.b16 %v1506
        %v1624 = vunpack.c.h.b16 %v1506
        %v1625 = vunpack.c.l.b16 %v1507
        %v1626 = vunpack.c.h.b16 %v1507
        %v1627 = vpack.c.b16 %v1567, %v1563
        %v1628 = vpack.c.b16 %v1568, %v1564
        %v1629 = vpack.c.b16 %v1569, %v1565
        %v1630 = vpack.c.b16 %v1570, %v1566
        %v1631 = vpack.c.b16 %v1575, %v1571
        %v1632 = vpack.c.b16 %v1576, %v1572
        %v1633 = vpack.c.b16 %v1577, %v1573
        %v1634 = vpack.c.b16 %v1578, %v1574
        %v1635 = vpack.c.b16 %v1583, %v1579
        %v1636 = vpack.c.b16 %v1584, %v1580
        %v1637 = vpack.c.b16 %v1585, %v1581
        %v1638 = vpack.c.b16 %v1586, %v1582
        %v1639 = vpack.c.b16 %v1591, %v1587
        %v1640 = vpack.c.b16 %v1592, %v1588
        %v1641 = vpack.c.b16 %v1593, %v1589
        %v1642 = vpack.c.b16 %v1594, %v1590
        %v1643 = vpack.c.b16 %v1599, %v1595
        %v1644 = vpack.c.b16 %v1600, %v1596
        %v1645 = vpack.c.b16 %v1601, %v1597
        %v1646 = vpack.c.b16 %v1602, %v1598
        %v1647 = vpack.c.b16 %v1607, %v1603
        %v1648 = vpack.c.b16 %v1608, %v1604
        %v1649 = vpack.c.b16 %v1609, %v1605
        %v1650 = vpack.c.b16 %v1610, %v1606
        %v1651 = vpack.c.b16 %v1615, %v1611
        %v1652 = vpack.c.b16 %v1616, %v1612
        %v1653 = vpack.c.b16 %v1617, %v1613
        %v1654 = vpack.c.b16 %v1618, %v1614
        %v1655 = vpack.c.b16 %v1623, %v1619
        %v1656 = vpack.c.b16 %v1624, %v1620
        %v1657 = vpack.c.b16 %v1625, %v1621
        %v1658 = vpack.c.b16 %v1626, %v1622
        %1691 = vmatprep.subr.bf16.mxu0 %v1628
        %1692 = vmatpush1.bf16.msra.mxu0 %v1627
        %1693 = vmatprep.subr.bf16.mxu0 %v1632
        %1694 = vmatpush1.bf16.msra.mxu0 %v1631
        %1695 = vmatprep.subr.bf16.mxu0 %v1636
        %1696 = vmatpush1.bf16.msra.mxu0 %v1635
        %1697 = vmatprep.subr.bf16.mxu0 %v1640
        %1698 = vmatpush1.bf16.msra.mxu0 %v1639
        %1699 = vmatprep.subr.bf16.mxu0 %v1644
        %1700 = vmatpush1.bf16.msra.mxu0 %v1643
        %1701 = vmatprep.subr.bf16.mxu0 %v1648
        %1702 = vmatpush1.bf16.msra.mxu0 %v1647
        %1703 = vmatprep.subr.bf16.mxu0 %v1652
        %1704 = vmatpush1.bf16.msra.mxu0 %v1651
        %1705 = vmatprep.subr.bf16.mxu0 %v1656
        %1706 = vmatpush1.bf16.msra.mxu0 %v1655
        %1707 = vmatprep.subr.bf16.mxu0 0
        %1708 = vmatpush1.bf16.msra.mxu0 0
        %1709 = vmatprep.subr.bf16.mxu0 0
        %1710 = vmatpush1.bf16.msra.mxu0 0
        %1711 = vmatprep.subr.bf16.mxu0 0
        %1712 = vmatpush1.bf16.msra.mxu0 0
        %1713 = vmatprep.subr.bf16.mxu0 0
        %1714 = vmatpush1.bf16.msra.mxu0 0
        %1715 = vmatprep.subr.bf16.mxu0 0
        %1716 = vmatpush1.bf16.msra.mxu0 0
        %1717 = vmatprep.subr.bf16.mxu0 0
        %1718 = vmatpush1.bf16.msra.mxu0 0
        %1719 = vmatprep.subr.bf16.mxu0 0
        %1720 = vmatpush1.bf16.msra.mxu0 0
        %1721 = vmatprep.subr.bf16.mxu0 0
        %1722 = vmatpush1.bf16.msra.mxu0 0
        %1723 = vmatprep.mubr.bf16.mxu0 0
        %1724 = vmatmul.mubr.bf16.gmra.mrb[0].mxu0 %v1508
        %v1725 = vpop.f32.mrb[0].mxu0
        %v1726 = vadd.f32 %v1514, %v1725
        %v1727 = vpop.f32.mrb[0].mxu0
        %v1728 = vadd.f32 %v1518, %v1727
        %v1729 = vpop.f32.mrb[0].mxu0
        %v1730 = vadd.f32 %v1514, %v1729
        %v1731 = vpop.f32.mrb[0].mxu0
        %v1732 = vadd.f32 %v1518, %v1731
        %1733 = vdwg.mxu0
        %1734 = vmatprep.subr.bf16.mxu0 %v1630
        %1735 = vmatpush1.bf16.msra.mxu0 %v1629
        %1736 = vmatprep.subr.bf16.mxu0 %v1634
        %1737 = vmatpush1.bf16.msra.mxu0 %v1633
        %1738 = vmatprep.subr.bf16.mxu0 %v1638
        %1739 = vmatpush1.bf16.msra.mxu0 %v1637
        %1740 = vmatprep.subr.bf16.mxu0 %v1642
        %1741 = vmatpush1.bf16.msra.mxu0 %v1641
        %1742 = vmatprep.subr.bf16.mxu0 %v1646
        %1743 = vmatpush1.bf16.msra.mxu0 %v1645
        %1744 = vmatprep.subr.bf16.mxu0 %v1650
        %1745 = vmatpush1.bf16.msra.mxu0 %v1649
        %1746 = vmatprep.subr.bf16.mxu0 %v1654
        %1747 = vmatpush1.bf16.msra.mxu0 %v1653
        %1748 = vmatprep.subr.bf16.mxu0 %v1658
        %1749 = vmatpush1.bf16.msra.mxu0 %v1657
        %1750 = vmatprep.subr.bf16.mxu0 0
        %1751 = vmatpush1.bf16.msra.mxu0 0
        %1752 = vmatprep.subr.bf16.mxu0 0
        %1753 = vmatpush1.bf16.msra.mxu0 0
        %1754 = vmatprep.subr.bf16.mxu0 0
        %1755 = vmatpush1.bf16.msra.mxu0 0
        %1756 = vmatprep.subr.bf16.mxu0 0
        %1757 = vmatpush1.bf16.msra.mxu0 0
        %1758 = vmatprep.subr.bf16.mxu0 0
        %1759 = vmatpush1.bf16.msra.mxu0 0
        %1760 = vmatprep.subr.bf16.mxu0 0
        %1761 = vmatpush1.bf16.msra.mxu0 0
        %1762 = vmatprep.subr.bf16.mxu0 0
        %1763 = vmatpush1.bf16.msra.mxu0 0
        %1764 = vmatprep.subr.bf16.mxu0 0
        %1765 = vmatpush1.bf16.msra.mxu0 0
        %1766 = vmatprep.mubr.bf16.mxu0 0
        %1767 = vmatmul.mubr.bf16.gmra.mrb[0].mxu0 %v1508
        %v1768 = vpop.f32.mrb[0].mxu0
        %v1769 = vadd.f32 %v1522, %v1768
        %v1770 = vpop.f32.mrb[0].mxu0
        %v1771 = vadd.f32 %v1526, %v1770
        %v1772 = vpop.f32.mrb[0].mxu0
        %v1773 = vadd.f32 %v1522, %v1772
        %v1774 = vpop.f32.mrb[0].mxu0
        %v1775 = vadd.f32 %v1526, %v1774
        %1776 = vdwg.mxu0
        %v1777 = vsub.f32 0.0, %v1726
        %v1778 = vsub.f32 0.0, %v1728
        %v1779 = vsub.f32 0.0, %v1769
        %v1780 = vsub.f32 0.0, %v1771
        %v1781 = vsub.f32 0.0, %v1730
        %v1782 = vsub.f32 0.0, %v1732
        %v1783 = vsub.f32 0.0, %v1773
        %v1784 = vsub.f32 0.0, %v1775
        %v1785 = vmul.f32 %v1777, 1.442695
        %v1786 = vpow.pop %v1785
        %v1787 = vmul.f32 %v1778, 1.442695
        %v1788 = vpow.pop %v1787
        %v1789 = vmul.f32 %v1779, 1.442695
        %v1790 = vpow.pop %v1789
        %v1791 = vmul.f32 %v1780, 1.442695
        %v1792 = vpow.pop %v1791
        %v1793 = vmul.f32 %v1781, 1.442695
        %v1794 = vpow.pop %v1793
        %v1795 = vmul.f32 %v1782, 1.442695
        %v1796 = vpow.pop %v1795
        %v1797 = vmul.f32 %v1783, 1.442695
        %v1798 = vpow.pop %v1797
        %v1799 = vmul.f32 %v1784, 1.442695
        %v1800 = vpow.pop %v1799
        %v1801 = vadd.f32 %v1786, 1.0
        %v1802 = vadd.f32 %v1788, 1.0
        %v1803 = vadd.f32 %v1790, 1.0
        %v1804 = vadd.f32 %v1792, 1.0
        %v1805 = vadd.f32 %v1794, 1.0
        %v1806 = vadd.f32 %v1796, 1.0
        %v1807 = vadd.f32 %v1798, 1.0
        %v1808 = vadd.f32 %v1800, 1.0
        %v1809 = vrcp.pop %v1801
        %v1810 = vmul.f32 1.0, %v1809
        %v1811 = vrcp.pop %v1802
        %v1812 = vmul.f32 1.0, %v1811
        %v1813 = vrcp.pop %v1803
        %v1814 = vmul.f32 1.0, %v1813
        %v1815 = vrcp.pop %v1804
        %v1816 = vmul.f32 1.0, %v1815
        %v1817 = vrcp.pop %v1805
        %v1818 = vmul.f32 1.0, %v1817
        %v1819 = vrcp.pop %v1806
        %v1820 = vmul.f32 1.0, %v1819
        %v1821 = vrcp.pop %v1807
        %v1822 = vmul.f32 1.0, %v1821
        %v1823 = vrcp.pop %v1808
        %v1824 = vmul.f32 1.0, %v1823
        %v1825 = vmul.f32 %v1726, %v1810
        %v1826 = vmul.f32 %v1728, %v1812
        %v1827 = vmul.f32 %v1769, %v1814
        %v1828 = vmul.f32 %v1771, %v1816
        %v1829 = vmul.f32 %v1730, %v1818
        %v1830 = vmul.f32 %v1732, %v1820
        %v1831 = vmul.f32 %v1773, %v1822
        %v1832 = vmul.f32 %v1775, %v1824
        %v1833 = vld [vmem:[#allocation14] sm:$0xf]
        %v1834 = vld [vmem:[#allocation14 + $0x4] sm:$0xf]
        %v1835 = vld [vmem:[#allocation14 + $0x8] sm:$0xf]
        %v1836 = vld [vmem:[#allocation14 + $0xc] sm:$0xf]
        %v1837 = vld [vmem:[#allocation14 + $0x10] sm:$0xf]
        %v1838 = vld [vmem:[#allocation14 + $0x14] sm:$0xf]
        %v1839 = vld [vmem:[#allocation14 + $0x18] sm:$0xf]
        %v1840 = vld [vmem:[#allocation14 + $0x1c] sm:$0xf]
        %v1841 = vld [vmem:[#allocation14 + $0x20] sm:$0xf]
        %v1842 = vld [vmem:[#allocation14 + $0x24] sm:$0xf]
        %v1843 = vld [vmem:[#allocation14 + $0x28] sm:$0xf]
        %v1844 = vld [vmem:[#allocation14 + $0x2c] sm:$0xf]
        %v1845 = vld [vmem:[#allocation14 + $0x30] sm:$0xf]
        %v1846 = vld [vmem:[#allocation14 + $0x34] sm:$0xf]
        %v1847 = vld [vmem:[#allocation14 + $0x38] sm:$0xf]
        %v1848 = vld [vmem:[#allocation14 + $0x3c] sm:$0xf]
        %v1849 = vld [vmem:[#allocation14 + $0x40] sm:$0xf]
        %v1850 = vld [vmem:[#allocation14 + $0x44] sm:$0xf]
        %v1851 = vld [vmem:[#allocation14 + $0x48] sm:$0xf]
        %v1852 = vld [vmem:[#allocation14 + $0x4c] sm:$0xf]
        %v1853 = vld [vmem:[#allocation14 + $0x50] sm:$0xf]
        %v1854 = vld [vmem:[#allocation14 + $0x54] sm:$0xf]
        %v1855 = vld [vmem:[#allocation14 + $0x58] sm:$0xf]
        %v1856 = vld [vmem:[#allocation14 + $0x5c] sm:$0xf]
        %v1857 = vld [vmem:[#allocation14 + $0x60] sm:$0xf]
        %v1858 = vld [vmem:[#allocation14 + $0x64] sm:$0xf]
        %v1859 = vld [vmem:[#allocation14 + $0x68] sm:$0xf]
        %v1860 = vld [vmem:[#allocation14 + $0x6c] sm:$0xf]
        %v1861 = vld [vmem:[#allocation14 + $0x70] sm:$0xf]
        %v1862 = vld [vmem:[#allocation14 + $0x74] sm:$0xf]
        %v1863 = vld [vmem:[#allocation14 + $0x78] sm:$0xf]
        %v1864 = vld [vmem:[#allocation14 + $0x7c] sm:$0xf]
        %v1865 = vld [vmem:[#allocation14 + $0x80] sm:$0xf]
        %v1866 = vld [vmem:[#allocation14 + $0x84] sm:$0xf]
        %v1867 = vld [vmem:[#allocation14 + $0x88] sm:$0xf]
        %v1868 = vld [vmem:[#allocation14 + $0x8c] sm:$0xf]
        %v1869 = vld [vmem:[#allocation14 + $0x90] sm:$0xf]
        %v1870 = vld [vmem:[#allocation14 + $0x94] sm:$0xf]
        %v1871 = vld [vmem:[#allocation14 + $0x98] sm:$0xf]
        %v1872 = vld [vmem:[#allocation14 + $0x9c] sm:$0xf]
        %v1873 = vld [vmem:[#allocation14 + $0xa0] sm:$0xf]
        %v1874 = vld [vmem:[#allocation14 + $0xa4] sm:$0xf]
        %v1875 = vld [vmem:[#allocation14 + $0xa8] sm:$0xf]
        %v1876 = vld [vmem:[#allocation14 + $0xac] sm:$0xf]
        %v1877 = vld [vmem:[#allocation14 + $0xb0] sm:$0xf]
        %v1878 = vld [vmem:[#allocation14 + $0xb4] sm:$0xf]
        %v1879 = vld [vmem:[#allocation14 + $0xb8] sm:$0xf]
        %v1880 = vld [vmem:[#allocation14 + $0xbc] sm:$0xf]
        %v1881 = vld [vmem:[#allocation14 + $0xc0] sm:$0xf]
        %v1882 = vld [vmem:[#allocation14 + $0xc4] sm:$0xf]
        %v1883 = vld [vmem:[#allocation14 + $0xc8] sm:$0xf]
        %v1884 = vld [vmem:[#allocation14 + $0xcc] sm:$0xf]
        %v1885 = vld [vmem:[#allocation14 + $0xd0] sm:$0xf]
        %v1886 = vld [vmem:[#allocation14 + $0xd4] sm:$0xf]
        %v1887 = vld [vmem:[#allocation14 + $0xd8] sm:$0xf]
        %v1888 = vld [vmem:[#allocation14 + $0xdc] sm:$0xf]
        %v1889 = vld [vmem:[#allocation14 + $0xe0] sm:$0xf]
        %v1890 = vld [vmem:[#allocation14 + $0xe4] sm:$0xf]
        %v1891 = vld [vmem:[#allocation14 + $0xe8] sm:$0xf]
        %v1892 = vld [vmem:[#allocation14 + $0xec] sm:$0xf]
        %v1893 = vld [vmem:[#allocation14 + $0xf0] sm:$0xf]
        %v1894 = vld [vmem:[#allocation14 + $0xf4] sm:$0xf]
        %v1895 = vld [vmem:[#allocation14 + $0xf8] sm:$0xf]
        %v1896 = vld [vmem:[#allocation14 + $0xfc] sm:$0xf]
        %v1897 = vpack.c.bf16 %v1829, %v1825
        %v1898 = vpack.c.bf16 %v1830, %v1826
        %v1899 = vpack.c.bf16 %v1831, %v1827
        %v1900 = vpack.c.bf16 %v1832, %v1828
        %v1901 = vld [vmem:[#allocation15] sm:$0x1]
        %v1903 = vlaneseq
        %v1904 = vshrl.u32 %v1903, 7
        %v1905 = vsub.s32 0, %v1904
        %v1906 = vrot.slane %v1901, %v1905
        %v1972 = vunpack.c.l.b16 %v1833
        %v1973 = vunpack.c.l.b16 %v1834
        %v1974 = vunpack.c.l.b16 %v1835
        %v1975 = vunpack.c.l.b16 %v1836
        %v1976 = vunpack.c.l.b16 %v1837
        %v1977 = vunpack.c.l.b16 %v1838
        %v1978 = vunpack.c.l.b16 %v1839
        %v1979 = vunpack.c.l.b16 %v1840
        %v1980 = vunpack.c.l.b16 %v1841
        %v1981 = vunpack.c.l.b16 %v1842
        %v1982 = vunpack.c.l.b16 %v1843
        %v1983 = vunpack.c.l.b16 %v1844
        %v1984 = vunpack.c.l.b16 %v1845
        %v1985 = vunpack.c.l.b16 %v1846
        %v1986 = vunpack.c.l.b16 %v1847
        %v1987 = vunpack.c.l.b16 %v1848
        %v1988 = vunpack.c.l.b16 %v1849
        %v1989 = vunpack.c.l.b16 %v1850
        %v1990 = vunpack.c.l.b16 %v1851
        %v1991 = vunpack.c.l.b16 %v1852
        %v1992 = vunpack.c.l.b16 %v1853
        %v1993 = vunpack.c.l.b16 %v1854
        %v1994 = vunpack.c.l.b16 %v1855
        %v1995 = vunpack.c.l.b16 %v1856
        %v1996 = vunpack.c.l.b16 %v1857
        %v1997 = vunpack.c.l.b16 %v1858
        %v1998 = vunpack.c.l.b16 %v1859
        %v1999 = vunpack.c.l.b16 %v1860
        %v2000 = vunpack.c.l.b16 %v1861
        %v2001 = vunpack.c.l.b16 %v1862
        %v2002 = vunpack.c.l.b16 %v1863
        %v2003 = vunpack.c.l.b16 %v1864
        %v2004 = vunpack.c.l.b16 %v1865
        %v2005 = vunpack.c.l.b16 %v1866
        %v2006 = vunpack.c.l.b16 %v1867
        %v2007 = vunpack.c.l.b16 %v1868
        %v2008 = vunpack.c.l.b16 %v1869
        %v2009 = vunpack.c.l.b16 %v1870
        %v2010 = vunpack.c.l.b16 %v1871
        %v2011 = vunpack.c.l.b16 %v1872
        %v2012 = vunpack.c.l.b16 %v1873
        %v2013 = vunpack.c.l.b16 %v1874
        %v2014 = vunpack.c.l.b16 %v1875
        %v2015 = vunpack.c.l.b16 %v1876
        %v2016 = vunpack.c.l.b16 %v1877
        %v2017 = vunpack.c.l.b16 %v1878
        %v2018 = vunpack.c.l.b16 %v1879
        %v2019 = vunpack.c.l.b16 %v1880
        %v2020 = vunpack.c.l.b16 %v1881
        %v2021 = vunpack.c.l.b16 %v1882
        %v2022 = vunpack.c.l.b16 %v1883
        %v2023 = vunpack.c.l.b16 %v1884
        %v2024 = vunpack.c.l.b16 %v1885
        %v2025 = vunpack.c.l.b16 %v1886
        %v2026 = vunpack.c.l.b16 %v1887
        %v2027 = vunpack.c.l.b16 %v1888
        %v2028 = vunpack.c.l.b16 %v1889
        %v2029 = vunpack.c.l.b16 %v1890
        %v2030 = vunpack.c.l.b16 %v1891
        %v2031 = vunpack.c.l.b16 %v1892
        %v2032 = vunpack.c.l.b16 %v1893
        %v2033 = vunpack.c.l.b16 %v1894
        %v2034 = vunpack.c.l.b16 %v1895
        %v2035 = vunpack.c.l.b16 %v1896
        %v2036 = vpack.c.b16 %v1973, %v1972
        %v2037 = vpack.c.b16 %v1975, %v1974
        %v2038 = vpack.c.b16 %v1977, %v1976
        %v2039 = vpack.c.b16 %v1979, %v1978
        %v2040 = vpack.c.b16 %v1981, %v1980
        %v2041 = vpack.c.b16 %v1983, %v1982
        %v2042 = vpack.c.b16 %v1985, %v1984
        %v2043 = vpack.c.b16 %v1987, %v1986
        %v2044 = vpack.c.b16 %v1989, %v1988
        %v2045 = vpack.c.b16 %v1991, %v1990
        %v2046 = vpack.c.b16 %v1993, %v1992
        %v2047 = vpack.c.b16 %v1995, %v1994
        %v2048 = vpack.c.b16 %v1997, %v1996
        %v2049 = vpack.c.b16 %v1999, %v1998
        %v2050 = vpack.c.b16 %v2001, %v2000
        %v2051 = vpack.c.b16 %v2003, %v2002
        %v2052 = vpack.c.b16 %v2005, %v2004
        %v2053 = vpack.c.b16 %v2007, %v2006
        %v2054 = vpack.c.b16 %v2009, %v2008
        %v2055 = vpack.c.b16 %v2011, %v2010
        %v2056 = vpack.c.b16 %v2013, %v2012
        %v2057 = vpack.c.b16 %v2015, %v2014
        %v2058 = vpack.c.b16 %v2017, %v2016
        %v2059 = vpack.c.b16 %v2019, %v2018
        %v2060 = vpack.c.b16 %v2021, %v2020
        %v2061 = vpack.c.b16 %v2023, %v2022
        %v2062 = vpack.c.b16 %v2025, %v2024
        %v2063 = vpack.c.b16 %v2027, %v2026
        %v2064 = vpack.c.b16 %v2029, %v2028
        %v2065 = vpack.c.b16 %v2031, %v2030
        %v2066 = vpack.c.b16 %v2033, %v2032
        %v2067 = vpack.c.b16 %v2035, %v2034
        %2100 = vmatprep.subr.bf16.mxu0 0
        %2101 = vmatpush1.bf16.msra.mxu0 %v2036
        %2102 = vmatprep.subr.bf16.mxu0 0
        %2103 = vmatpush1.bf16.msra.mxu0 %v2037
        %2104 = vmatprep.subr.bf16.mxu0 0
        %2105 = vmatpush1.bf16.msra.mxu0 %v2038
        %2106 = vmatprep.subr.bf16.mxu0 0
        %2107 = vmatpush1.bf16.msra.mxu0 %v2039
        %2108 = vmatprep.subr.bf16.mxu0 0
        %2109 = vmatpush1.bf16.msra.mxu0 %v2040
        %2110 = vmatprep.subr.bf16.mxu0 0
        %2111 = vmatpush1.bf16.msra.mxu0 %v2041
        %2112 = vmatprep.subr.bf16.mxu0 0
        %2113 = vmatpush1.bf16.msra.mxu0 %v2042
        %2114 = vmatprep.subr.bf16.mxu0 0
        %2115 = vmatpush1.bf16.msra.mxu0 %v2043
        %2116 = vmatprep.subr.bf16.mxu0 0
        %2117 = vmatpush1.bf16.msra.mxu0 %v2044
        %2118 = vmatprep.subr.bf16.mxu0 0
        %2119 = vmatpush1.bf16.msra.mxu0 %v2045
        %2120 = vmatprep.subr.bf16.mxu0 0
        %2121 = vmatpush1.bf16.msra.mxu0 %v2046
        %2122 = vmatprep.subr.bf16.mxu0 0
        %2123 = vmatpush1.bf16.msra.mxu0 %v2047
        %2124 = vmatprep.subr.bf16.mxu0 0
        %2125 = vmatpush1.bf16.msra.mxu0 %v2048
        %2126 = vmatprep.subr.bf16.mxu0 0
        %2127 = vmatpush1.bf16.msra.mxu0 %v2049
        %2128 = vmatprep.subr.bf16.mxu0 0
        %2129 = vmatpush1.bf16.msra.mxu0 %v2050
        %2130 = vmatprep.subr.bf16.mxu0 0
        %2131 = vmatpush1.bf16.msra.mxu0 %v2051
        %2132 = vmatprep.mubr.bf16.mxu0 %v1898
        %2133 = vmatmul.mubr.bf16.gmra.mrb[0].mxu0 %v1897
        %v2134 = vpop.f32.mrb[0].mxu0
        %v2135 = vadd.f32 %v1906, %v2134
        %v2136 = vpop.f32.mrb[0].mxu0
        %v2137 = vpop.f32.mrb[0].mxu0
        %v2138 = vadd.f32 %v1906, %v2137
        %v2139 = vpop.f32.mrb[0].mxu0
        %2140 = vdwg.mxu0
        %2141 = vmatprep.subr.bf16.mxu0 0
        %2142 = vmatpush1.bf16.msra.mxu0 %v2052
        %2143 = vmatprep.subr.bf16.mxu0 0
        %2144 = vmatpush1.bf16.msra.mxu0 %v2053
        %2145 = vmatprep.subr.bf16.mxu0 0
        %2146 = vmatpush1.bf16.msra.mxu0 %v2054
        %2147 = vmatprep.subr.bf16.mxu0 0
        %2148 = vmatpush1.bf16.msra.mxu0 %v2055
        %2149 = vmatprep.subr.bf16.mxu0 0
        %2150 = vmatpush1.bf16.msra.mxu0 %v2056
        %2151 = vmatprep.subr.bf16.mxu0 0
        %2152 = vmatpush1.bf16.msra.mxu0 %v2057
        %2153 = vmatprep.subr.bf16.mxu0 0
        %2154 = vmatpush1.bf16.msra.mxu0 %v2058
        %2155 = vmatprep.subr.bf16.mxu0 0
        %2156 = vmatpush1.bf16.msra.mxu0 %v2059
        %2157 = vmatprep.subr.bf16.mxu0 0
        %2158 = vmatpush1.bf16.msra.mxu0 %v2060
        %2159 = vmatprep.subr.bf16.mxu0 0
        %2160 = vmatpush1.bf16.msra.mxu0 %v2061
        %2161 = vmatprep.subr.bf16.mxu0 0
        %2162 = vmatpush1.bf16.msra.mxu0 %v2062
        %2163 = vmatprep.subr.bf16.mxu0 0
        %2164 = vmatpush1.bf16.msra.mxu0 %v2063
        %2165 = vmatprep.subr.bf16.mxu0 0
        %2166 = vmatpush1.bf16.msra.mxu0 %v2064
        %2167 = vmatprep.subr.bf16.mxu0 0
        %2168 = vmatpush1.bf16.msra.mxu0 %v2065
        %2169 = vmatprep.subr.bf16.mxu0 0
        %2170 = vmatpush1.bf16.msra.mxu0 %v2066
        %2171 = vmatprep.subr.bf16.mxu0 0
        %2172 = vmatpush1.bf16.msra.mxu0 %v2067
        %2173 = vmatprep.mubr.bf16.mxu0 %v1900
        %2174 = vmatmul.mubr.bf16.gmra.mrb[0].mxu0 %v1899
        %v2175 = vpop.f32.mrb[0].mxu0
        %v2176 = vadd.f32 %v2135, %v2175
        %v2177 = vpop.f32.mrb[0].mxu0
        %v2178 = vpop.f32.mrb[0].mxu0
        %v2179 = vadd.f32 %v2138, %v2178
        %v2180 = vpop.f32.mrb[0].mxu0
        %2181 = vdwg.mxu0
        %v2182 = vmul.f32 %v2176, 0.5
        %v2183 = vmul.f32 %v2179, 0.5
        %v2184 = vadd.f32 %v2182, %v1433
        %v2185 = vadd.f32 %v2183, %v1434
        %v2186 = vld [vmem:[#allocation17] sm:$0x1]
        %v2187 = vld [vmem:[#allocation18] sm:$0x1]
        %2188 = vadd.xlane.f32.xlu0 %v2184
        %v2189 = vpop.xlane.xlu0 %2188
        %2190 = vadd.xlane.f32.xlu0 %v2185
        %v2191 = vpop.xlane.xlu0 %2190
        %v2192 = vmul.f32 %v2189, %v1441
        %v2193 = vmul.f32 %v2191, %v1441
        %v2194 = vsub.f32 %v2184, %v2192
        %v2195 = vsub.f32 %v2185, %v2193
        %v2196 = vmul.f32 %v2194, %v2194
        %v2197 = vmul.f32 %v2195, %v2195
        %2198 = vadd.xlane.f32.xlu0 %v2196
        %v2199 = vpop.xlane.xlu0 %2198
        %2200 = vadd.xlane.f32.xlu0 %v2197
        %v2201 = vpop.xlane.xlu0 %2200
        %v2202 = vmul.f32 %v2199, %v1441
        %v2203 = vmul.f32 %v2201, %v1441
        %v2204 = vadd.f32 %v2202, 1e-05
        %v2205 = vadd.f32 %v2203, 1e-05
        %v2206 = vrsqrt.pop %v2204
        %v2207 = vrsqrt.pop %v2205
        %v2208 = vmul.f32 %v2194, %v2206
        %v2209 = vmul.f32 %v2195, %v2207
        %v2211 = vlaneseq
        %v2212 = vshrl.u32 %v2211, 7
        %v2213 = vsub.s32 0, %v2212
        %v2214 = vrot.slane %v2186, %v2213
        %v2216 = vmul.f32 %v2208, %v2214
        %v2217 = vmul.f32 %v2209, %v2214
        %v2219 = vlaneseq
        %v2220 = vshrl.u32 %v2219, 7
        %v2221 = vsub.s32 0, %v2220
        %v2222 = vrot.slane %v2187, %v2221
        %v2224 = vadd.f32 %v2216, %v2222
        %v2225 = vadd.f32 %v2217, %v2222
        %v2226 = vld [vmem:[#allocation20] sm:$0xff]
        %v2227 = vld [vmem:[#allocation20 + $0x8] sm:$0xff]
        %v2228 = vld [vmem:[#allocation20 + $0x10] sm:$0xff]
        %v2229 = vld [vmem:[#allocation20 + $0x18] sm:$0xff]
        %v2230 = vld [vmem:[#allocation20 + $0x20] sm:$0xff]
        %v2231 = vld [vmem:[#allocation20 + $0x28] sm:$0xff]
        %v2232 = vld [vmem:[#allocation20 + $0x30] sm:$0xff]
        %v2233 = vld [vmem:[#allocation20 + $0x38] sm:$0xff]
        %v2234 = vld [vmem:[#allocation20 + $0x40] sm:$0xff]
        %v2235 = vld [vmem:[#allocation20 + $0x48] sm:$0xff]
        %v2236 = vld [vmem:[#allocation20 + $0x50] sm:$0xff]
        %v2237 = vld [vmem:[#allocation20 + $0x58] sm:$0xff]
        %v2238 = vld [vmem:[#allocation20 + $0x60] sm:$0xff]
        %v2239 = vld [vmem:[#allocation20 + $0x68] sm:$0xff]
        %v2240 = vld [vmem:[#allocation20 + $0x70] sm:$0xff]
        %v2241 = vld [vmem:[#allocation20 + $0x78] sm:$0xff]
        %v2242 = vpack.c.bf16 %v2225, %v2224
        %v2243 = vld [vmem:[#allocation21] sm:$0x3]
        %v2245 = vlaneseq
        %v2246 = vshrl.u32 %v2245, 7
        %v2247 = vsub.s32 0, %v2246
        %v2248 = vrot.slane %v2243, %v2247
        %v2249 = vlaneseq
        %v2250 = vshrl.u32 %v2249, 7
        %v2251 = vsub.s32 1, %v2250
        %v2252 = vrot.slane %v2243, %v2251
        %v2271 = vunpack.c.l.b16 %v2226
        %v2272 = vunpack.c.h.b16 %v2226
        %v2273 = vunpack.c.l.b16 %v2227
        %v2274 = vunpack.c.h.b16 %v2227
        %v2275 = vunpack.c.l.b16 %v2228
        %v2276 = vunpack.c.h.b16 %v2228
        %v2277 = vunpack.c.l.b16 %v2229
        %v2278 = vunpack.c.h.b16 %v2229
        %v2279 = vunpack.c.l.b16 %v2230
        %v2280 = vunpack.c.h.b16 %v2230
        %v2281 = vunpack.c.l.b16 %v2231
        %v2282 = vunpack.c.h.b16 %v2231
        %v2283 = vunpack.c.l.b16 %v2232
        %v2284 = vunpack.c.h.b16 %v2232
        %v2285 = vunpack.c.l.b16 %v2233
        %v2286 = vunpack.c.h.b16 %v2233
        %v2287 = vunpack.c.l.b16 %v2234
        %v2288 = vunpack.c.h.b16 %v2234
        %v2289 = vunpack.c.l.b16 %v2235
        %v2290 = vunpack.c.h.b16 %v2235
        %v2291 = vunpack.c.l.b16 %v2236
        %v2292 = vunpack.c.h.b16 %v2236
        %v2293 = vunpack.c.l.b16 %v2237
        %v2294 = vunpack.c.h.b16 %v2237
        %v2295 = vunpack.c.l.b16 %v2238
        %v2296 = vunpack.c.h.b16 %v2238
        %v2297 = vunpack.c.l.b16 %v2239
        %v2298 = vunpack.c.h.b16 %v2239
        %v2299 = vunpack.c.l.b16 %v2240
        %v2300 = vunpack.c.h.b16 %v2240
        %v2301 = vunpack.c.l.b16 %v2241
        %v2302 = vunpack.c.h.b16 %v2241
        %v2303 = vpack.c.b16 %v2273, %v2271
        %v2304 = vpack.c.b16 %v2274, %v2272
        %v2305 = vpack.c.b16 %v2277, %v2275
        %v2306 = vpack.c.b16 %v2278, %v2276
        %v2307 = vpack.c.b16 %v2281, %v2279
        %v2308 = vpack.c.b16 %v2282, %v2280
        %v2309 = vpack.c.b16 %v2285, %v2283
        %v2310 = vpack.c.b16 %v2286, %v2284
        %v2311 = vpack.c.b16 %v2289, %v2287
        %v2312 = vpack.c.b16 %v2290, %v2288
        %v2313 = vpack.c.b16 %v2293, %v2291
        %v2314 = vpack.c.b16 %v2294, %v2292
        %v2315 = vpack.c.b16 %v2297, %v2295
        %v2316 = vpack.c.b16 %v2298, %v2296
        %v2317 = vpack.c.b16 %v2301, %v2299
        %v2318 = vpack.c.b16 %v2302, %v2300
        %2335 = vmatprep.subr.bf16.mxu0 %v2304
        %2336 = vmatpush1.bf16.msra.mxu0 %v2303
        %2337 = vmatprep.subr.bf16.mxu0 %v2306
        %2338 = vmatpush1.bf16.msra.mxu0 %v2305
        %2339 = vmatprep.subr.bf16.mxu0 %v2308
        %2340 = vmatpush1.bf16.msra.mxu0 %v2307
        %2341 = vmatprep.subr.bf16.mxu0 %v2310
        %2342 = vmatpush1.bf16.msra.mxu0 %v2309
        %2343 = vmatprep.subr.bf16.mxu0 %v2312
        %2344 = vmatpush1.bf16.msra.mxu0 %v2311
        %2345 = vmatprep.subr.bf16.mxu0 %v2314
        %2346 = vmatpush1.bf16.msra.mxu0 %v2313
        %2347 = vmatprep.subr.bf16.mxu0 %v2316
        %2348 = vmatpush1.bf16.msra.mxu0 %v2315
        %2349 = vmatprep.subr.bf16.mxu0 %v2318
        %2350 = vmatpush1.bf16.msra.mxu0 %v2317
        %2351 = vmatprep.subr.bf16.mxu0 0
        %2352 = vmatpush1.bf16.msra.mxu0 0
        %2353 = vmatprep.subr.bf16.mxu0 0
        %2354 = vmatpush1.bf16.msra.mxu0 0
        %2355 = vmatprep.subr.bf16.mxu0 0
        %2356 = vmatpush1.bf16.msra.mxu0 0
        %2357 = vmatprep.subr.bf16.mxu0 0
        %2358 = vmatpush1.bf16.msra.mxu0 0
        %2359 = vmatprep.subr.bf16.mxu0 0
        %2360 = vmatpush1.bf16.msra.mxu0 0
        %2361 = vmatprep.subr.bf16.mxu0 0
        %2362 = vmatpush1.bf16.msra.mxu0 0
        %2363 = vmatprep.subr.bf16.mxu0 0
        %2364 = vmatpush1.bf16.msra.mxu0 0
        %2365 = vmatprep.subr.bf16.mxu0 0
        %2366 = vmatpush1.bf16.msra.mxu0 0
        %2367 = vmatprep.mubr.bf16.mxu0 0
        %2368 = vmatmul.mubr.bf16.gmra.mrb[0].mxu0 %v2242
        %v2369 = vpop.f32.mrb[0].mxu0
        %v2370 = vadd.f32 %v2248, %v2369
        %v2371 = vpop.f32.mrb[0].mxu0
        %v2372 = vadd.f32 %v2252, %v2371
        %v2373 = vpop.f32.mrb[0].mxu0
        %v2374 = vadd.f32 %v2248, %v2373
        %v2375 = vpop.f32.mrb[0].mxu0
        %v2376 = vadd.f32 %v2252, %v2375
        %2377 = vdwg.mxu0
        %v2378 = vsub.f32 0.0, %v2372
        %v2379 = vsub.f32 0.0, %v2376
        %v2380 = vmul.f32 %v2378, 1.442695
        %v2381 = vpow.pop %v2380
        %v2382 = vmul.f32 %v2379, 1.442695
        %v2383 = vpow.pop %v2382
        %v2384 = vadd.f32 %v2381, 1.0
        %v2385 = vadd.f32 %v2383, 1.0
        %v2386 = vrcp.pop %v2384
        %v2387 = vmul.f32 1.0, %v2386
        %v2388 = vrcp.pop %v2385
        %v2389 = vmul.f32 1.0, %v2388
        %v2390 = vmul.f32 %v2370, %v2387
        %v2391 = vmul.f32 %v2374, %v2389
        %2392 = vst [vmem:[#allocation2] sm:$0xff] 0.0
        %2393 = vst [vmem:[#allocation2 + $0x18] sm:$0xff] 0.0
        %2394 = vst [vmem:[#allocation2 + $0x8] sm:$0xff] %v2390
        %2395 = vst [vmem:[#allocation2 + $0x10] sm:$0xff] %v2391
        %v2396 = vld [vmem:[#allocation2 + $0x5] sm:$0xff]
        %v2397 = vld [vmem:[#allocation2 + $0xd] sm:$0xff]
        %v2398 = vld [vmem:[#allocation23] sm:$0x1]
        %v2399 = vlaneseq
        %v2400 = vshrl.u32 %v2399, 7
        %v2401 = vsub.s32 0, %v2400
        %v2402 = vrot.slane %v2398, %v2401
        %v2403 = vmul.f32 %v2396, %v2402
        %v2404 = vmul.f32 %v2397, %v2402
        %v2405 = vadd.f32 %v2403, 0.0
        %v2406 = vadd.f32 %v2404, 0.0
        %v2407 = vld [vmem:[#allocation2 + $0x6] sm:$0xff]
        %v2408 = vld [vmem:[#allocation2 + $0xe] sm:$0xff]
        %v2409 = vld [vmem:[#allocation23 + $0x1] sm:$0x1]
        %v2410 = vlaneseq
        %v2411 = vshrl.u32 %v2410, 7
        %v2412 = vsub.s32 0, %v2411
        %v2413 = vrot.slane %v2409, %v2412
        %v2414 = vmul.f32 %v2407, %v2413
        %v2415 = vmul.f32 %v2408, %v2413
        %v2416 = vadd.f32 %v2405, %v2414
        %v2417 = vadd.f32 %v2406, %v2415
        %v2418 = vld [vmem:[#allocation2 + $0x7] sm:$0xff]
        %v2419 = vld [vmem:[#allocation2 + $0xf] sm:$0xff]
        %v2420 = vld [vmem:[#allocation23 + $0x2] sm:$0x1]
        %v2421 = vlaneseq
        %v2422 = vshrl.u32 %v2421, 7
        %v2423 = vsub.s32 0, %v2422
        %v2424 = vrot.slane %v2420, %v2423
        %v2425 = vmul.f32 %v2418, %v2424
        %v2426 = vmul.f32 %v2419, %v2424
        %v2427 = vadd.f32 %v2416, %v2425
        %v2428 = vadd.f32 %v2417, %v2426
        %v2429 = vld [vmem:[#allocation2 + $0x8] sm:$0xff]
        %v2430 = vld [vmem:[#allocation2 + $0x10] sm:$0xff]
        %v2431 = vld [vmem:[#allocation23 + $0x3] sm:$0x1]
        %v2432 = vlaneseq
        %v2433 = vshrl.u32 %v2432, 7
        %v2434 = vsub.s32 0, %v2433
        %v2435 = vrot.slane %v2431, %v2434
        %v2436 = vmul.f32 %v2429, %v2435
        %v2437 = vmul.f32 %v2430, %v2435
        %v2438 = vadd.f32 %v2427, %v2436
        %v2439 = vadd.f32 %v2428, %v2437
        %v2440 = vld [vmem:[#allocation2 + $0x9] sm:$0xff]
        %v2441 = vld [vmem:[#allocation2 + $0x11] sm:$0xff]
        %v2442 = vld [vmem:[#allocation23 + $0x4] sm:$0x1]
        %v2443 = vlaneseq
        %v2444 = vshrl.u32 %v2443, 7
        %v2445 = vsub.s32 0, %v2444
        %v2446 = vrot.slane %v2442, %v2445
        %v2447 = vmul.f32 %v2440, %v2446
        %v2448 = vmul.f32 %v2441, %v2446
        %v2449 = vadd.f32 %v2438, %v2447
        %v2450 = vadd.f32 %v2439, %v2448
        %v2451 = vld [vmem:[#allocation2 + $0xa] sm:$0xff]
        %v2452 = vld [vmem:[#allocation2 + $0x12] sm:$0xff]
        %v2453 = vld [vmem:[#allocation23 + $0x5] sm:$0x1]
        %v2454 = vlaneseq
        %v2455 = vshrl.u32 %v2454, 7
        %v2456 = vsub.s32 0, %v2455
        %v2457 = vrot.slane %v2453, %v2456
        %v2458 = vmul.f32 %v2451, %v2457
        %v2459 = vmul.f32 %v2452, %v2457
        %v2460 = vadd.f32 %v2449, %v2458
        %v2461 = vadd.f32 %v2450, %v2459
        %v2462 = vld [vmem:[#allocation2 + $0xb] sm:$0xff]
        %v2463 = vld [vmem:[#allocation2 + $0x13] sm:$0xff]
        %v2464 = vld [vmem:[#allocation23 + $0x6] sm:$0x1]
        %v2465 = vlaneseq
        %v2466 = vshrl.u32 %v2465, 7
        %v2467 = vsub.s32 0, %v2466
        %v2468 = vrot.slane %v2464, %v2467
        %v2469 = vmul.f32 %v2462, %v2468
        %v2470 = vmul.f32 %v2463, %v2468
        %v2471 = vadd.f32 %v2460, %v2469
        %v2472 = vadd.f32 %v2461, %v2470
        %v2473 = vld [vmem:[#allocation24] sm:$0x1]
        %v2475 = vlaneseq
        %v2476 = vshrl.u32 %v2475, 7
        %v2477 = vsub.s32 0, %v2476
        %v2478 = vrot.slane %v2473, %v2477
        %v2480 = vadd.f32 %v2471, %v2478
        %v2481 = vadd.f32 %v2472, %v2478
        %v2482 = vld [vmem:[#allocation26] sm:$0x1]
        %v2484 = vlaneseq
        %v2485 = vshrl.u32 %v2484, 7
        %v2486 = vsub.s32 0, %v2485
        %v2487 = vrot.slane %v2482, %v2486
        %v2489 = vmul.f32 %v2480, %v2487
        %v2490 = vmul.f32 %v2481, %v2487
        %v2491 = vld [vmem:[#allocation27] sm:$0x1]
        %v2493 = vlaneseq
        %v2494 = vshrl.u32 %v2493, 7
        %v2495 = vsub.s32 0, %v2494
        %v2496 = vrot.slane %v2491, %v2495
        %v2498 = vadd.f32 %v2489, %v2496
        %v2499 = vadd.f32 %v2490, %v2496
        %v2500 = vsub.f32 0.0, %v2498
        %v2501 = vsub.f32 0.0, %v2499
        %v2502 = vmul.f32 %v2500, 1.442695
        %v2503 = vpow.pop %v2502
        %v2504 = vmul.f32 %v2501, 1.442695
        %v2505 = vpow.pop %v2504
        %v2506 = vadd.f32 %v2503, 1.0
        %v2507 = vadd.f32 %v2505, 1.0
        %v2508 = vrcp.pop %v2506
        %v2509 = vmul.f32 1.0, %v2508
        %v2510 = vrcp.pop %v2507
        %v2511 = vmul.f32 1.0, %v2510
        %v2512 = vmul.f32 %v2498, %v2509
        %v2513 = vmul.f32 %v2499, %v2511
        %v2514 = vld [vmem:[#allocation29] sm:$0xf]
        %v2515 = vld [vmem:[#allocation29 + $0x4] sm:$0xf]
        %v2516 = vld [vmem:[#allocation29 + $0x8] sm:$0xf]
        %v2517 = vld [vmem:[#allocation29 + $0xc] sm:$0xf]
        %v2518 = vld [vmem:[#allocation29 + $0x10] sm:$0xf]
        %v2519 = vld [vmem:[#allocation29 + $0x14] sm:$0xf]
        %v2520 = vld [vmem:[#allocation29 + $0x18] sm:$0xf]
        %v2521 = vld [vmem:[#allocation29 + $0x1c] sm:$0xf]
        %v2522 = vld [vmem:[#allocation29 + $0x20] sm:$0xf]
        %v2523 = vld [vmem:[#allocation29 + $0x24] sm:$0xf]
        %v2524 = vld [vmem:[#allocation29 + $0x28] sm:$0xf]
        %v2525 = vld [vmem:[#allocation29 + $0x2c] sm:$0xf]
        %v2526 = vld [vmem:[#allocation29 + $0x30] sm:$0xf]
        %v2527 = vld [vmem:[#allocation29 + $0x34] sm:$0xf]
        %v2528 = vld [vmem:[#allocation29 + $0x38] sm:$0xf]
        %v2529 = vld [vmem:[#allocation29 + $0x3c] sm:$0xf]
        %v2530 = vpack.c.bf16 %v2513, %v2512
        %v2531 = vld [vmem:[#allocation30] sm:$0x1]
        %v2533 = vlaneseq
        %v2534 = vshrl.u32 %v2533, 7
        %v2535 = vsub.s32 0, %v2534
        %v2536 = vrot.slane %v2531, %v2535
        %v2554 = vunpack.c.l.b16 %v2514
        %v2555 = vunpack.c.l.b16 %v2515
        %v2556 = vunpack.c.l.b16 %v2516
        %v2557 = vunpack.c.l.b16 %v2517
        %v2558 = vunpack.c.l.b16 %v2518
        %v2559 = vunpack.c.l.b16 %v2519
        %v2560 = vunpack.c.l.b16 %v2520
        %v2561 = vunpack.c.l.b16 %v2521
        %v2562 = vunpack.c.l.b16 %v2522
        %v2563 = vunpack.c.l.b16 %v2523
        %v2564 = vunpack.c.l.b16 %v2524
        %v2565 = vunpack.c.l.b16 %v2525
        %v2566 = vunpack.c.l.b16 %v2526
        %v2567 = vunpack.c.l.b16 %v2527
        %v2568 = vunpack.c.l.b16 %v2528
        %v2569 = vunpack.c.l.b16 %v2529
        %v2570 = vpack.c.b16 %v2555, %v2554
        %v2571 = vpack.c.b16 %v2557, %v2556
        %v2572 = vpack.c.b16 %v2559, %v2558
        %v2573 = vpack.c.b16 %v2561, %v2560
        %v2574 = vpack.c.b16 %v2563, %v2562
        %v2575 = vpack.c.b16 %v2565, %v2564
        %v2576 = vpack.c.b16 %v2567, %v2566
        %v2577 = vpack.c.b16 %v2569, %v2568
        %2586 = vmatprep.subr.bf16.mxu0 0
        %2587 = vmatpush1.bf16.msra.mxu0 %v2570
        %2588 = vmatprep.subr.bf16.mxu0 0
        %2589 = vmatpush1.bf16.msra.mxu0 %v2571
        %2590 = vmatprep.subr.bf16.mxu0 0
        %2591 = vmatpush1.bf16.msra.mxu0 %v2572
        %2592 = vmatprep.subr.bf16.mxu0 0
        %2593 = vmatpush1.bf16.msra.mxu0 %v2573
        %2594 = vmatprep.subr.bf16.mxu0 0
        %2595 = vmatpush1.bf16.msra.mxu0 %v2574
        %2596 = vmatprep.subr.bf16.mxu0 0
        %2597 = vmatpush1.bf16.msra.mxu0 %v2575
        %2598 = vmatprep.subr.bf16.mxu0 0
        %2599 = vmatpush1.bf16.msra.mxu0 %v2576
        %2600 = vmatprep.subr.bf16.mxu0 0
        %2601 = vmatpush1.bf16.msra.mxu0 %v2577
        %2602 = vmatprep.subr.bf16.mxu0 0
        %2603 = vmatpush1.bf16.msra.mxu0 0
        %2604 = vmatprep.subr.bf16.mxu0 0
        %2605 = vmatpush1.bf16.msra.mxu0 0
        %2606 = vmatprep.subr.bf16.mxu0 0
        %2607 = vmatpush1.bf16.msra.mxu0 0
        %2608 = vmatprep.subr.bf16.mxu0 0
        %2609 = vmatpush1.bf16.msra.mxu0 0
        %2610 = vmatprep.subr.bf16.mxu0 0
        %2611 = vmatpush1.bf16.msra.mxu0 0
        %2612 = vmatprep.subr.bf16.mxu0 0
        %2613 = vmatpush1.bf16.msra.mxu0 0
        %2614 = vmatprep.subr.bf16.mxu0 0
        %2615 = vmatpush1.bf16.msra.mxu0 0
        %2616 = vmatprep.subr.bf16.mxu0 0
        %2617 = vmatpush1.bf16.msra.mxu0 0
        %2618 = vmatprep.mubr.bf16.mxu0 0
        %2619 = vmatmul.mubr.bf16.gmra.mrb[0].mxu0 %v2530
        %v2620 = vpop.f32.mrb[0].mxu0
        %v2621 = vadd.f32 %v2536, %v2620
        %v2622 = vpop.f32.mrb[0].mxu0
        %v2623 = vpop.f32.mrb[0].mxu0
        %v2624 = vadd.f32 %v2536, %v2623
        %v2625 = vpop.f32.mrb[0].mxu0
        %2626 = vdwg.mxu0
        %v2627 = vadd.f32 %v2621, %v2184
        %v2628 = vadd.f32 %v2624, %v2185
        %v2629 = vld [vmem:[#allocation32] sm:$0x1]
        %v2630 = vld [vmem:[#allocation33] sm:$0x1]
        %2631 = vadd.xlane.f32.xlu0 %v2627
        %v2632 = vpop.xlane.xlu0 %2631
        %2633 = vadd.xlane.f32.xlu0 %v2628
        %v2634 = vpop.xlane.xlu0 %2633
        %v2635 = vmul.f32 %v2632, %v1441
        %v2636 = vmul.f32 %v2634, %v1441
        %v2637 = vsub.f32 %v2627, %v2635
        %v2638 = vsub.f32 %v2628, %v2636
        %v2639 = vmul.f32 %v2637, %v2637
        %v2640 = vmul.f32 %v2638, %v2638
        %2641 = vadd.xlane.f32.xlu0 %v2639
        %v2642 = vpop.xlane.xlu0 %2641
        %2643 = vadd.xlane.f32.xlu0 %v2640
        %v2644 = vpop.xlane.xlu0 %2643
        %v2645 = vmul.f32 %v2642, %v1441
        %v2646 = vmul.f32 %v2644, %v1441
        %v2647 = vadd.f32 %v2645, 1e-05
        %v2648 = vadd.f32 %v2646, 1e-05
        %v2649 = vrsqrt.pop %v2647
        %v2650 = vrsqrt.pop %v2648
        %v2651 = vmul.f32 %v2637, %v2649
        %v2652 = vmul.f32 %v2638, %v2650
        %v2654 = vlaneseq
        %v2655 = vshrl.u32 %v2654, 7
        %v2656 = vsub.s32 0, %v2655
        %v2657 = vrot.slane %v2629, %v2656
        %v2659 = vmul.f32 %v2651, %v2657
        %v2660 = vmul.f32 %v2652, %v2657
        %v2662 = vlaneseq
        %v2663 = vshrl.u32 %v2662, 7
        %v2664 = vsub.s32 0, %v2663
        %v2665 = vrot.slane %v2630, %v2664
        %v2667 = vadd.f32 %v2659, %v2665
        %v2668 = vadd.f32 %v2660, %v2665
        %v2669 = vld [vmem:[#allocation35] sm:$0xff]
        %v2670 = vld [vmem:[#allocation35 + $0x8] sm:$0xf]
        %v2671 = vld [vmem:[#allocation35 + $0xc] sm:$0xff]
        %v2672 = vld [vmem:[#allocation35 + $0x14] sm:$0xf]
        %v2673 = vld [vmem:[#allocation35 + $0x18] sm:$0xff]
        %v2674 = vld [vmem:[#allocation35 + $0x20] sm:$0xf]
        %v2675 = vld [vmem:[#allocation35 + $0x24] sm:$0xff]
        %v2676 = vld [vmem:[#allocation35 + $0x2c] sm:$0xf]
        %v2677 = vld [vmem:[#allocation35 + $0x30] sm:$0xff]
        %v2678 = vld [vmem:[#allocation35 + $0x38] sm:$0xf]
        %v2679 = vld [vmem:[#allocation35 + $0x3c] sm:$0xff]
        %v2680 = vld [vmem:[#allocation35 + $0x44] sm:$0xf]
        %v2681 = vld [vmem:[#allocation35 + $0x48] sm:$0xff]
        %v2682 = vld [vmem:[#allocation35 + $0x50] sm:$0xf]
        %v2683 = vld [vmem:[#allocation35 + $0x54] sm:$0xff]
        %v2684 = vld [vmem:[#allocation35 + $0x5c] sm:$0xf]
        %v2685 = vld [vmem:[#allocation35 + $0x60] sm:$0xff]
        %v2686 = vld [vmem:[#allocation35 + $0x68] sm:$0xf]
        %v2687 = vld [vmem:[#allocation35 + $0x6c] sm:$0xff]
        %v2688 = vld [vmem:[#allocation35 + $0x74] sm:$0xf]
        %v2689 = vld [vmem:[#allocation35 + $0x78] sm:$0xff]
        %v2690 = vld [vmem:[#allocation35 + $0x80] sm:$0xf]
        %v2691 = vld [vmem:[#allocation35 + $0x84] sm:$0xff]
        %v2692 = vld [vmem:[#allocation35 + $0x8c] sm:$0xf]
        %v2693 = vld [vmem:[#allocation35 + $0x90] sm:$0xff]
        %v2694 = vld [vmem:[#allocation35 + $0x98] sm:$0xf]
        %v2695 = vld [vmem:[#allocation35 + $0x9c] sm:$0xff]
        %v2696 = vld [vmem:[#allocation35 + $0xa4] sm:$0xf]
        %v2697 = vld [vmem:[#allocation35 + $0xa8] sm:$0xff]
        %v2698 = vld [vmem:[#allocation35 + $0xb0] sm:$0xf]
        %v2699 = vld [vmem:[#allocation35 + $0xb4] sm:$0xff]
        %v2700 = vld [vmem:[#allocation35 + $0xbc] sm:$0xf]
        %v2701 = vpack.c.bf16 %v2668, %v2667
        %v2702 = vld [vmem:[#allocation36] sm:$0x7]
        %v2704 = vlaneseq
        %v2705 = vshrl.u32 %v2704, 7
        %v2706 = vsub.s32 0, %v2705
        %v2707 = vrot.slane %v2702, %v2706
        %v2708 = vlaneseq
        %v2709 = vshrl.u32 %v2708, 7
        %v2710 = vsub.s32 1, %v2709
        %v2711 = vrot.slane %v2702, %v2710
        %v2712 = vlaneseq
        %v2713 = vshrl.u32 %v2712, 7
        %v2714 = vsub.s32 2, %v2713
        %v2715 = vrot.slane %v2702, %v2714
        %v2751 = vunpack.c.l.b16 %v2669
        %v2752 = vunpack.c.h.b16 %v2669
        %v2753 = vunpack.c.l.b16 %v2670
        %v2754 = vunpack.c.l.b16 %v2671
        %v2755 = vunpack.c.h.b16 %v2671
        %v2756 = vunpack.c.l.b16 %v2672
        %v2757 = vunpack.c.l.b16 %v2673
        %v2758 = vunpack.c.h.b16 %v2673
        %v2759 = vunpack.c.l.b16 %v2674
        %v2760 = vunpack.c.l.b16 %v2675
        %v2761 = vunpack.c.h.b16 %v2675
        %v2762 = vunpack.c.l.b16 %v2676
        %v2763 = vunpack.c.l.b16 %v2677
        %v2764 = vunpack.c.h.b16 %v2677
        %v2765 = vunpack.c.l.b16 %v2678
        %v2766 = vunpack.c.l.b16 %v2679
        %v2767 = vunpack.c.h.b16 %v2679
        %v2768 = vunpack.c.l.b16 %v2680
        %v2769 = vunpack.c.l.b16 %v2681
        %v2770 = vunpack.c.h.b16 %v2681
        %v2771 = vunpack.c.l.b16 %v2682
        %v2772 = vunpack.c.l.b16 %v2683
        %v2773 = vunpack.c.h.b16 %v2683
        %v2774 = vunpack.c.l.b16 %v2684
        %v2775 = vunpack.c.l.b16 %v2685
        %v2776 = vunpack.c.h.b16 %v2685
        %v2777 = vunpack.c.l.b16 %v2686
        %v2778 = vunpack.c.l.b16 %v2687
        %v2779 = vunpack.c.h.b16 %v2687
        %v2780 = vunpack.c.l.b16 %v2688
        %v2781 = vunpack.c.l.b16 %v2689
        %v2782 = vunpack.c.h.b16 %v2689
        %v2783 = vunpack.c.l.b16 %v2690
        %v2784 = vunpack.c.l.b16 %v2691
        %v2785 = vunpack.c.h.b16 %v2691
        %v2786 = vunpack.c.l.b16 %v2692
        %v2787 = vunpack.c.l.b16 %v2693
        %v2788 = vunpack.c.h.b16 %v2693
        %v2789 = vunpack.c.l.b16 %v2694
        %v2790 = vunpack.c.l.b16 %v2695
        %v2791 = vunpack.c.h.b16 %v2695
        %v2792 = vunpack.c.l.b16 %v2696
        %v2793 = vunpack.c.l.b16 %v2697
        %v2794 = vunpack.c.h.b16 %v2697
        %v2795 = vunpack.c.l.b16 %v2698
        %v2796 = vunpack.c.l.b16 %v2699
        %v2797 = vunpack.c.h.b16 %v2699
        %v2798 = vunpack.c.l.b16 %v2700
        %v2799 = vpack.c.b16 %v2754, %v2751
        %v2800 = vpack.c.b16 %v2755, %v2752
        %v2801 = vpack.c.b16 %v2756, %v2753
        %v2802 = vpack.c.b16 %v2760, %v2757
        %v2803 = vpack.c.b16 %v2761, %v2758
        %v2804 = vpack.c.b16 %v2762, %v2759
        %v2805 = vpack.c.b16 %v2766, %v2763
        %v2806 = vpack.c.b16 %v2767, %v2764
        %v2807 = vpack.c.b16 %v2768, %v2765
        %v2808 = vpack.c.b16 %v2772, %v2769
        %v2809 = vpack.c.b16 %v2773, %v2770
        %v2810 = vpack.c.b16 %v2774, %v2771
        %v2811 = vpack.c.b16 %v2778, %v2775
        %v2812 = vpack.c.b16 %v2779, %v2776
        %v2813 = vpack.c.b16 %v2780, %v2777
        %v2814 = vpack.c.b16 %v2784, %v2781
        %v2815 = vpack.c.b16 %v2785, %v2782
        %v2816 = vpack.c.b16 %v2786, %v2783
        %v2817 = vpack.c.b16 %v2790, %v2787
        %v2818 = vpack.c.b16 %v2791, %v2788
        %v2819 = vpack.c.b16 %v2792, %v2789
        %v2820 = vpack.c.b16 %v2796, %v2793
        %v2821 = vpack.c.b16 %v2797, %v2794
        %v2822 = vpack.c.b16 %v2798, %v2795
        %2847 = vmatprep.subr.bf16.mxu0 %v2800
        %2848 = vmatpush1.bf16.msra.mxu0 %v2799
        %2849 = vmatprep.subr.bf16.mxu0 %v2803
        %2850 = vmatpush1.bf16.msra.mxu0 %v2802
        %2851 = vmatprep.subr.bf16.mxu0 %v2806
        %2852 = vmatpush1.bf16.msra.mxu0 %v2805
        %2853 = vmatprep.subr.bf16.mxu0 %v2809
        %2854 = vmatpush1.bf16.msra.mxu0 %v2808
        %2855 = vmatprep.subr.bf16.mxu0 %v2812
        %2856 = vmatpush1.bf16.msra.mxu0 %v2811
        %2857 = vmatprep.subr.bf16.mxu0 %v2815
        %2858 = vmatpush1.bf16.msra.mxu0 %v2814
        %2859 = vmatprep.subr.bf16.mxu0 %v2818
        %2860 = vmatpush1.bf16.msra.mxu0 %v2817
        %2861 = vmatprep.subr.bf16.mxu0 %v2821
        %2862 = vmatpush1.bf16.msra.mxu0 %v2820
        %2863 = vmatprep.subr.bf16.mxu0 0
        %2864 = vmatpush1.bf16.msra.mxu0 0
        %2865 = vmatprep.subr.bf16.mxu0 0
        %2866 = vmatpush1.bf16.msra.mxu0 0
        %2867 = vmatprep.subr.bf16.mxu0 0
        %2868 = vmatpush1.bf16.msra.mxu0 0
        %2869 = vmatprep.subr.bf16.mxu0 0
        %2870 = vmatpush1.bf16.msra.mxu0 0
        %2871 = vmatprep.subr.bf16.mxu0 0
        %2872 = vmatpush1.bf16.msra.mxu0 0
        %2873 = vmatprep.subr.bf16.mxu0 0
        %2874 = vmatpush1.bf16.msra.mxu0 0
        %2875 = vmatprep.subr.bf16.mxu0 0
        %2876 = vmatpush1.bf16.msra.mxu0 0
        %2877 = vmatprep.subr.bf16.mxu0 0
        %2878 = vmatpush1.bf16.msra.mxu0 0
        %2879 = vmatprep.mubr.bf16.mxu0 0
        %2880 = vmatmul.mubr.bf16.gmra.mrb[0].mxu0 %v2701
        %v2881 = vpop.f32.mrb[0].mxu0
        %v2882 = vadd.f32 %v2707, %v2881
        %v2883 = vpop.f32.mrb[0].mxu0
        %v2884 = vadd.f32 %v2711, %v2883
        %v2885 = vpop.f32.mrb[0].mxu0
        %v2886 = vadd.f32 %v2707, %v2885
        %v2887 = vpop.f32.mrb[0].mxu0
        %v2888 = vadd.f32 %v2711, %v2887
        %2889 = vdwg.mxu0
        %2890 = vmatprep.subr.bf16.mxu0 0
        %2891 = vmatpush1.bf16.msra.mxu0 %v2801
        %2892 = vmatprep.subr.bf16.mxu0 0
        %2893 = vmatpush1.bf16.msra.mxu0 %v2804
        %2894 = vmatprep.subr.bf16.mxu0 0
        %2895 = vmatpush1.bf16.msra.mxu0 %v2807
        %2896 = vmatprep.subr.bf16.mxu0 0
        %2897 = vmatpush1.bf16.msra.mxu0 %v2810
        %2898 = vmatprep.subr.bf16.mxu0 0
        %2899 = vmatpush1.bf16.msra.mxu0 %v2813
        %2900 = vmatprep.subr.bf16.mxu0 0
        %2901 = vmatpush1.bf16.msra.mxu0 %v2816
        %2902 = vmatprep.subr.bf16.mxu0 0
        %2903 = vmatpush1.bf16.msra.mxu0 %v2819
        %2904 = vmatprep.subr.bf16.mxu0 0
        %2905 = vmatpush1.bf16.msra.mxu0 %v2822
        %2906 = vmatprep.subr.bf16.mxu0 0
        %2907 = vmatpush1.bf16.msra.mxu0 0
        %2908 = vmatprep.subr.bf16.mxu0 0
        %2909 = vmatpush1.bf16.msra.mxu0 0
        %2910 = vmatprep.subr.bf16.mxu0 0
        %2911 = vmatpush1.bf16.msra.mxu0 0
        %2912 = vmatprep.subr.bf16.mxu0 0
        %2913 = vmatpush1.bf16.msra.mxu0 0
        %2914 = vmatprep.subr.bf16.mxu0 0
        %2915 = vmatpush1.bf16.msra.mxu0 0
        %2916 = vmatprep.subr.bf16.mxu0 0
        %2917 = vmatpush1.bf16.msra.mxu0 0
        %2918 = vmatprep.subr.bf16.mxu0 0
        %2919 = vmatpush1.bf16.msra.mxu0 0
        %2920 = vmatprep.subr.bf16.mxu0 0
        %2921 = vmatpush1.bf16.msra.mxu0 0
        %2922 = vmatprep.mubr.bf16.mxu0 0
        %2923 = vmatmul.mubr.bf16.gmra.mrb[0].mxu0 %v2701
        %v2924 = vpop.f32.mrb[0].mxu0
        %v2925 = vadd.f32 %v2715, %v2924
        %v2926 = vpop.f32.mrb[0].mxu0
        %v2927 = vpop.f32.mrb[0].mxu0
        %v2928 = vadd.f32 %v2715, %v2927
        %v2929 = vpop.f32.mrb[0].mxu0
        %2930 = vdwg.mxu0
        %v2931 = vpack.c.bf16 %v2886, %v2882
        %2933 = vrot.lane.b32.xlu0 %v2931, 96
        %v2934 = vpop.permute.xlu0 %2933
        %2935 = vrot.lane.b32.xlu0 %v2931, 64
        %v2936 = vpop.permute.xlu0 %2935
        %2937 = vrot.lane.b32.xlu0 %v2931, 32
        %v2938 = vpop.permute.xlu0 %2937
        %v2939 = vpack.c.bf16 %v2888, %v2884
        %2941 = vrot.lane.b32.xlu0 %v2939, 96
        %v2942 = vpop.permute.xlu0 %2941
        %2943 = vrot.lane.b32.xlu0 %v2939, 64
        %v2944 = vpop.permute.xlu0 %2943
        %2945 = vrot.lane.b32.xlu0 %v2939, 32
        %v2946 = vpop.permute.xlu0 %2945
        %v2947 = vpack.c.bf16 %v2928, %v2925
        %2949 = vrot.lane.b32.xlu0 %v2947, 96
        %v2950 = vpop.permute.xlu0 %2949
        %2952 = vrot.lane.b32.xlu0 %v2947, 64
        %v2953 = vpop.permute.xlu0 %2952
        %2955 = vrot.lane.b32.xlu0 %v2947, 32
        %v2956 = vpop.permute.xlu0 %2955
        %v2958 = vld [vmem:[%s1225] sm:$0x1]
        %v2959 = vsub.f32 1.0, %v2958
        %v2960 = vmul.f32 %v2959, -1e+30
        %vm2961 = vcmask 261120
        %v2963 = vsel %vm2961, %v2931, 0
        %v2966 = vsel %vm2961, %v2939, 0
        %2968 = vmatprep.subr.bf16.mxu0 0
        %2969 = vmatpush1.bf16.xpose.msra.mxu0 %v2966
        %2970 = vmatprep.subr.bf16.mxu0 0
        %2971 = vmatpush1.bf16.xpose.msra.mxu0 0
        %2972 = vmatprep.subr.bf16.mxu0 0
        %2973 = vmatpush1.bf16.xpose.msra.mxu0 0
        %2974 = vmatprep.subr.bf16.mxu0 0
        %2975 = vmatpush1.bf16.xpose.msra.mxu0 0
        %2976 = vmatprep.subr.bf16.mxu0 0
        %2977 = vmatpush1.bf16.xpose.msra.mxu0 0
        %2978 = vmatprep.subr.bf16.mxu0 0
        %2979 = vmatpush1.bf16.xpose.msra.mxu0 0
        %2980 = vmatprep.subr.bf16.mxu0 0
        %2981 = vmatpush1.bf16.xpose.msra.mxu0 0
        %2982 = vmatprep.subr.bf16.mxu0 0
        %2983 = vmatpush1.bf16.xpose.msra.mxu0 0
        %2984 = vmatprep.subr.bf16.mxu0 0
        %2985 = vmatpush1.bf16.xpose.msra.mxu0 0
        %2986 = vmatprep.subr.bf16.mxu0 0
        %2987 = vmatpush1.bf16.xpose.msra.mxu0 0
        %2988 = vmatprep.subr.bf16.mxu0 0
        %2989 = vmatpush1.bf16.xpose.msra.mxu0 0
        %2990 = vmatprep.subr.bf16.mxu0 0
        %2991 = vmatpush1.bf16.xpose.msra.mxu0 0
        %2992 = vmatprep.subr.bf16.mxu0 0
        %2993 = vmatpush1.bf16.xpose.msra.mxu0 0
        %2994 = vmatprep.subr.bf16.mxu0 0
        %2995 = vmatpush1.bf16.xpose.msra.mxu0 0
        %2996 = vmatprep.subr.bf16.mxu0 0
        %2997 = vmatpush1.bf16.xpose.msra.mxu0 0
        %2998 = vmatprep.subr.bf16.mxu0 0
        %2999 = vmatpush1.bf16.xpose.msra.mxu0 0
        %3000 = vmatprep.mubr.bf16.mxu0 0
        %3001 = vmatmul.mubr.bf16.gmra.mrb[0].mxu0 %v2963
        %v3002 = vpop.f32.mrb[0].mxu0
        %v3003 = vadd.f32 0.0, %v3002
        %v3004 = vpop.f32.mrb[0].mxu0
        %v3005 = vpop.f32.mrb[0].mxu0
        %v3006 = vadd.f32 0.0, %v3005
        %v3007 = vpop.f32.mrb[0].mxu0
        %3008 = vdwg.mxu0
        %v3010 = vsel %vm2961, %v2934, 0
        %v3013 = vsel %vm2961, %v2942, 0
        %3015 = vmatprep.subr.bf16.mxu0 0
        %3016 = vmatpush1.bf16.xpose.msra.mxu0 %v3013
        %3017 = vmatprep.subr.bf16.mxu0 0
        %3018 = vmatpush1.bf16.xpose.msra.mxu0 0
        %3019 = vmatprep.subr.bf16.mxu0 0
        %3020 = vmatpush1.bf16.xpose.msra.mxu0 0
        %3021 = vmatprep.subr.bf16.mxu0 0
        %3022 = vmatpush1.bf16.xpose.msra.mxu0 0
        %3023 = vmatprep.subr.bf16.mxu0 0
        %3024 = vmatpush1.bf16.xpose.msra.mxu0 0
        %3025 = vmatprep.subr.bf16.mxu0 0
        %3026 = vmatpush1.bf16.xpose.msra.mxu0 0
        %3027 = vmatprep.subr.bf16.mxu0 0
        %3028 = vmatpush1.bf16.xpose.msra.mxu0 0
        %3029 = vmatprep.subr.bf16.mxu0 0
        %3030 = vmatpush1.bf16.xpose.msra.mxu0 0
        %3031 = vmatprep.subr.bf16.mxu0 0
        %3032 = vmatpush1.bf16.xpose.msra.mxu0 0
        %3033 = vmatprep.subr.bf16.mxu0 0
        %3034 = vmatpush1.bf16.xpose.msra.mxu0 0
        %3035 = vmatprep.subr.bf16.mxu0 0
        %3036 = vmatpush1.bf16.xpose.msra.mxu0 0
        %3037 = vmatprep.subr.bf16.mxu0 0
        %3038 = vmatpush1.bf16.xpose.msra.mxu0 0
        %3039 = vmatprep.subr.bf16.mxu0 0
        %3040 = vmatpush1.bf16.xpose.msra.mxu0 0
        %3041 = vmatprep.subr.bf16.mxu0 0
        %3042 = vmatpush1.bf16.xpose.msra.mxu0 0
        %3043 = vmatprep.subr.bf16.mxu0 0
        %3044 = vmatpush1.bf16.xpose.msra.mxu0 0
        %3045 = vmatprep.subr.bf16.mxu0 0
        %3046 = vmatpush1.bf16.xpose.msra.mxu0 0
        %3047 = vmatprep.mubr.bf16.mxu0 0
        %3048 = vmatmul.mubr.bf16.gmra.mrb[0].mxu0 %v3010
        %v3049 = vpop.f32.mrb[0].mxu0
        %v3050 = vadd.f32 0.0, %v3049
        %v3051 = vpop.f32.mrb[0].mxu0
        %v3052 = vpop.f32.mrb[0].mxu0
        %v3053 = vadd.f32 0.0, %v3052
        %v3054 = vpop.f32.mrb[0].mxu0
        %3055 = vdwg.mxu0
        %v3057 = vsel %vm2961, %v2936, 0
        %v3060 = vsel %vm2961, %v2944, 0
        %3062 = vmatprep.subr.bf16.mxu0 0
        %3063 = vmatpush1.bf16.xpose.msra.mxu0 %v3060
        %3064 = vmatprep.subr.bf16.mxu0 0
        %3065 = vmatpush1.bf16.xpose.msra.mxu0 0
        %3066 = vmatprep.subr.bf16.mxu0 0
        %3067 = vmatpush1.bf16.xpose.msra.mxu0 0
        %3068 = vmatprep.subr.bf16.mxu0 0
        %3069 = vmatpush1.bf16.xpose.msra.mxu0 0
        %3070 = vmatprep.subr.bf16.mxu0 0
        %3071 = vmatpush1.bf16.xpose.msra.mxu0 0
        %3072 = vmatprep.subr.bf16.mxu0 0
        %3073 = vmatpush1.bf16.xpose.msra.mxu0 0
        %3074 = vmatprep.subr.bf16.mxu0 0
        %3075 = vmatpush1.bf16.xpose.msra.mxu0 0
        %3076 = vmatprep.subr.bf16.mxu0 0
        %3077 = vmatpush1.bf16.xpose.msra.mxu0 0
        %3078 = vmatprep.subr.bf16.mxu0 0
        %3079 = vmatpush1.bf16.xpose.msra.mxu0 0
        %3080 = vmatprep.subr.bf16.mxu0 0
        %3081 = vmatpush1.bf16.xpose.msra.mxu0 0
        %3082 = vmatprep.subr.bf16.mxu0 0
        %3083 = vmatpush1.bf16.xpose.msra.mxu0 0
        %3084 = vmatprep.subr.bf16.mxu0 0
        %3085 = vmatpush1.bf16.xpose.msra.mxu0 0
        %3086 = vmatprep.subr.bf16.mxu0 0
        %3087 = vmatpush1.bf16.xpose.msra.mxu0 0
        %3088 = vmatprep.subr.bf16.mxu0 0
        %3089 = vmatpush1.bf16.xpose.msra.mxu0 0
        %3090 = vmatprep.subr.bf16.mxu0 0
        %3091 = vmatpush1.bf16.xpose.msra.mxu0 0
        %3092 = vmatprep.subr.bf16.mxu0 0
        %3093 = vmatpush1.bf16.xpose.msra.mxu0 0
        %3094 = vmatprep.mubr.bf16.mxu0 0
        %3095 = vmatmul.mubr.bf16.gmra.mrb[0].mxu0 %v3057
        %v3096 = vpop.f32.mrb[0].mxu0
        %v3097 = vadd.f32 0.0, %v3096
        %v3098 = vpop.f32.mrb[0].mxu0
        %v3099 = vpop.f32.mrb[0].mxu0
        %v3100 = vadd.f32 0.0, %v3099
        %v3101 = vpop.f32.mrb[0].mxu0
        %3102 = vdwg.mxu0
        %v3104 = vsel %vm2961, %v2938, 0
        %v3107 = vsel %vm2961, %v2946, 0
        %3109 = vmatprep.subr.bf16.mxu0 0
        %3110 = vmatpush1.bf16.xpose.msra.mxu0 %v3107
        %3111 = vmatprep.subr.bf16.mxu0 0
        %3112 = vmatpush1.bf16.xpose.msra.mxu0 0
        %3113 = vmatprep.subr.bf16.mxu0 0
        %3114 = vmatpush1.bf16.xpose.msra.mxu0 0
        %3115 = vmatprep.subr.bf16.mxu0 0
        %3116 = vmatpush1.bf16.xpose.msra.mxu0 0
        %3117 = vmatprep.subr.bf16.mxu0 0
        %3118 = vmatpush1.bf16.xpose.msra.mxu0 0
        %3119 = vmatprep.subr.bf16.mxu0 0
        %3120 = vmatpush1.bf16.xpose.msra.mxu0 0
        %3121 = vmatprep.subr.bf16.mxu0 0
        %3122 = vmatpush1.bf16.xpose.msra.mxu0 0
        %3123 = vmatprep.subr.bf16.mxu0 0
        %3124 = vmatpush1.bf16.xpose.msra.mxu0 0
        %3125 = vmatprep.subr.bf16.mxu0 0
        %3126 = vmatpush1.bf16.xpose.msra.mxu0 0
        %3127 = vmatprep.subr.bf16.mxu0 0
        %3128 = vmatpush1.bf16.xpose.msra.mxu0 0
        %3129 = vmatprep.subr.bf16.mxu0 0
        %3130 = vmatpush1.bf16.xpose.msra.mxu0 0
        %3131 = vmatprep.subr.bf16.mxu0 0
        %3132 = vmatpush1.bf16.xpose.msra.mxu0 0
        %3133 = vmatprep.subr.bf16.mxu0 0
        %3134 = vmatpush1.bf16.xpose.msra.mxu0 0
        %3135 = vmatprep.subr.bf16.mxu0 0
        %3136 = vmatpush1.bf16.xpose.msra.mxu0 0
        %3137 = vmatprep.subr.bf16.mxu0 0
        %3138 = vmatpush1.bf16.xpose.msra.mxu0 0
        %3139 = vmatprep.subr.bf16.mxu0 0
        %3140 = vmatpush1.bf16.xpose.msra.mxu0 0
        %3141 = vmatprep.mubr.bf16.mxu0 0
        %3142 = vmatmul.mubr.bf16.gmra.mrb[0].mxu0 %v3104
        %v3143 = vpop.f32.mrb[0].mxu0
        %v3144 = vadd.f32 0.0, %v3143
        %v3145 = vpop.f32.mrb[0].mxu0
        %v3146 = vpop.f32.mrb[0].mxu0
        %v3147 = vadd.f32 0.0, %v3146
        %v3148 = vpop.f32.mrb[0].mxu0
        %3149 = vdwg.mxu0
        %v3150 = vmul.f32 %v3003, 0.17677669
        %v3151 = vmul.f32 %v3006, 0.17677669
        %v3152 = vmul.f32 %v3050, 0.17677669
        %v3153 = vmul.f32 %v3053, 0.17677669
        %v3154 = vmul.f32 %v3097, 0.17677669
        %v3155 = vmul.f32 %v3100, 0.17677669
        %v3156 = vmul.f32 %v3144, 0.17677669
        %v3157 = vmul.f32 %v3147, 0.17677669
        %v3159 = vlaneseq
        %v3160 = vshrl.u32 %v3159, 7
        %v3161 = vsub.s32 0, %v3160
        %v3162 = vrot.slane %v2960, %v3161
        %v3164 = vadd.f32 %v3150, %v3162
        %v3165 = vadd.f32 %v3151, %v3162
        %v3166 = vadd.f32 %v3152, %v3162
        %v3167 = vadd.f32 %v3153, %v3162
        %v3168 = vadd.f32 %v3154, %v3162
        %v3169 = vadd.f32 %v3155, %v3162
        %v3170 = vadd.f32 %v3156, %v3162
        %v3171 = vadd.f32 %v3157, %v3162
        %vm3172 = vcmask 130048
        %v3173 = vsel %vm3172, %v3164, -inf
        %3174 = vmax.xlane.f32.xlu0 %v3173
        %v3175 = vpop.xlane.xlu0 %3174
        %v3176 = vsel %vm3172, %v3165, -inf
        %3177 = vmax.xlane.f32.xlu0 %v3176
        %v3178 = vpop.xlane.xlu0 %3177
        %v3179 = vsel %vm3172, %v3166, -inf
        %3180 = vmax.xlane.f32.xlu0 %v3179
        %v3181 = vpop.xlane.xlu0 %3180
        %v3182 = vsel %vm3172, %v3167, -inf
        %3183 = vmax.xlane.f32.xlu0 %v3182
        %v3184 = vpop.xlane.xlu0 %3183
        %v3185 = vsel %vm3172, %v3168, -inf
        %3186 = vmax.xlane.f32.xlu0 %v3185
        %v3187 = vpop.xlane.xlu0 %3186
        %v3188 = vsel %vm3172, %v3169, -inf
        %3189 = vmax.xlane.f32.xlu0 %v3188
        %v3190 = vpop.xlane.xlu0 %3189
        %v3191 = vsel %vm3172, %v3170, -inf
        %3192 = vmax.xlane.f32.xlu0 %v3191
        %v3193 = vpop.xlane.xlu0 %3192
        %v3194 = vsel %vm3172, %v3171, -inf
        %3195 = vmax.xlane.f32.xlu0 %v3194
        %v3196 = vpop.xlane.xlu0 %3195
        %v3197 = vsub.f32 -inf, %v3175
        %v3198 = vsub.f32 -inf, %v3178
        %v3199 = vsub.f32 -inf, %v3181
        %v3200 = vsub.f32 -inf, %v3184
        %v3201 = vsub.f32 -inf, %v3187
        %v3202 = vsub.f32 -inf, %v3190
        %v3203 = vsub.f32 -inf, %v3193
        %v3204 = vsub.f32 -inf, %v3196
        %v3205 = vmul.f32 %v3197, 1.442695
        %v3206 = vpow.pop %v3205
        %v3207 = vmul.f32 %v3198, 1.442695
        %v3208 = vpow.pop %v3207
        %v3209 = vmul.f32 %v3199, 1.442695
        %v3210 = vpow.pop %v3209
        %v3211 = vmul.f32 %v3200, 1.442695
        %v3212 = vpow.pop %v3211
        %v3213 = vmul.f32 %v3201, 1.442695
        %v3214 = vpow.pop %v3213
        %v3215 = vmul.f32 %v3202, 1.442695
        %v3216 = vpow.pop %v3215
        %v3217 = vmul.f32 %v3203, 1.442695
        %v3218 = vpow.pop %v3217
        %v3219 = vmul.f32 %v3204, 1.442695
        %v3220 = vpow.pop %v3219
        %v3221 = vsub.f32 %v3164, %v3175
        %v3222 = vsub.f32 %v3165, %v3178
        %v3223 = vsub.f32 %v3166, %v3181
        %v3224 = vsub.f32 %v3167, %v3184
        %v3225 = vsub.f32 %v3168, %v3187
        %v3226 = vsub.f32 %v3169, %v3190
        %v3227 = vsub.f32 %v3170, %v3193
        %v3228 = vsub.f32 %v3171, %v3196
        %v3229 = vmul.f32 %v3221, 1.442695
        %v3230 = vpow.pop %v3229
        %v3231 = vmul.f32 %v3222, 1.442695
        %v3232 = vpow.pop %v3231
        %v3233 = vmul.f32 %v3223, 1.442695
        %v3234 = vpow.pop %v3233
        %v3235 = vmul.f32 %v3224, 1.442695
        %v3236 = vpow.pop %v3235
        %v3237 = vmul.f32 %v3225, 1.442695
        %v3238 = vpow.pop %v3237
        %v3239 = vmul.f32 %v3226, 1.442695
        %v3240 = vpow.pop %v3239
        %v3241 = vmul.f32 %v3227, 1.442695
        %v3242 = vpow.pop %v3241
        %v3243 = vmul.f32 %v3228, 1.442695
        %v3244 = vpow.pop %v3243
        %v3245 = vmul.f32 %v3206, 0.0
        %v3246 = vmul.f32 %v3208, 0.0
        %v3247 = vmul.f32 %v3210, 0.0
        %v3248 = vmul.f32 %v3212, 0.0
        %v3249 = vmul.f32 %v3214, 0.0
        %v3250 = vmul.f32 %v3216, 0.0
        %v3251 = vmul.f32 %v3218, 0.0
        %v3252 = vmul.f32 %v3220, 0.0
        %v3253 = vsel %vm3172, %v3230, 0.0
        %3254 = vadd.xlane.f32.xlu0 %v3253
        %v3255 = vpop.xlane.xlu0 %3254
        %v3256 = vsel %vm3172, %v3232, 0.0
        %3257 = vadd.xlane.f32.xlu0 %v3256
        %v3258 = vpop.xlane.xlu0 %3257
        %v3259 = vsel %vm3172, %v3234, 0.0
        %3260 = vadd.xlane.f32.xlu0 %v3259
        %v3261 = vpop.xlane.xlu0 %3260
        %v3262 = vsel %vm3172, %v3236, 0.0
        %3263 = vadd.xlane.f32.xlu0 %v3262
        %v3264 = vpop.xlane.xlu0 %3263
        %v3265 = vsel %vm3172, %v3238, 0.0
        %3266 = vadd.xlane.f32.xlu0 %v3265
        %v3267 = vpop.xlane.xlu0 %3266
        %v3268 = vsel %vm3172, %v3240, 0.0
        %3269 = vadd.xlane.f32.xlu0 %v3268
        %v3270 = vpop.xlane.xlu0 %3269
        %v3271 = vsel %vm3172, %v3242, 0.0
        %3272 = vadd.xlane.f32.xlu0 %v3271
        %v3273 = vpop.xlane.xlu0 %3272
        %v3274 = vsel %vm3172, %v3244, 0.0
        %3275 = vadd.xlane.f32.xlu0 %v3274
        %v3276 = vpop.xlane.xlu0 %3275
        %v3277 = vadd.f32 %v3245, %v3255
        %v3278 = vadd.f32 %v3246, %v3258
        %v3279 = vadd.f32 %v3247, %v3261
        %v3280 = vadd.f32 %v3248, %v3264
        %v3281 = vadd.f32 %v3249, %v3267
        %v3282 = vadd.f32 %v3250, %v3270
        %v3283 = vadd.f32 %v3251, %v3273
        %v3284 = vadd.f32 %v3252, %v3276
        %v3285 = vpack.c.bf16 %v3232, %v3230
        %v3286 = vpack.c.bf16 %v3236, %v3234
        %v3287 = vpack.c.bf16 %v3240, %v3238
        %v3288 = vpack.c.bf16 %v3244, %v3242
        %v3290 = vsel %vm3172, %v3285, 0
        %3292 = vmatprep.subr.bf16.mxu0 0
        %3293 = vmatpush1.bf16.msra.mxu0 %v2947
        %3294 = vmatprep.subr.bf16.mxu0 0
        %3295 = vmatpush1.bf16.msra.mxu0 0
        %3296 = vmatprep.subr.bf16.mxu0 0
        %3297 = vmatpush1.bf16.msra.mxu0 0
        %3298 = vmatprep.subr.bf16.mxu0 0
        %3299 = vmatpush1.bf16.msra.mxu0 0
        %3300 = vmatprep.subr.bf16.mxu0 0
        %3301 = vmatpush1.bf16.msra.mxu0 0
        %3302 = vmatprep.subr.bf16.mxu0 0
        %3303 = vmatpush1.bf16.msra.mxu0 0
        %3304 = vmatprep.subr.bf16.mxu0 0
        %3305 = vmatpush1.bf16.msra.mxu0 0
        %3306 = vmatprep.subr.bf16.mxu0 0
        %3307 = vmatpush1.bf16.msra.mxu0 0
        %3308 = vmatprep.subr.bf16.mxu0 0
        %3309 = vmatpush1.bf16.msra.mxu0 0
        %3310 = vmatprep.subr.bf16.mxu0 0
        %3311 = vmatpush1.bf16.msra.mxu0 0
        %3312 = vmatprep.subr.bf16.mxu0 0
        %3313 = vmatpush1.bf16.msra.mxu0 0
        %3314 = vmatprep.subr.bf16.mxu0 0
        %3315 = vmatpush1.bf16.msra.mxu0 0
        %3316 = vmatprep.subr.bf16.mxu0 0
        %3317 = vmatpush1.bf16.msra.mxu0 0
        %3318 = vmatprep.subr.bf16.mxu0 0
        %3319 = vmatpush1.bf16.msra.mxu0 0
        %3320 = vmatprep.subr.bf16.mxu0 0
        %3321 = vmatpush1.bf16.msra.mxu0 0
        %3322 = vmatprep.subr.bf16.mxu0 0
        %3323 = vmatpush1.bf16.msra.mxu0 0
        %3324 = vmatprep.mubr.bf16.mxu0 0
        %3325 = vmatmul.mubr.bf16.gmra.mrb[0].mxu0 %v3290
        %v3326 = vpop.f32.mrb[0].mxu0
        %v3327 = vadd.f32 0.0, %v3326
        %v3328 = vpop.f32.mrb[0].mxu0
        %v3329 = vpop.f32.mrb[0].mxu0
        %v3330 = vadd.f32 0.0, %v3329
        %v3331 = vpop.f32.mrb[0].mxu0
        %3332 = vdwg.mxu0
        %v3334 = vsel %vm3172, %v3286, 0
        %3336 = vmatprep.subr.bf16.mxu0 0
        %3337 = vmatpush1.bf16.msra.mxu0 %v2950
        %3338 = vmatprep.subr.bf16.mxu0 0
        %3339 = vmatpush1.bf16.msra.mxu0 0
        %3340 = vmatprep.subr.bf16.mxu0 0
        %3341 = vmatpush1.bf16.msra.mxu0 0
        %3342 = vmatprep.subr.bf16.mxu0 0
        %3343 = vmatpush1.bf16.msra.mxu0 0
        %3344 = vmatprep.subr.bf16.mxu0 0
        %3345 = vmatpush1.bf16.msra.mxu0 0
        %3346 = vmatprep.subr.bf16.mxu0 0
        %3347 = vmatpush1.bf16.msra.mxu0 0
        %3348 = vmatprep.subr.bf16.mxu0 0
        %3349 = vmatpush1.bf16.msra.mxu0 0
        %3350 = vmatprep.subr.bf16.mxu0 0
        %3351 = vmatpush1.bf16.msra.mxu0 0
        %3352 = vmatprep.subr.bf16.mxu0 0
        %3353 = vmatpush1.bf16.msra.mxu0 0
        %3354 = vmatprep.subr.bf16.mxu0 0
        %3355 = vmatpush1.bf16.msra.mxu0 0
        %3356 = vmatprep.subr.bf16.mxu0 0
        %3357 = vmatpush1.bf16.msra.mxu0 0
        %3358 = vmatprep.subr.bf16.mxu0 0
        %3359 = vmatpush1.bf16.msra.mxu0 0
        %3360 = vmatprep.subr.bf16.mxu0 0
        %3361 = vmatpush1.bf16.msra.mxu0 0
        %3362 = vmatprep.subr.bf16.mxu0 0
        %3363 = vmatpush1.bf16.msra.mxu0 0
        %3364 = vmatprep.subr.bf16.mxu0 0
        %3365 = vmatpush1.bf16.msra.mxu0 0
        %3366 = vmatprep.subr.bf16.mxu0 0
        %3367 = vmatpush1.bf16.msra.mxu0 0
        %3368 = vmatprep.mubr.bf16.mxu0 0
        %3369 = vmatmul.mubr.bf16.gmra.mrb[0].mxu0 %v3334
        %v3370 = vpop.f32.mrb[0].mxu0
        %v3371 = vadd.f32 0.0, %v3370
        %v3372 = vpop.f32.mrb[0].mxu0
        %v3373 = vpop.f32.mrb[0].mxu0
        %v3374 = vadd.f32 0.0, %v3373
        %v3375 = vpop.f32.mrb[0].mxu0
        %3376 = vdwg.mxu0
        %v3378 = vsel %vm3172, %v3287, 0
        %3380 = vmatprep.subr.bf16.mxu0 0
        %3381 = vmatpush1.bf16.msra.mxu0 %v2953
        %3382 = vmatprep.subr.bf16.mxu0 0
        %3383 = vmatpush1.bf16.msra.mxu0 0
        %3384 = vmatprep.subr.bf16.mxu0 0
        %3385 = vmatpush1.bf16.msra.mxu0 0
        %3386 = vmatprep.subr.bf16.mxu0 0
        %3387 = vmatpush1.bf16.msra.mxu0 0
        %3388 = vmatprep.subr.bf16.mxu0 0
        %3389 = vmatpush1.bf16.msra.mxu0 0
        %3390 = vmatprep.subr.bf16.mxu0 0
        %3391 = vmatpush1.bf16.msra.mxu0 0
        %3392 = vmatprep.subr.bf16.mxu0 0
        %3393 = vmatpush1.bf16.msra.mxu0 0
        %3394 = vmatprep.subr.bf16.mxu0 0
        %3395 = vmatpush1.bf16.msra.mxu0 0
        %3396 = vmatprep.subr.bf16.mxu0 0
        %3397 = vmatpush1.bf16.msra.mxu0 0
        %3398 = vmatprep.subr.bf16.mxu0 0
        %3399 = vmatpush1.bf16.msra.mxu0 0
        %3400 = vmatprep.subr.bf16.mxu0 0
        %3401 = vmatpush1.bf16.msra.mxu0 0
        %3402 = vmatprep.subr.bf16.mxu0 0
        %3403 = vmatpush1.bf16.msra.mxu0 0
        %3404 = vmatprep.subr.bf16.mxu0 0
        %3405 = vmatpush1.bf16.msra.mxu0 0
        %3406 = vmatprep.subr.bf16.mxu0 0
        %3407 = vmatpush1.bf16.msra.mxu0 0
        %3408 = vmatprep.subr.bf16.mxu0 0
        %3409 = vmatpush1.bf16.msra.mxu0 0
        %3410 = vmatprep.subr.bf16.mxu0 0
        %3411 = vmatpush1.bf16.msra.mxu0 0
        %3412 = vmatprep.mubr.bf16.mxu0 0
        %3413 = vmatmul.mubr.bf16.gmra.mrb[0].mxu0 %v3378
        %v3414 = vpop.f32.mrb[0].mxu0
        %v3415 = vadd.f32 0.0, %v3414
        %v3416 = vpop.f32.mrb[0].mxu0
        %v3417 = vpop.f32.mrb[0].mxu0
        %v3418 = vadd.f32 0.0, %v3417
        %v3419 = vpop.f32.mrb[0].mxu0
        %3420 = vdwg.mxu0
        %v3422 = vsel %vm3172, %v3288, 0
        %3424 = vmatprep.subr.bf16.mxu0 0
        %3425 = vmatpush1.bf16.msra.mxu0 %v2956
        %3426 = vmatprep.subr.bf16.mxu0 0
        %3427 = vmatpush1.bf16.msra.mxu0 0
        %3428 = vmatprep.subr.bf16.mxu0 0
        %3429 = vmatpush1.bf16.msra.mxu0 0
        %3430 = vmatprep.subr.bf16.mxu0 0
        %3431 = vmatpush1.bf16.msra.mxu0 0
        %3432 = vmatprep.subr.bf16.mxu0 0
        %3433 = vmatpush1.bf16.msra.mxu0 0
        %3434 = vmatprep.subr.bf16.mxu0 0
        %3435 = vmatpush1.bf16.msra.mxu0 0
        %3436 = vmatprep.subr.bf16.mxu0 0
        %3437 = vmatpush1.bf16.msra.mxu0 0
        %3438 = vmatprep.subr.bf16.mxu0 0
        %3439 = vmatpush1.bf16.msra.mxu0 0
        %3440 = vmatprep.subr.bf16.mxu0 0
        %3441 = vmatpush1.bf16.msra.mxu0 0
        %3442 = vmatprep.subr.bf16.mxu0 0
        %3443 = vmatpush1.bf16.msra.mxu0 0
        %3444 = vmatprep.subr.bf16.mxu0 0
        %3445 = vmatpush1.bf16.msra.mxu0 0
        %3446 = vmatprep.subr.bf16.mxu0 0
        %3447 = vmatpush1.bf16.msra.mxu0 0
        %3448 = vmatprep.subr.bf16.mxu0 0
        %3449 = vmatpush1.bf16.msra.mxu0 0
        %3450 = vmatprep.subr.bf16.mxu0 0
        %3451 = vmatpush1.bf16.msra.mxu0 0
        %3452 = vmatprep.subr.bf16.mxu0 0
        %3453 = vmatpush1.bf16.msra.mxu0 0
        %3454 = vmatprep.subr.bf16.mxu0 0
        %3455 = vmatpush1.bf16.msra.mxu0 0
        %3456 = vmatprep.mubr.bf16.mxu0 0
        %3457 = vmatmul.mubr.bf16.gmra.mrb[0].mxu0 %v3422
        %v3458 = vpop.f32.mrb[0].mxu0
        %v3459 = vadd.f32 0.0, %v3458
        %v3460 = vpop.f32.mrb[0].mxu0
        %v3461 = vpop.f32.mrb[0].mxu0
        %v3462 = vadd.f32 0.0, %v3461
        %v3463 = vpop.f32.mrb[0].mxu0
        %3464 = vdwg.mxu0
        %v3465 = vadd.f32 %v3245, %v3327
        %v3466 = vadd.f32 %v3246, %v3330
        %v3467 = vadd.f32 %v3247, %v3371
        %v3468 = vadd.f32 %v3248, %v3374
        %v3469 = vadd.f32 %v3249, %v3415
        %v3470 = vadd.f32 %v3250, %v3418
        %v3471 = vadd.f32 %v3251, %v3459
        %v3472 = vadd.f32 %v3252, %v3462
        %v3473 = vrcp.pop %v3277
        %v3474 = vrcp.pop %v3278
        %v3475 = vrcp.pop %v3279
        %v3476 = vrcp.pop %v3280
        %v3477 = vrcp.pop %v3281
        %v3478 = vrcp.pop %v3282
        %v3479 = vrcp.pop %v3283
        %v3480 = vrcp.pop %v3284
        %v3481 = vmul.f32 %v3465, %v3473
        %v3482 = vmul.f32 %v3466, %v3474
        %v3483 = vmul.f32 %v3467, %v3475
        %v3484 = vmul.f32 %v3468, %v3476
        %v3485 = vmul.f32 %v3469, %v3477
        %v3486 = vmul.f32 %v3470, %v3478
        %v3487 = vmul.f32 %v3471, %v3479
        %v3488 = vmul.f32 %v3472, %v3480
        %3491 = vrot.lane.b32.xlu0 %v3483, 32
        %v3492 = vpop.permute.xlu0 %3491
        %3493 = vrot.lane.b32.xlu0 %v3484, 32
        %v3494 = vpop.permute.xlu0 %3493
        %3499 = vrot.lane.b32.xlu0 %v3485, 64
        %v3500 = vpop.permute.xlu0 %3499
        %3501 = vrot.lane.b32.xlu0 %v3486, 64
        %v3502 = vpop.permute.xlu0 %3501
        %3507 = vrot.lane.b32.xlu0 %v3487, 96
        %v3508 = vpop.permute.xlu0 %3507
        %3509 = vrot.lane.b32.xlu0 %v3488, 96
        %v3510 = vpop.permute.xlu0 %3509
        %v3513 = vsel %vm2961, %v3481, %v3492
        %v3514 = vsel %vm2961, %v3482, %v3494
        %vm3515 = vcmask 523264
        %v3516 = vsel %vm3515, %v3513, %v3500
        %v3517 = vsel %vm3515, %v3514, %v3502
        %vm3518 = vcmask 785408
        %v3519 = vsel %vm3518, %v3516, %v3508
        %v3520 = vsel %vm3518, %v3517, %v3510
        %v3521 = vld [vmem:[#allocation38] sm:$0xf]
        %v3522 = vld [vmem:[#allocation38 + $0x4] sm:$0xf]
        %v3523 = vld [vmem:[#allocation38 + $0x8] sm:$0xf]
        %v3524 = vld [vmem:[#allocation38 + $0xc] sm:$0xf]
        %v3525 = vld [vmem:[#allocation38 + $0x10] sm:$0xf]
        %v3526 = vld [vmem:[#allocation38 + $0x14] sm:$0xf]
        %v3527 = vld [vmem:[#allocation38 + $0x18] sm:$0xf]
        %v3528 = vld [vmem:[#allocation38 + $0x1c] sm:$0xf]
        %v3529 = vld [vmem:[#allocation38 + $0x20] sm:$0xf]
        %v3530 = vld [vmem:[#allocation38 + $0x24] sm:$0xf]
        %v3531 = vld [vmem:[#allocation38 + $0x28] sm:$0xf]
        %v3532 = vld [vmem:[#allocation38 + $0x2c] sm:$0xf]
        %v3533 = vld [vmem:[#allocation38 + $0x30] sm:$0xf]
        %v3534 = vld [vmem:[#allocation38 + $0x34] sm:$0xf]
        %v3535 = vld [vmem:[#allocation38 + $0x38] sm:$0xf]
        %v3536 = vld [vmem:[#allocation38 + $0x3c] sm:$0xf]
        %v3537 = vpack.c.bf16 %v3520, %v3519
        %v3538 = vld [vmem:[#allocation39] sm:$0x1]
        %v3540 = vlaneseq
        %v3541 = vshrl.u32 %v3540, 7
        %v3542 = vsub.s32 0, %v3541
        %v3543 = vrot.slane %v3538, %v3542
        %v3561 = vunpack.c.l.b16 %v3521
        %v3562 = vunpack.c.l.b16 %v3522
        %v3563 = vunpack.c.l.b16 %v3523
        %v3564 = vunpack.c.l.b16 %v3524
        %v3565 = vunpack.c.l.b16 %v3525
        %v3566 = vunpack.c.l.b16 %v3526
        %v3567 = vunpack.c.l.b16 %v3527
        %v3568 = vunpack.c.l.b16 %v3528
        %v3569 = vunpack.c.l.b16 %v3529
        %v3570 = vunpack.c.l.b16 %v3530
        %v3571 = vunpack.c.l.b16 %v3531
        %v3572 = vunpack.c.l.b16 %v3532
        %v3573 = vunpack.c.l.b16 %v3533
        %v3574 = vunpack.c.l.b16 %v3534
        %v3575 = vunpack.c.l.b16 %v3535
        %v3576 = vunpack.c.l.b16 %v3536
        %v3577 = vpack.c.b16 %v3562, %v3561
        %v3578 = vpack.c.b16 %v3564, %v3563
        %v3579 = vpack.c.b16 %v3566, %v3565
        %v3580 = vpack.c.b16 %v3568, %v3567
        %v3581 = vpack.c.b16 %v3570, %v3569
        %v3582 = vpack.c.b16 %v3572, %v3571
        %v3583 = vpack.c.b16 %v3574, %v3573
        %v3584 = vpack.c.b16 %v3576, %v3575
        %3593 = vmatprep.subr.bf16.mxu0 0
        %3594 = vmatpush1.bf16.msra.mxu0 %v3577
        %3595 = vmatprep.subr.bf16.mxu0 0
        %3596 = vmatpush1.bf16.msra.mxu0 %v3578
        %3597 = vmatprep.subr.bf16.mxu0 0
        %3598 = vmatpush1.bf16.msra.mxu0 %v3579
        %3599 = vmatprep.subr.bf16.mxu0 0
        %3600 = vmatpush1.bf16.msra.mxu0 %v3580
        %3601 = vmatprep.subr.bf16.mxu0 0
        %3602 = vmatpush1.bf16.msra.mxu0 %v3581
        %3603 = vmatprep.subr.bf16.mxu0 0
        %3604 = vmatpush1.bf16.msra.mxu0 %v3582
        %3605 = vmatprep.subr.bf16.mxu0 0
        %3606 = vmatpush1.bf16.msra.mxu0 %v3583
        %3607 = vmatprep.subr.bf16.mxu0 0
        %3608 = vmatpush1.bf16.msra.mxu0 %v3584
        %3609 = vmatprep.subr.bf16.mxu0 0
        %3610 = vmatpush1.bf16.msra.mxu0 0
        %3611 = vmatprep.subr.bf16.mxu0 0
        %3612 = vmatpush1.bf16.msra.mxu0 0
        %3613 = vmatprep.subr.bf16.mxu0 0
        %3614 = vmatpush1.bf16.msra.mxu0 0
        %3615 = vmatprep.subr.bf16.mxu0 0
        %3616 = vmatpush1.bf16.msra.mxu0 0
        %3617 = vmatprep.subr.bf16.mxu0 0
        %3618 = vmatpush1.bf16.msra.mxu0 0
        %3619 = vmatprep.subr.bf16.mxu0 0
        %3620 = vmatpush1.bf16.msra.mxu0 0
        %3621 = vmatprep.subr.bf16.mxu0 0
        %3622 = vmatpush1.bf16.msra.mxu0 0
        %3623 = vmatprep.subr.bf16.mxu0 0
        %3624 = vmatpush1.bf16.msra.mxu0 0
        %3625 = vmatprep.mubr.bf16.mxu0 0
        %3626 = vmatmul.mubr.bf16.gmra.mrb[0].mxu0 %v3537
        %v3627 = vpop.f32.mrb[0].mxu0
        %v3628 = vadd.f32 %v3543, %v3627
        %v3629 = vpop.f32.mrb[0].mxu0
        %v3630 = vpop.f32.mrb[0].mxu0
        %v3631 = vadd.f32 %v3543, %v3630
        %v3632 = vpop.f32.mrb[0].mxu0
        %3633 = vdwg.mxu0
        %v3634 = vadd.f32 %v3628, %v2627
        %v3635 = vadd.f32 %v3631, %v2628
        %v3636 = vld [vmem:[#allocation41] sm:$0x1]
        %v3637 = vld [vmem:[#allocation42] sm:$0x1]
        %3638 = vadd.xlane.f32.xlu0 %v3634
        %v3639 = vpop.xlane.xlu0 %3638
        %3640 = vadd.xlane.f32.xlu0 %v3635
        %v3641 = vpop.xlane.xlu0 %3640
        %v3642 = vmul.f32 %v3639, %v1441
        %v3643 = vmul.f32 %v3641, %v1441
        %v3644 = vsub.f32 %v3634, %v3642
        %v3645 = vsub.f32 %v3635, %v3643
        %v3646 = vmul.f32 %v3644, %v3644
        %v3647 = vmul.f32 %v3645, %v3645
        %3648 = vadd.xlane.f32.xlu0 %v3646
        %v3649 = vpop.xlane.xlu0 %3648
        %3650 = vadd.xlane.f32.xlu0 %v3647
        %v3651 = vpop.xlane.xlu0 %3650
        %v3652 = vmul.f32 %v3649, %v1441
        %v3653 = vmul.f32 %v3651, %v1441
        %v3654 = vadd.f32 %v3652, 1e-05
        %v3655 = vadd.f32 %v3653, 1e-05
        %v3656 = vrsqrt.pop %v3654
        %v3657 = vrsqrt.pop %v3655
        %v3658 = vmul.f32 %v3644, %v3656
        %v3659 = vmul.f32 %v3645, %v3657
        %v3661 = vlaneseq
        %v3662 = vshrl.u32 %v3661, 7
        %v3663 = vsub.s32 0, %v3662
        %v3664 = vrot.slane %v3636, %v3663
        %v3666 = vmul.f32 %v3658, %v3664
        %v3667 = vmul.f32 %v3659, %v3664
        %v3669 = vlaneseq
        %v3670 = vshrl.u32 %v3669, 7
        %v3671 = vsub.s32 0, %v3670
        %v3672 = vrot.slane %v3637, %v3671
        %v3674 = vadd.f32 %v3666, %v3672
        %v3675 = vadd.f32 %v3667, %v3672
        %v3676 = vld [vmem:[#allocation44] sm:$0xff]
        %v3677 = vld [vmem:[#allocation44 + $0x8] sm:$0xff]
        %v3678 = vld [vmem:[#allocation44 + $0x10] sm:$0xff]
        %v3679 = vld [vmem:[#allocation44 + $0x18] sm:$0xff]
        %v3680 = vld [vmem:[#allocation44 + $0x20] sm:$0xff]
        %v3681 = vld [vmem:[#allocation44 + $0x28] sm:$0xff]
        %v3682 = vld [vmem:[#allocation44 + $0x30] sm:$0xff]
        %v3683 = vld [vmem:[#allocation44 + $0x38] sm:$0xff]
        %v3684 = vld [vmem:[#allocation44 + $0x40] sm:$0xff]
        %v3685 = vld [vmem:[#allocation44 + $0x48] sm:$0xff]
        %v3686 = vld [vmem:[#allocation44 + $0x50] sm:$0xff]
        %v3687 = vld [vmem:[#allocation44 + $0x58] sm:$0xff]
        %v3688 = vld [vmem:[#allocation44 + $0x60] sm:$0xff]
        %v3689 = vld [vmem:[#allocation44 + $0x68] sm:$0xff]
        %v3690 = vld [vmem:[#allocation44 + $0x70] sm:$0xff]
        %v3691 = vld [vmem:[#allocation44 + $0x78] sm:$0xff]
        %v3692 = vld [vmem:[#allocation44 + $0x80] sm:$0xff]
        %v3693 = vld [vmem:[#allocation44 + $0x88] sm:$0xff]
        %v3694 = vld [vmem:[#allocation44 + $0x90] sm:$0xff]
        %v3695 = vld [vmem:[#allocation44 + $0x98] sm:$0xff]
        %v3696 = vld [vmem:[#allocation44 + $0xa0] sm:$0xff]
        %v3697 = vld [vmem:[#allocation44 + $0xa8] sm:$0xff]
        %v3698 = vld [vmem:[#allocation44 + $0xb0] sm:$0xff]
        %v3699 = vld [vmem:[#allocation44 + $0xb8] sm:$0xff]
        %v3700 = vld [vmem:[#allocation44 + $0xc0] sm:$0xff]
        %v3701 = vld [vmem:[#allocation44 + $0xc8] sm:$0xff]
        %v3702 = vld [vmem:[#allocation44 + $0xd0] sm:$0xff]
        %v3703 = vld [vmem:[#allocation44 + $0xd8] sm:$0xff]
        %v3704 = vld [vmem:[#allocation44 + $0xe0] sm:$0xff]
        %v3705 = vld [vmem:[#allocation44 + $0xe8] sm:$0xff]
        %v3706 = vld [vmem:[#allocation44 + $0xf0] sm:$0xff]
        %v3707 = vld [vmem:[#allocation44 + $0xf8] sm:$0xff]
        %v3708 = vpack.c.bf16 %v3675, %v3674
        %v3709 = vld [vmem:[#allocation45] sm:$0xf]
        %v3711 = vlaneseq
        %v3712 = vshrl.u32 %v3711, 7
        %v3713 = vsub.s32 0, %v3712
        %v3714 = vrot.slane %v3709, %v3713
        %v3715 = vlaneseq
        %v3716 = vshrl.u32 %v3715, 7
        %v3717 = vsub.s32 1, %v3716
        %v3718 = vrot.slane %v3709, %v3717
        %v3719 = vlaneseq
        %v3720 = vshrl.u32 %v3719, 7
        %v3721 = vsub.s32 2, %v3720
        %v3722 = vrot.slane %v3709, %v3721
        %v3723 = vlaneseq
        %v3724 = vshrl.u32 %v3723, 7
        %v3725 = vsub.s32 3, %v3724
        %v3726 = vrot.slane %v3709, %v3725
        %v3763 = vunpack.c.l.b16 %v3676
        %v3764 = vunpack.c.h.b16 %v3676
        %v3765 = vunpack.c.l.b16 %v3677
        %v3766 = vunpack.c.h.b16 %v3677
        %v3767 = vunpack.c.l.b16 %v3678
        %v3768 = vunpack.c.h.b16 %v3678
        %v3769 = vunpack.c.l.b16 %v3679
        %v3770 = vunpack.c.h.b16 %v3679
        %v3771 = vunpack.c.l.b16 %v3680
        %v3772 = vunpack.c.h.b16 %v3680
        %v3773 = vunpack.c.l.b16 %v3681
        %v3774 = vunpack.c.h.b16 %v3681
        %v3775 = vunpack.c.l.b16 %v3682
        %v3776 = vunpack.c.h.b16 %v3682
        %v3777 = vunpack.c.l.b16 %v3683
        %v3778 = vunpack.c.h.b16 %v3683
        %v3779 = vunpack.c.l.b16 %v3684
        %v3780 = vunpack.c.h.b16 %v3684
        %v3781 = vunpack.c.l.b16 %v3685
        %v3782 = vunpack.c.h.b16 %v3685
        %v3783 = vunpack.c.l.b16 %v3686
        %v3784 = vunpack.c.h.b16 %v3686
        %v3785 = vunpack.c.l.b16 %v3687
        %v3786 = vunpack.c.h.b16 %v3687
        %v3787 = vunpack.c.l.b16 %v3688
        %v3788 = vunpack.c.h.b16 %v3688
        %v3789 = vunpack.c.l.b16 %v3689
        %v3790 = vunpack.c.h.b16 %v3689
        %v3791 = vunpack.c.l.b16 %v3690
        %v3792 = vunpack.c.h.b16 %v3690
        %v3793 = vunpack.c.l.b16 %v3691
        %v3794 = vunpack.c.h.b16 %v3691
        %v3795 = vunpack.c.l.b16 %v3692
        %v3796 = vunpack.c.h.b16 %v3692
        %v3797 = vunpack.c.l.b16 %v3693
        %v3798 = vunpack.c.h.b16 %v3693
        %v3799 = vunpack.c.l.b16 %v3694
        %v3800 = vunpack.c.h.b16 %v3694
        %v3801 = vunpack.c.l.b16 %v3695
        %v3802 = vunpack.c.h.b16 %v3695
        %v3803 = vunpack.c.l.b16 %v3696
        %v3804 = vunpack.c.h.b16 %v3696
        %v3805 = vunpack.c.l.b16 %v3697
        %v3806 = vunpack.c.h.b16 %v3697
        %v3807 = vunpack.c.l.b16 %v3698
        %v3808 = vunpack.c.h.b16 %v3698
        %v3809 = vunpack.c.l.b16 %v3699
        %v3810 = vunpack.c.h.b16 %v3699
        %v3811 = vunpack.c.l.b16 %v3700
        %v3812 = vunpack.c.h.b16 %v3700
        %v3813 = vunpack.c.l.b16 %v3701
        %v3814 = vunpack.c.h.b16 %v3701
        %v3815 = vunpack.c.l.b16 %v3702
        %v3816 = vunpack.c.h.b16 %v3702
        %v3817 = vunpack.c.l.b16 %v3703
        %v3818 = vunpack.c.h.b16 %v3703
        %v3819 = vunpack.c.l.b16 %v3704
        %v3820 = vunpack.c.h.b16 %v3704
        %v3821 = vunpack.c.l.b16 %v3705
        %v3822 = vunpack.c.h.b16 %v3705
        %v3823 = vunpack.c.l.b16 %v3706
        %v3824 = vunpack.c.h.b16 %v3706
        %v3825 = vunpack.c.l.b16 %v3707
        %v3826 = vunpack.c.h.b16 %v3707
        %v3827 = vpack.c.b16 %v3767, %v3763
        %v3828 = vpack.c.b16 %v3768, %v3764
        %v3829 = vpack.c.b16 %v3769, %v3765
        %v3830 = vpack.c.b16 %v3770, %v3766
        %v3831 = vpack.c.b16 %v3775, %v3771
        %v3832 = vpack.c.b16 %v3776, %v3772
        %v3833 = vpack.c.b16 %v3777, %v3773
        %v3834 = vpack.c.b16 %v3778, %v3774
        %v3835 = vpack.c.b16 %v3783, %v3779
        %v3836 = vpack.c.b16 %v3784, %v3780
        %v3837 = vpack.c.b16 %v3785, %v3781
        %v3838 = vpack.c.b16 %v3786, %v3782
        %v3839 = vpack.c.b16 %v3791, %v3787
        %v3840 = vpack.c.b16 %v3792, %v3788
        %v3841 = vpack.c.b16 %v3793, %v3789
        %v3842 = vpack.c.b16 %v3794, %v3790
        %v3843 = vpack.c.b16 %v3799, %v3795
        %v3844 = vpack.c.b16 %v3800, %v3796
        %v3845 = vpack.c.b16 %v3801, %v3797
        %v3846 = vpack.c.b16 %v3802, %v3798
        %v3847 = vpack.c.b16 %v3807, %v3803
        %v3848 = vpack.c.b16 %v3808, %v3804
        %v3849 = vpack.c.b16 %v3809, %v3805
        %v3850 = vpack.c.b16 %v3810, %v3806
        %v3851 = vpack.c.b16 %v3815, %v3811
        %v3852 = vpack.c.b16 %v3816, %v3812
        %v3853 = vpack.c.b16 %v3817, %v3813
        %v3854 = vpack.c.b16 %v3818, %v3814
        %v3855 = vpack.c.b16 %v3823, %v3819
        %v3856 = vpack.c.b16 %v3824, %v3820
        %v3857 = vpack.c.b16 %v3825, %v3821
        %v3858 = vpack.c.b16 %v3826, %v3822
        %3891 = vmatprep.subr.bf16.mxu0 %v3828
        %3892 = vmatpush1.bf16.msra.mxu0 %v3827
        %3893 = vmatprep.subr.bf16.mxu0 %v3832
        %3894 = vmatpush1.bf16.msra.mxu0 %v3831
        %3895 = vmatprep.subr.bf16.mxu0 %v3836
        %3896 = vmatpush1.bf16.msra.mxu0 %v3835
        %3897 = vmatprep.subr.bf16.mxu0 %v3840
        %3898 = vmatpush1.bf16.msra.mxu0 %v3839
        %3899 = vmatprep.subr.bf16.mxu0 %v3844
        %3900 = vmatpush1.bf16.msra.mxu0 %v3843
        %3901 = vmatprep.subr.bf16.mxu0 %v3848
        %3902 = vmatpush1.bf16.msra.mxu0 %v3847
        %3903 = vmatprep.subr.bf16.mxu0 %v3852
        %3904 = vmatpush1.bf16.msra.mxu0 %v3851
        %3905 = vmatprep.subr.bf16.mxu0 %v3856
        %3906 = vmatpush1.bf16.msra.mxu0 %v3855
        %3907 = vmatprep.subr.bf16.mxu0 0
        %3908 = vmatpush1.bf16.msra.mxu0 0
        %3909 = vmatprep.subr.bf16.mxu0 0
        %3910 = vmatpush1.bf16.msra.mxu0 0
        %3911 = vmatprep.subr.bf16.mxu0 0
        %3912 = vmatpush1.bf16.msra.mxu0 0
        %3913 = vmatprep.subr.bf16.mxu0 0
        %3914 = vmatpush1.bf16.msra.mxu0 0
        %3915 = vmatprep.subr.bf16.mxu0 0
        %3916 = vmatpush1.bf16.msra.mxu0 0
        %3917 = vmatprep.subr.bf16.mxu0 0
        %3918 = vmatpush1.bf16.msra.mxu0 0
        %3919 = vmatprep.subr.bf16.mxu0 0
        %3920 = vmatpush1.bf16.msra.mxu0 0
        %3921 = vmatprep.subr.bf16.mxu0 0
        %3922 = vmatpush1.bf16.msra.mxu0 0
        %3923 = vmatprep.mubr.bf16.mxu0 0
        %3924 = vmatmul.mubr.bf16.gmra.mrb[0].mxu0 %v3708
        %v3925 = vpop.f32.mrb[0].mxu0
        %v3926 = vadd.f32 %v3714, %v3925
        %v3927 = vpop.f32.mrb[0].mxu0
        %v3928 = vadd.f32 %v3718, %v3927
        %v3929 = vpop.f32.mrb[0].mxu0
        %v3930 = vadd.f32 %v3714, %v3929
        %v3931 = vpop.f32.mrb[0].mxu0
        %v3932 = vadd.f32 %v3718, %v3931
        %3933 = vdwg.mxu0
        %3934 = vmatprep.subr.bf16.mxu0 %v3830
        %3935 = vmatpush1.bf16.msra.mxu0 %v3829
        %3936 = vmatprep.subr.bf16.mxu0 %v3834
        %3937 = vmatpush1.bf16.msra.mxu0 %v3833
        %3938 = vmatprep.subr.bf16.mxu0 %v3838
        %3939 = vmatpush1.bf16.msra.mxu0 %v3837
        %3940 = vmatprep.subr.bf16.mxu0 %v3842
        %3941 = vmatpush1.bf16.msra.mxu0 %v3841
        %3942 = vmatprep.subr.bf16.mxu0 %v3846
        %3943 = vmatpush1.bf16.msra.mxu0 %v3845
        %3944 = vmatprep.subr.bf16.mxu0 %v3850
        %3945 = vmatpush1.bf16.msra.mxu0 %v3849
        %3946 = vmatprep.subr.bf16.mxu0 %v3854
        %3947 = vmatpush1.bf16.msra.mxu0 %v3853
        %3948 = vmatprep.subr.bf16.mxu0 %v3858
        %3949 = vmatpush1.bf16.msra.mxu0 %v3857
        %3950 = vmatprep.subr.bf16.mxu0 0
        %3951 = vmatpush1.bf16.msra.mxu0 0
        %3952 = vmatprep.subr.bf16.mxu0 0
        %3953 = vmatpush1.bf16.msra.mxu0 0
        %3954 = vmatprep.subr.bf16.mxu0 0
        %3955 = vmatpush1.bf16.msra.mxu0 0
        %3956 = vmatprep.subr.bf16.mxu0 0
        %3957 = vmatpush1.bf16.msra.mxu0 0
        %3958 = vmatprep.subr.bf16.mxu0 0
        %3959 = vmatpush1.bf16.msra.mxu0 0
        %3960 = vmatprep.subr.bf16.mxu0 0
        %3961 = vmatpush1.bf16.msra.mxu0 0
        %3962 = vmatprep.subr.bf16.mxu0 0
        %3963 = vmatpush1.bf16.msra.mxu0 0
        %3964 = vmatprep.subr.bf16.mxu0 0
        %3965 = vmatpush1.bf16.msra.mxu0 0
        %3966 = vmatprep.mubr.bf16.mxu0 0
        %3967 = vmatmul.mubr.bf16.gmra.mrb[0].mxu0 %v3708
        %v3968 = vpop.f32.mrb[0].mxu0
        %v3969 = vadd.f32 %v3722, %v3968
        %v3970 = vpop.f32.mrb[0].mxu0
        %v3971 = vadd.f32 %v3726, %v3970
        %v3972 = vpop.f32.mrb[0].mxu0
        %v3973 = vadd.f32 %v3722, %v3972
        %v3974 = vpop.f32.mrb[0].mxu0
        %v3975 = vadd.f32 %v3726, %v3974
        %3976 = vdwg.mxu0
        %v3977 = vsub.f32 0.0, %v3926
        %v3978 = vsub.f32 0.0, %v3928
        %v3979 = vsub.f32 0.0, %v3969
        %v3980 = vsub.f32 0.0, %v3971
        %v3981 = vsub.f32 0.0, %v3930
        %v3982 = vsub.f32 0.0, %v3932
        %v3983 = vsub.f32 0.0, %v3973
        %v3984 = vsub.f32 0.0, %v3975
        %v3985 = vmul.f32 %v3977, 1.442695
        %v3986 = vpow.pop %v3985
        %v3987 = vmul.f32 %v3978, 1.442695
        %v3988 = vpow.pop %v3987
        %v3989 = vmul.f32 %v3979, 1.442695
        %v3990 = vpow.pop %v3989
        %v3991 = vmul.f32 %v3980, 1.442695
        %v3992 = vpow.pop %v3991
        %v3993 = vmul.f32 %v3981, 1.442695
        %v3994 = vpow.pop %v3993
        %v3995 = vmul.f32 %v3982, 1.442695
        %v3996 = vpow.pop %v3995
        %v3997 = vmul.f32 %v3983, 1.442695
        %v3998 = vpow.pop %v3997
        %v3999 = vmul.f32 %v3984, 1.442695
        %v4000 = vpow.pop %v3999
        %v4001 = vadd.f32 %v3986, 1.0
        %v4002 = vadd.f32 %v3988, 1.0
        %v4003 = vadd.f32 %v3990, 1.0
        %v4004 = vadd.f32 %v3992, 1.0
        %v4005 = vadd.f32 %v3994, 1.0
        %v4006 = vadd.f32 %v3996, 1.0
        %v4007 = vadd.f32 %v3998, 1.0
        %v4008 = vadd.f32 %v4000, 1.0
        %v4009 = vrcp.pop %v4001
        %v4010 = vmul.f32 1.0, %v4009
        %v4011 = vrcp.pop %v4002
        %v4012 = vmul.f32 1.0, %v4011
        %v4013 = vrcp.pop %v4003
        %v4014 = vmul.f32 1.0, %v4013
        %v4015 = vrcp.pop %v4004
        %v4016 = vmul.f32 1.0, %v4015
        %v4017 = vrcp.pop %v4005
        %v4018 = vmul.f32 1.0, %v4017
        %v4019 = vrcp.pop %v4006
        %v4020 = vmul.f32 1.0, %v4019
        %v4021 = vrcp.pop %v4007
        %v4022 = vmul.f32 1.0, %v4021
        %v4023 = vrcp.pop %v4008
        %v4024 = vmul.f32 1.0, %v4023
        %v4025 = vmul.f32 %v3926, %v4010
        %v4026 = vmul.f32 %v3928, %v4012
        %v4027 = vmul.f32 %v3969, %v4014
        %v4028 = vmul.f32 %v3971, %v4016
        %v4029 = vmul.f32 %v3930, %v4018
        %v4030 = vmul.f32 %v3932, %v4020
        %v4031 = vmul.f32 %v3973, %v4022
        %v4032 = vmul.f32 %v3975, %v4024
        %v4033 = vld [vmem:[#allocation47] sm:$0xf]
        %v4034 = vld [vmem:[#allocation47 + $0x4] sm:$0xf]
        %v4035 = vld [vmem:[#allocation47 + $0x8] sm:$0xf]
        %v4036 = vld [vmem:[#allocation47 + $0xc] sm:$0xf]
        %v4037 = vld [vmem:[#allocation47 + $0x10] sm:$0xf]
        %v4038 = vld [vmem:[#allocation47 + $0x14] sm:$0xf]
        %v4039 = vld [vmem:[#allocation47 + $0x18] sm:$0xf]
        %v4040 = vld [vmem:[#allocation47 + $0x1c] sm:$0xf]
        %v4041 = vld [vmem:[#allocation47 + $0x20] sm:$0xf]
        %v4042 = vld [vmem:[#allocation47 + $0x24] sm:$0xf]
        %v4043 = vld [vmem:[#allocation47 + $0x28] sm:$0xf]
        %v4044 = vld [vmem:[#allocation47 + $0x2c] sm:$0xf]
        %v4045 = vld [vmem:[#allocation47 + $0x30] sm:$0xf]
        %v4046 = vld [vmem:[#allocation47 + $0x34] sm:$0xf]
        %v4047 = vld [vmem:[#allocation47 + $0x38] sm:$0xf]
        %v4048 = vld [vmem:[#allocation47 + $0x3c] sm:$0xf]
        %v4049 = vld [vmem:[#allocation47 + $0x40] sm:$0xf]
        %v4050 = vld [vmem:[#allocation47 + $0x44] sm:$0xf]
        %v4051 = vld [vmem:[#allocation47 + $0x48] sm:$0xf]
        %v4052 = vld [vmem:[#allocation47 + $0x4c] sm:$0xf]
        %v4053 = vld [vmem:[#allocation47 + $0x50] sm:$0xf]
        %v4054 = vld [vmem:[#allocation47 + $0x54] sm:$0xf]
        %v4055 = vld [vmem:[#allocation47 + $0x58] sm:$0xf]
        %v4056 = vld [vmem:[#allocation47 + $0x5c] sm:$0xf]
        %v4057 = vld [vmem:[#allocation47 + $0x60] sm:$0xf]
        %v4058 = vld [vmem:[#allocation47 + $0x64] sm:$0xf]
        %v4059 = vld [vmem:[#allocation47 + $0x68] sm:$0xf]
        %v4060 = vld [vmem:[#allocation47 + $0x6c] sm:$0xf]
        %v4061 = vld [vmem:[#allocation47 + $0x70] sm:$0xf]
        %v4062 = vld [vmem:[#allocation47 + $0x74] sm:$0xf]
        %v4063 = vld [vmem:[#allocation47 + $0x78] sm:$0xf]
        %v4064 = vld [vmem:[#allocation47 + $0x7c] sm:$0xf]
        %v4065 = vld [vmem:[#allocation47 + $0x80] sm:$0xf]
        %v4066 = vld [vmem:[#allocation47 + $0x84] sm:$0xf]
        %v4067 = vld [vmem:[#allocation47 + $0x88] sm:$0xf]
        %v4068 = vld [vmem:[#allocation47 + $0x8c] sm:$0xf]
        %v4069 = vld [vmem:[#allocation47 + $0x90] sm:$0xf]
        %v4070 = vld [vmem:[#allocation47 + $0x94] sm:$0xf]
        %v4071 = vld [vmem:[#allocation47 + $0x98] sm:$0xf]
        %v4072 = vld [vmem:[#allocation47 + $0x9c] sm:$0xf]
        %v4073 = vld [vmem:[#allocation47 + $0xa0] sm:$0xf]
        %v4074 = vld [vmem:[#allocation47 + $0xa4] sm:$0xf]
        %v4075 = vld [vmem:[#allocation47 + $0xa8] sm:$0xf]
        %v4076 = vld [vmem:[#allocation47 + $0xac] sm:$0xf]
        %v4077 = vld [vmem:[#allocation47 + $0xb0] sm:$0xf]
        %v4078 = vld [vmem:[#allocation47 + $0xb4] sm:$0xf]
        %v4079 = vld [vmem:[#allocation47 + $0xb8] sm:$0xf]
        %v4080 = vld [vmem:[#allocation47 + $0xbc] sm:$0xf]
        %v4081 = vld [vmem:[#allocation47 + $0xc0] sm:$0xf]
        %v4082 = vld [vmem:[#allocation47 + $0xc4] sm:$0xf]
        %v4083 = vld [vmem:[#allocation47 + $0xc8] sm:$0xf]
        %v4084 = vld [vmem:[#allocation47 + $0xcc] sm:$0xf]
        %v4085 = vld [vmem:[#allocation47 + $0xd0] sm:$0xf]
        %v4086 = vld [vmem:[#allocation47 + $0xd4] sm:$0xf]
        %v4087 = vld [vmem:[#allocation47 + $0xd8] sm:$0xf]
        %v4088 = vld [vmem:[#allocation47 + $0xdc] sm:$0xf]
        %v4089 = vld [vmem:[#allocation47 + $0xe0] sm:$0xf]
        %v4090 = vld [vmem:[#allocation47 + $0xe4] sm:$0xf]
        %v4091 = vld [vmem:[#allocation47 + $0xe8] sm:$0xf]
        %v4092 = vld [vmem:[#allocation47 + $0xec] sm:$0xf]
        %v4093 = vld [vmem:[#allocation47 + $0xf0] sm:$0xf]
        %v4094 = vld [vmem:[#allocation47 + $0xf4] sm:$0xf]
        %v4095 = vld [vmem:[#allocation47 + $0xf8] sm:$0xf]
        %v4096 = vld [vmem:[#allocation47 + $0xfc] sm:$0xf]
        %v4097 = vpack.c.bf16 %v4029, %v4025
        %v4098 = vpack.c.bf16 %v4030, %v4026
        %v4099 = vpack.c.bf16 %v4031, %v4027
        %v4100 = vpack.c.bf16 %v4032, %v4028
        %v4101 = vld [vmem:[#allocation48] sm:$0x1]
        %v4103 = vlaneseq
        %v4104 = vshrl.u32 %v4103, 7
        %v4105 = vsub.s32 0, %v4104
        %v4106 = vrot.slane %v4101, %v4105
        %v4172 = vunpack.c.l.b16 %v4033
        %v4173 = vunpack.c.l.b16 %v4034
        %v4174 = vunpack.c.l.b16 %v4035
        %v4175 = vunpack.c.l.b16 %v4036
        %v4176 = vunpack.c.l.b16 %v4037
        %v4177 = vunpack.c.l.b16 %v4038
        %v4178 = vunpack.c.l.b16 %v4039
        %v4179 = vunpack.c.l.b16 %v4040
        %v4180 = vunpack.c.l.b16 %v4041
        %v4181 = vunpack.c.l.b16 %v4042
        %v4182 = vunpack.c.l.b16 %v4043
        %v4183 = vunpack.c.l.b16 %v4044
        %v4184 = vunpack.c.l.b16 %v4045
        %v4185 = vunpack.c.l.b16 %v4046
        %v4186 = vunpack.c.l.b16 %v4047
        %v4187 = vunpack.c.l.b16 %v4048
        %v4188 = vunpack.c.l.b16 %v4049
        %v4189 = vunpack.c.l.b16 %v4050
        %v4190 = vunpack.c.l.b16 %v4051
        %v4191 = vunpack.c.l.b16 %v4052
        %v4192 = vunpack.c.l.b16 %v4053
        %v4193 = vunpack.c.l.b16 %v4054
        %v4194 = vunpack.c.l.b16 %v4055
        %v4195 = vunpack.c.l.b16 %v4056
        %v4196 = vunpack.c.l.b16 %v4057
        %v4197 = vunpack.c.l.b16 %v4058
        %v4198 = vunpack.c.l.b16 %v4059
        %v4199 = vunpack.c.l.b16 %v4060
        %v4200 = vunpack.c.l.b16 %v4061
        %v4201 = vunpack.c.l.b16 %v4062
        %v4202 = vunpack.c.l.b16 %v4063
        %v4203 = vunpack.c.l.b16 %v4064
        %v4204 = vunpack.c.l.b16 %v4065
        %v4205 = vunpack.c.l.b16 %v4066
        %v4206 = vunpack.c.l.b16 %v4067
        %v4207 = vunpack.c.l.b16 %v4068
        %v4208 = vunpack.c.l.b16 %v4069
        %v4209 = vunpack.c.l.b16 %v4070
        %v4210 = vunpack.c.l.b16 %v4071
        %v4211 = vunpack.c.l.b16 %v4072
        %v4212 = vunpack.c.l.b16 %v4073
        %v4213 = vunpack.c.l.b16 %v4074
        %v4214 = vunpack.c.l.b16 %v4075
        %v4215 = vunpack.c.l.b16 %v4076
        %v4216 = vunpack.c.l.b16 %v4077
        %v4217 = vunpack.c.l.b16 %v4078
        %v4218 = vunpack.c.l.b16 %v4079
        %v4219 = vunpack.c.l.b16 %v4080
        %v4220 = vunpack.c.l.b16 %v4081
        %v4221 = vunpack.c.l.b16 %v4082
        %v4222 = vunpack.c.l.b16 %v4083
        %v4223 = vunpack.c.l.b16 %v4084
        %v4224 = vunpack.c.l.b16 %v4085
        %v4225 = vunpack.c.l.b16 %v4086
        %v4226 = vunpack.c.l.b16 %v4087
        %v4227 = vunpack.c.l.b16 %v4088
        %v4228 = vunpack.c.l.b16 %v4089
        %v4229 = vunpack.c.l.b16 %v4090
        %v4230 = vunpack.c.l.b16 %v4091
        %v4231 = vunpack.c.l.b16 %v4092
        %v4232 = vunpack.c.l.b16 %v4093
        %v4233 = vunpack.c.l.b16 %v4094
        %v4234 = vunpack.c.l.b16 %v4095
        %v4235 = vunpack.c.l.b16 %v4096
        %v4236 = vpack.c.b16 %v4173, %v4172
        %v4237 = vpack.c.b16 %v4175, %v4174
        %v4238 = vpack.c.b16 %v4177, %v4176
        %v4239 = vpack.c.b16 %v4179, %v4178
        %v4240 = vpack.c.b16 %v4181, %v4180
        %v4241 = vpack.c.b16 %v4183, %v4182
        %v4242 = vpack.c.b16 %v4185, %v4184
        %v4243 = vpack.c.b16 %v4187, %v4186
        %v4244 = vpack.c.b16 %v4189, %v4188
        %v4245 = vpack.c.b16 %v4191, %v4190
        %v4246 = vpack.c.b16 %v4193, %v4192
        %v4247 = vpack.c.b16 %v4195, %v4194
        %v4248 = vpack.c.b16 %v4197, %v4196
        %v4249 = vpack.c.b16 %v4199, %v4198
        %v4250 = vpack.c.b16 %v4201, %v4200
        %v4251 = vpack.c.b16 %v4203, %v4202
        %v4252 = vpack.c.b16 %v4205, %v4204
        %v4253 = vpack.c.b16 %v4207, %v4206
        %v4254 = vpack.c.b16 %v4209, %v4208
        %v4255 = vpack.c.b16 %v4211, %v4210
        %v4256 = vpack.c.b16 %v4213, %v4212
        %v4257 = vpack.c.b16 %v4215, %v4214
        %v4258 = vpack.c.b16 %v4217, %v4216
        %v4259 = vpack.c.b16 %v4219, %v4218
        %v4260 = vpack.c.b16 %v4221, %v4220
        %v4261 = vpack.c.b16 %v4223, %v4222
        %v4262 = vpack.c.b16 %v4225, %v4224
        %v4263 = vpack.c.b16 %v4227, %v4226
        %v4264 = vpack.c.b16 %v4229, %v4228
        %v4265 = vpack.c.b16 %v4231, %v4230
        %v4266 = vpack.c.b16 %v4233, %v4232
        %v4267 = vpack.c.b16 %v4235, %v4234
        %4300 = vmatprep.subr.bf16.mxu0 0
        %4301 = vmatpush1.bf16.msra.mxu0 %v4236
        %4302 = vmatprep.subr.bf16.mxu0 0
        %4303 = vmatpush1.bf16.msra.mxu0 %v4237
        %4304 = vmatprep.subr.bf16.mxu0 0
        %4305 = vmatpush1.bf16.msra.mxu0 %v4238
        %4306 = vmatprep.subr.bf16.mxu0 0
        %4307 = vmatpush1.bf16.msra.mxu0 %v4239
        %4308 = vmatprep.subr.bf16.mxu0 0
        %4309 = vmatpush1.bf16.msra.mxu0 %v4240
        %4310 = vmatprep.subr.bf16.mxu0 0
        %4311 = vmatpush1.bf16.msra.mxu0 %v4241
        %4312 = vmatprep.subr.bf16.mxu0 0
        %4313 = vmatpush1.bf16.msra.mxu0 %v4242
        %4314 = vmatprep.subr.bf16.mxu0 0
        %4315 = vmatpush1.bf16.msra.mxu0 %v4243
        %4316 = vmatprep.subr.bf16.mxu0 0
        %4317 = vmatpush1.bf16.msra.mxu0 %v4244
        %4318 = vmatprep.subr.bf16.mxu0 0
        %4319 = vmatpush1.bf16.msra.mxu0 %v4245
        %4320 = vmatprep.subr.bf16.mxu0 0
        %4321 = vmatpush1.bf16.msra.mxu0 %v4246
        %4322 = vmatprep.subr.bf16.mxu0 0
        %4323 = vmatpush1.bf16.msra.mxu0 %v4247
        %4324 = vmatprep.subr.bf16.mxu0 0
        %4325 = vmatpush1.bf16.msra.mxu0 %v4248
        %4326 = vmatprep.subr.bf16.mxu0 0
        %4327 = vmatpush1.bf16.msra.mxu0 %v4249
        %4328 = vmatprep.subr.bf16.mxu0 0
        %4329 = vmatpush1.bf16.msra.mxu0 %v4250
        %4330 = vmatprep.subr.bf16.mxu0 0
        %4331 = vmatpush1.bf16.msra.mxu0 %v4251
        %4332 = vmatprep.mubr.bf16.mxu0 %v4098
        %4333 = vmatmul.mubr.bf16.gmra.mrb[0].mxu0 %v4097
        %v4334 = vpop.f32.mrb[0].mxu0
        %v4335 = vadd.f32 %v4106, %v4334
        %v4336 = vpop.f32.mrb[0].mxu0
        %v4337 = vpop.f32.mrb[0].mxu0
        %v4338 = vadd.f32 %v4106, %v4337
        %v4339 = vpop.f32.mrb[0].mxu0
        %4340 = vdwg.mxu0
        %4341 = vmatprep.subr.bf16.mxu0 0
        %4342 = vmatpush1.bf16.msra.mxu0 %v4252
        %4343 = vmatprep.subr.bf16.mxu0 0
        %4344 = vmatpush1.bf16.msra.mxu0 %v4253
        %4345 = vmatprep.subr.bf16.mxu0 0
        %4346 = vmatpush1.bf16.msra.mxu0 %v4254
        %4347 = vmatprep.subr.bf16.mxu0 0
        %4348 = vmatpush1.bf16.msra.mxu0 %v4255
        %4349 = vmatprep.subr.bf16.mxu0 0
        %4350 = vmatpush1.bf16.msra.mxu0 %v4256
        %4351 = vmatprep.subr.bf16.mxu0 0
        %4352 = vmatpush1.bf16.msra.mxu0 %v4257
        %4353 = vmatprep.subr.bf16.mxu0 0
        %4354 = vmatpush1.bf16.msra.mxu0 %v4258
        %4355 = vmatprep.subr.bf16.mxu0 0
        %4356 = vmatpush1.bf16.msra.mxu0 %v4259
        %4357 = vmatprep.subr.bf16.mxu0 0
        %4358 = vmatpush1.bf16.msra.mxu0 %v4260
        %4359 = vmatprep.subr.bf16.mxu0 0
        %4360 = vmatpush1.bf16.msra.mxu0 %v4261
        %4361 = vmatprep.subr.bf16.mxu0 0
        %4362 = vmatpush1.bf16.msra.mxu0 %v4262
        %4363 = vmatprep.subr.bf16.mxu0 0
        %4364 = vmatpush1.bf16.msra.mxu0 %v4263
        %4365 = vmatprep.subr.bf16.mxu0 0
        %4366 = vmatpush1.bf16.msra.mxu0 %v4264
        %4367 = vmatprep.subr.bf16.mxu0 0
        %4368 = vmatpush1.bf16.msra.mxu0 %v4265
        %4369 = vmatprep.subr.bf16.mxu0 0
        %4370 = vmatpush1.bf16.msra.mxu0 %v4266
        %4371 = vmatprep.subr.bf16.mxu0 0
        %4372 = vmatpush1.bf16.msra.mxu0 %v4267
        %4373 = vmatprep.mubr.bf16.mxu0 %v4100
        %4374 = vmatmul.mubr.bf16.gmra.mrb[0].mxu0 %v4099
        %v4375 = vpop.f32.mrb[0].mxu0
        %v4376 = vadd.f32 %v4335, %v4375
        %v4377 = vpop.f32.mrb[0].mxu0
        %v4378 = vpop.f32.mrb[0].mxu0
        %v4379 = vadd.f32 %v4338, %v4378
        %v4380 = vpop.f32.mrb[0].mxu0
        %4381 = vdwg.mxu0
        %v4382 = vmul.f32 %v4376, 0.5
        %v4383 = vmul.f32 %v4379, 0.5
        %v4384 = vadd.f32 %v4382, %v3634
        %v4385 = vadd.f32 %v4383, %v3635
        %v4386 = vld [vmem:[#allocation50] sm:$0x1]
        %v4387 = vld [vmem:[#allocation51] sm:$0x1]
        %4388 = vadd.xlane.f32.xlu0 %v4384
        %v4389 = vpop.xlane.xlu0 %4388
        %4390 = vadd.xlane.f32.xlu0 %v4385
        %v4391 = vpop.xlane.xlu0 %4390
        %v4392 = vmul.f32 %v4389, %v1441
        %v4393 = vmul.f32 %v4391, %v1441
        %v4394 = vsub.f32 %v4384, %v4392
        %v4395 = vsub.f32 %v4385, %v4393
        %v4396 = vmul.f32 %v4394, %v4394
        %v4397 = vmul.f32 %v4395, %v4395
        %4398 = vadd.xlane.f32.xlu0 %v4396
        %v4399 = vpop.xlane.xlu0 %4398
        %4400 = vadd.xlane.f32.xlu0 %v4397
        %v4401 = vpop.xlane.xlu0 %4400
        %v4402 = vmul.f32 %v4399, %v1441
        %v4403 = vmul.f32 %v4401, %v1441
        %v4404 = vadd.f32 %v4402, 1e-05
        %v4405 = vadd.f32 %v4403, 1e-05
        %v4406 = vrsqrt.pop %v4404
        %v4407 = vrsqrt.pop %v4405
        %v4408 = vmul.f32 %v4394, %v4406
        %v4409 = vmul.f32 %v4395, %v4407
        %v4411 = vlaneseq
        %v4412 = vshrl.u32 %v4411, 7
        %v4413 = vsub.s32 0, %v4412
        %v4414 = vrot.slane %v4386, %v4413
        %v4416 = vmul.f32 %v4408, %v4414
        %v4417 = vmul.f32 %v4409, %v4414
        %v4419 = vlaneseq
        %v4420 = vshrl.u32 %v4419, 7
        %v4421 = vsub.s32 0, %v4420
        %v4422 = vrot.slane %v4387, %v4421
        %v4424 = vadd.f32 %v4416, %v4422
        %v4425 = vadd.f32 %v4417, %v4422
        %v4426 = vpack.c.bf16 %v4425, %v4424
        %v4428 = vunpack.c.l.b16 %v4426
        %v4429 = vunpack.c.h.b16 %v4426
        %v4430 = vpack.c.b16 %v4428, %v4428
        %v4431 = vpack.c.b16 %v4429, %v4429
        %4434 = vst [vmem:[%s1429] sm:$0xf] %v4430
        %4435 = vst [vmem:[%s1429 + $0x4] sm:$0xf] %v4431
        %s4436 = sand.u32 %s790, 1
        %s4437 = scalar_lea.sflag [#allocation5], %s4436
        %s4438 = sand.u32 %s790, 1
        %s4439 = smul.addr %s4438, 8
        %s4440 = scalar_lea.vmem [#allocation53], %s4439
        // Predicated region
        $region277: #{conformer_encoder_forward.4} parent=147 // pred_check
          %p4441 = pneg %p800
        $region278: #{conformer_encoder_forward.4} parent=147 // pred_check_branch
          %4443 = sbr.rel (%p4441) target = $region280
        $region279: #{conformer_encoder_forward.4} parent=147 // pred_region
          %s4445 = ssub.s32 128, 128
          %4446 = vsyncadd %s4437, %s4445
          %s4447 = smul.addr %s100, 2
          %s4448 = smul.addr %s4447, 64
          %s4449 = scalar_lea.hbm %s65, %s4448
          %s4450 = sshll.u32 %s4440, 4
          %s4451 = int_to_ptr.vmem [resolvable:$true] %s4450
          %4456 = dma.vmem_to_hbm [thread:$0]  %s4451, 128, %s4449, %s4437, 64, 64, 4
        $region280: #{conformer_encoder_forward.4} parent=147 // pred_fallthru
          _
      $region148: #{conformer_encoder_forward.4} parent=5 // pred_fallthru
        _
      %p4457 = scmp.le.s32.totalorder 2, %s95
      // Predicated region
      $region281: #{conformer_encoder_forward.4} parent=5 // pred_check
        %p4458 = pneg %p4457
      $region282: #{conformer_encoder_forward.4} parent=5 // pred_check_branch
        %4460 = sbr.rel (%p4458) target = $region284
      $region283: #{conformer_encoder_forward.4} parent=5 // pred_region
        %s4461 = ssub.s32 %s95, 2
        // Predicated region
        $region285: #{conformer_encoder_forward.4} parent=283 // pred_check
          %p4462 = pneg %p806
        $region286: #{conformer_encoder_forward.4} parent=283 // pred_check_branch
          %4464 = sbr.rel (%p4462) target = $region288
        $region287: #{conformer_encoder_forward.4} parent=283 // pred_region
          %s4465 = sand.u32 %s791, 1
          %s4466 = scalar_lea.sflag [#allocation5], %s4465
          %s4467 = sand.u32 %s791, 1
          %s4468 = smul.addr %s4467, 8
          %s4469 = scalar_lea.vmem [#allocation53], %s4468
          %4470 = dma.done %s4466, 128
        $region288: #{conformer_encoder_forward.4} parent=283 // pred_fallthru
          _
      $region284: #{conformer_encoder_forward.4} parent=5 // pred_fallthru
        _
    $region6: #{conformer_encoder_forward.4} parent=1 // loop_footer
      %s99 = sadd.s32 1, %s95
    $region7: #{conformer_encoder_forward.4} parent=1 // loop_footer_branch
      %94 = sbr.rel target = $region3
    $region8: #{conformer_encoder_forward.4} parent=1 // loop_exit
      _
    %4471 = vsyncpa [#allocation4], 1
    %s4472 = scalar_lea.sflag [#allocation4], 1
    %4473 = vsyncpa %s4472, 1
    %4474 = vsyncpa [#allocation7], 1
    %s4475 = scalar_lea.sflag [#allocation7], 1
    %4476 = vsyncpa %s4475, 1
    %4477 = vsyncpa [#allocation10], 1
    %4478 = vsyncpa [#allocation13], 1
    %4479 = vsyncpa [#allocation16], 1
    %4480 = vsyncpa [#allocation19], 1
    %4481 = vsyncpa [#allocation22], 1
    %4482 = vsyncpa [#allocation25], 1
    %4483 = vsyncpa [#allocation28], 1
    %4484 = vsyncpa [#allocation31], 1
    %4485 = vsyncpa [#allocation34], 1
    %4486 = vsyncpa [#allocation37], 1
    %4487 = vsyncpa [#allocation40], 1
    %4488 = vsyncpa [#allocation43], 1
    %4489 = vsyncpa [#allocation46], 1
    %4490 = vsyncpa [#allocation49], 1
    %4491 = vsyncpa [#allocation52], 1
    %4492 = vsyncpa [#allocation5], 1
    %s4493 = scalar_lea.sflag [#allocation5], 1
    %4494 = vsyncpa %s4493, 1

</llo_original>
